<compile_context>
chip_gen: v5e
topology: v5e:2x2
jax: 0.10.0
libtpu: 0.0.40
codegen_flags: <defaults>
</compile_context>

<pallas_src>
import functools

import jax
import jax.numpy as jnp
from jax.experimental import pallas as pl
from jax.experimental.pallas import tpu as pltpu

_F32 = jnp.float32
_BF16 = jnp.bfloat16
_VMEM_LIMIT = 64 * 1024 * 1024  # raised scoped-VMEM cap (harmless at toy sizes)


# ----------------------------- in-kernel math -------------------------------

def _erf(x):
    # Abramowitz & Stegun 7.1.26, |err| < 1.5e-7 in f32.
    # TODO(synk): lax.erf has no Mosaic lowering; polynomial matches PyTorch's
    # exact-erf GELU to f32 tolerance.  On v5e a tanh-approx GELU would offload to EUP.
    a1, a2, a3, a4, a5 = 0.254829592, -0.284496736, 1.421413741, -1.453152027, 1.061405429
    p = 0.3275911
    ax = jnp.abs(x)
    t = 1.0 / (1.0 + p * ax)
    poly = ((((a5 * t + a4) * t + a3) * t + a2) * t + a1) * t
    y = 1.0 - poly * jnp.exp(-ax * ax)
    return jnp.where(x >= 0.0, y, -y)


def _gelu_exact(x):
    return 0.5 * x * (1.0 + _erf(x * 0.7071067811865476))


def _ln(x, g, b, eps=1e-5):
    # LayerNorm over the last axis; g/b broadcast from (1, d).  eps = nn.LayerNorm default.
    mu = jnp.mean(x, axis=-1, keepdims=True)
    var = jnp.mean(jnp.square(x - mu), axis=-1, keepdims=True)
    return (x - mu) * jax.lax.rsqrt(var + eps) * g + b


def _mm(a, b):
    # bf16 operands (MXU-native on v5e/v6e/v7x), f32 accumulation.
    return jnp.dot(a.astype(_BF16), b.astype(_BF16), preferred_element_type=_F32)


def _bmm(a, b, ca, cb):
    # dot_general batched over the leading dim, bf16 operands, f32 accumulation.
    return jax.lax.dot_general(a.astype(_BF16), b.astype(_BF16),
                               (((ca,), (cb,)), ((0,), (0,))),
                               preferred_element_type=_F32)


# ------------------------------ Pallas kernels ------------------------------

def _linear_bias_kernel(x_ref, w_ref, b_ref, o_ref):
    acc = _mm(x_ref[...], w_ref[...])
    o_ref[...] = (acc + b_ref[...].astype(_F32)).astype(o_ref.dtype)


def _layer_kernel(x_ref, lat_ref,
                  n1g_ref, n1b_ref, n2g_ref, n2b_ref,
                  wq_ref, wk_ref, wv_ref, wout_ref,
                  gq_ref, bq_ref, gk_ref, bk_ref,
                  fg_ref, fb_ref, w1_ref, w2_ref,
                  *rest, heads, dim_head, final_norm):
    """Fused resampler layer for `block_b` batch elements:

        latents = attn(x, latents) + latents
        latents = ff(latents) + latents
        [latents = norm_out(latents)]            # only for the final block

    x_ref: (bb, n1, D), lat_ref: (bb, n2, D), output: (bb, n2, D).
    wout_ref is pre-reshaped to (heads, dim_head, D).
    gq/bq/gk/bk are the per-head q/k LayerNorm params pre-scaled by dim_head**-0.25
    (both gamma AND beta, so LN(x)*s == x_hat*(g*s) + (b*s)).
    """
    if final_norm:
        og_ref, ob_ref, o_ref = rest
    else:
        (o_ref,) = rest

    bb, n1, D = x_ref.shape
    _, n2, _ = lat_ref.shape
    L = n1 + n2
    dh = dim_head

    x = x_ref[...].astype(_F32).reshape(bb * n1, D)
    lat = lat_ref[...].astype(_F32).reshape(bb * n2, D)

    # Pre-norms on (bb*n, D) slabs — batch folded into M so the matmuls below are fat.
    xn = _ln(x, n1g_ref[...], n1b_ref[...])
    ltn = _ln(lat, n2g_ref[...], n2b_ref[...])

    # Projections (bf16 in / f32 acc).  KV concat stays entirely in VMEM.
    q = _mm(ltn, wq_ref[...])                                          # (bb*n2, inner)
    kv = jnp.concatenate([xn.reshape(bb, n1, D), ltn.reshape(bb, n2, D)],
                         axis=1).reshape(bb * L, D)                    # (bb*L, D)
    k = _mm(kv, wk_ref[...])                                           # (bb*L, inner)
    v = _mm(kv, wv_ref[...])                                           # (bb*L, inner)

    # Head-batched slabs (heads*bb, rows, dh).  One slice+stack per tensor replaces the
    # old per-head Python loop; softmax/QK^T/@V below all run on full slabs.  The merged
    # leading index is (head, batch) consistently for q/k/v, so batches never mix.
    def to_slab(t, rows):
        s = jnp.stack([t[:, h * dh:(h + 1) * dh] for h in range(heads)], axis=0)
        return s.reshape(heads * bb, rows, dh)

    q3 = to_slab(q, n2)
    k3 = to_slab(k, L)
    v3 = to_slab(v, L)

    qh = _ln(q3, gq_ref[...], bq_ref[...])   # scale already folded into gamma and beta
    kh = _ln(k3, gk_ref[...], bk_ref[...])

    s = _bmm(qh, kh, 2, 2)                                             # (heads*bb, n2, L)
    s = s - jnp.max(s, axis=-1, keepdims=True)
    p = jnp.exp(s)
    p = p * pl.reciprocal(jnp.sum(p, axis=-1, keepdims=True), approx=True)
    av = _bmm(p, v3, 2, 1)                                             # (heads*bb, n2, dh)

    # to_out: contract each head slab against its (dh, D) slice of wout and sum over
    # heads (static unroll over full-width (bb*n2, D) slabs — no lane concat).
    oh = _bmm(av.reshape(heads, bb * n2, dh), wout_ref[...], 2, 1)     # (heads, bb*n2, D)
    attn_out = oh[0]
    for h in range(1, heads):
        attn_out = attn_out + oh[h]
    h1 = attn_out + lat                                                # attention residual

    # FeedForward (+ residual), M fattened by bb.
    hn = _ln(h1, fg_ref[...], fb_ref[...])
    hmid = _gelu_exact(_mm(hn, w1_ref[...]))
    y = _mm(hmid, w2_ref[...]) + h1                                    # FFN residual

    if final_norm:
        y = _ln(y, og_ref[...], ob_ref[...])

    o_ref[...] = y.reshape(bb, n2, D).astype(o_ref.dtype)


# -------------------------------- wrappers ----------------------------------

def _pick_block_b(batch, max_bb=8):
    """Largest divisor of `batch` <= max_bb that still leaves >= 2 grid steps (megacore)."""
    divs = [d for d in range(1, batch + 1) if batch % d == 0 and d <= max_bb]
    two_step = [d for d in divs if batch // d >= 2]
    return max(two_step) if two_step else max(divs)


def linear_bias(x, w, b):
    """y = x @ w + b on the flattened (B*M, K) slab, single grid step (cheap proj_in/out)."""
    B, M, K = x.shape
    N = w.shape[1]
    out = pl.pallas_call(
        _linear_bias_kernel,
        out_shape=jax.ShapeDtypeStruct((B * M, N), x.dtype),
        grid=(1,),
        in_specs=[pl.BlockSpec((B * M, K), lambda i: (0, 0)),
                  pl.BlockSpec((K, N), lambda i: (0, 0)),
                  pl.BlockSpec((1, N), lambda i: (0, 0))],
        out_specs=pl.BlockSpec((B * M, N), lambda i: (0, 0)),
        compiler_params=pltpu.CompilerParams(vmem_limit_bytes=_VMEM_LIMIT),
    )(x.reshape(B * M, K), w, b.reshape(1, N))
    return out.reshape(B, M, N)


def fused_layer(attn_p, ff_p, x, latents, *, heads, dim_head, final_norm_p=None,
                max_block_b=8):
    """One pallas_call = PerceiverAttentionQK(+res) -> FeedForward(+res) [-> norm_out]."""
    b, n1, D = x.shape
    _, n2, _ = latents.shape
    inner = heads * dim_head
    H = ff_p["w1"].shape[1]
    L = n1 + n2

    bb = _pick_block_b(b, max_block_b)
    grid = (b // bb,)

    # Fold the softmax scale dim_head**-0.25 into both gamma and beta of the q/k LNs.
    scale = float(dim_head) ** -0.25
    gq = (attn_p["normq_g"] * scale).reshape(1, dim_head)
    bq = (attn_p["normq_b"] * scale).reshape(1, dim_head)
    gk = (attn_p["normk_g"] * scale).reshape(1, dim_head)
    bk = (attn_p["normk_b"] * scale).reshape(1, dim_head)
    wout3 = attn_p["wout"].reshape(heads, dim_head, D)   # host-side reshape, free

    final_norm = final_norm_p is not None

    def vec():
        return pl.BlockSpec((1, D), lambda i: (0, 0))

    def hvec():
        return pl.BlockSpec((1, dim_head), lambda i: (0, 0))

    def full2(r, c):
        return pl.BlockSpec((r, c), lambda i: (0, 0))

    in_specs = [pl.BlockSpec((bb, n1, D), lambda i: (i, 0, 0)),
                pl.BlockSpec((bb, n2, D), lambda i: (i, 0, 0)),
                vec(), vec(), vec(), vec(),
                full2(D, inner), full2(D, inner), full2(D, inner),
                pl.BlockSpec((heads, dim_head, D), lambda i: (0, 0, 0)),
                hvec(), hvec(), hvec(), hvec(),
                vec(), vec(),
                full2(D, H), full2(H, D)]
    operands = [x, latents,
                attn_p["norm1_g"].reshape(1, D), attn_p["norm1_b"].reshape(1, D),
                attn_p["norm2_g"].reshape(1, D), attn_p["norm2_b"].reshape(1, D),
                attn_p["wq"], attn_p["wk"], attn_p["wv"], wout3,
                gq, bq, gk, bk,
                ff_p["ln_g"].reshape(1, D), ff_p["ln_b"].reshape(1, D),
                ff_p["w1"], ff_p["w2"]]
    if final_norm:
        in_specs += [vec(), vec()]
        operands += [final_norm_p[0].reshape(1, D), final_norm_p[1].reshape(1, D)]

    ce = pl.CostEstimate(
        flops=2 * b * (n2 * D * inner + 2 * L * D * inner
                       + 2 * heads * n2 * L * dim_head + n2 * inner * D
                       + 2 * n2 * D * H),
        transcendentals=b * (heads * n2 * L + n2 * H),
        bytes_accessed=4 * (b * (n1 + 2 * n2) * D + 4 * D * inner + 2 * D * H),
    )

    kernel = functools.partial(_layer_kernel, heads=heads, dim_head=dim_head,
                               final_norm=final_norm)
    return pl.pallas_call(
        kernel,
        out_shape=jax.ShapeDtypeStruct((b, n2, D), x.dtype),
        grid=grid,
        in_specs=in_specs,
        out_specs=pl.BlockSpec((bb, n2, D), lambda i: (i, 0, 0)),
        compiler_params=pltpu.CompilerParams(
            dimension_semantics=("parallel",),
            vmem_limit_bytes=_VMEM_LIMIT),
        cost_estimate=ce,
    )(*operands)


# -------------------------------- forward -----------------------------------

def resampler_plus_qk_forward(params, x, cfg):
    """ResamplerPlusQK.forward (apply_pos_emb=False, num_latents_mean_pooled=0).

    Returns (norm_out(latents), hidden_latents).
    """
    b = x.shape[0]
    latents = jnp.broadcast_to(params["latents"],
                               (b,) + params["latents"].shape[1:])
    x = linear_bias(x, params["proj_in_w"], params["proj_in_b"])

    # (the torch module's debug prints of latents.abs().mean() are omitted)
    for layer in params["layers"]:
        latents = fused_layer(layer["attn"], layer["ff"], x, latents,
                              heads=cfg["heads"], dim_head=cfg["dim_head"])

    hidden_latents = linear_bias(latents, params["proj_out_w"], params["proj_out_b"])
    out = fused_layer(params["last_attn"], params["last_ff"],
                      hidden_latents, hidden_latents,
                      heads=cfg["heads"], dim_head=cfg["dim_head"],
                      final_norm_p=(params["norm_out_g"], params["norm_out_b"]))
    return out, hidden_latents


# --------------------------- parameter creation -----------------------------

def init_params(key, cfg):
    dim, dh, heads = cfg["dim"], cfg["dim_head"], cfg["heads"]
    inner = dh * heads
    emb, out_dim, mult = cfg["embedding_dim"], cfg["output_dim"], cfg["ff_mult"]
    keys = iter(jax.random.split(key, 512))

    def w(shape, fan_in):
        return jax.random.normal(next(keys), shape, jnp.float32) / jnp.sqrt(fan_in)

    def attn_params(d):
        return dict(
            norm1_g=jnp.ones((d,), jnp.float32), norm1_b=jnp.zeros((d,), jnp.float32),
            norm2_g=jnp.ones((d,), jnp.float32), norm2_b=jnp.zeros((d,), jnp.float32),
            wq=w((d, inner), d),
            # to_kv stored pre-split (review: lane-aligned k/v, no mid-vreg chunk)
            wk=w((d, inner), d), wv=w((d, inner), d),
            wout=w((inner, d), inner),
            normq_g=jnp.ones((dh,), jnp.float32), normq_b=jnp.zeros((dh,), jnp.float32),
            normk_g=jnp.ones((dh,), jnp.float32), normk_b=jnp.zeros((dh,), jnp.float32),
        )

    def ff_params(d):
        h = int(d * mult)
        return dict(ln_g=jnp.ones((d,), jnp.float32), ln_b=jnp.zeros((d,), jnp.float32),
                    w1=w((d, h), d), w2=w((h, d), h))

    return dict(
        latents=jax.random.normal(next(keys), (1, cfg["num_queries"], dim), jnp.float32)
                / jnp.sqrt(dim),
        proj_in_w=w((emb, dim), emb), proj_in_b=jnp.zeros((dim,), jnp.float32),
        proj_out_w=w((dim, out_dim), dim), proj_out_b=jnp.zeros((out_dim,), jnp.float32),
        norm_out_g=jnp.ones((out_dim,), jnp.float32),
        norm_out_b=jnp.zeros((out_dim,), jnp.float32),
        layers=[dict(attn=attn_params(dim), ff=ff_params(dim))
                for _ in range(cfg["depth"])],
        last_attn=attn_params(out_dim),
        last_ff=ff_params(out_dim),
    )


# ---------------------------------- main -------------------------------------

if __name__ == "__main__":
    cfg = dict(dim=64, depth=2, dim_head=16, heads=4, num_queries=8,
               embedding_dim=32, output_dim=64, ff_mult=4)
    batch, seq = 2, 16

    key = jax.random.PRNGKey(0)
    pkey, xkey = jax.random.split(key)
    params = init_params(pkey, cfg)
    x = jax.random.normal(xkey, (batch, seq, cfg["embedding_dim"]), jnp.float32)

    fwd = jax.jit(functools.partial(resampler_plus_qk_forward, cfg=cfg))
    out, hidden = fwd(params, x)
    jax.block_until_ready((out, hidden))

    assert out.shape == (batch, cfg["num_queries"], cfg["output_dim"])
    assert hidden.shape == (batch, cfg["num_queries"], cfg["output_dim"])
    assert out.dtype == jnp.float32 and hidden.dtype == jnp.float32
    assert bool(jnp.all(jnp.isfinite(out))) and bool(jnp.all(jnp.isfinite(hidden)))
    print("KERNEL_OK")
</pallas_src>

<mosaic_0001>
module attributes {stable_mosaic.version = 11 : i64} {
  func.func @_linear_bias_kernel(%arg0: i32, %arg1: memref<32x32xf32, #tpu.memory_space<vmem>>, %arg2: memref<32x64xf32, #tpu.memory_space<vmem>>, %arg3: memref<1x64xf32, #tpu.memory_space<vmem>>, %arg4: memref<32x64xf32, #tpu.memory_space<vmem>>) attributes {dimension_semantics = [#tpu.dimension_semantics<arbitrary>], iteration_bounds = array<i64: 1>, scalar_prefetch = 0 : i64, scratch_operands = 0 : i64, tpu.core_type = #tpu.core_type<tc>, window_params = [{pipeline_mode = #tpu.pipeline_mode<synchronous>, transform_indices = @transform_0, window_bounds = array<i64: 32, 32>}, {pipeline_mode = #tpu.pipeline_mode<synchronous>, transform_indices = @transform_1, window_bounds = array<i64: 32, 64>}, {pipeline_mode = #tpu.pipeline_mode<synchronous>, transform_indices = @transform_2, window_bounds = array<i64: 1, 64>}, {pipeline_mode = #tpu.pipeline_mode<synchronous>, transform_indices = @transform_3, window_bounds = array<i64: 32, 64>}]} {
    %c0 = arith.constant 0 : index
    %c0_0 = arith.constant 0 : index
    %0 = vector.load %arg1[%c0, %c0_0] : memref<32x32xf32, #tpu.memory_space<vmem>>, vector<32x32xf32>
    %c0_1 = arith.constant 0 : index
    %c0_2 = arith.constant 0 : index
    %1 = vector.load %arg2[%c0_1, %c0_2] : memref<32x64xf32, #tpu.memory_space<vmem>>, vector<32x64xf32>
    %2 = arith.truncf %0 : vector<32x32xf32> to vector<32x32xbf16>
    %3 = arith.truncf %1 : vector<32x64xf32> to vector<32x64xbf16>
    %cst = arith.constant dense<0.000000e+00> : vector<32x64xf32>
    %4 = tpu.matmul %2, %3, %cst {dimension_numbers = #tpu.dot_dimension_numbers<[1], [0], [0], [1], [0, 0, 1, 1], [], []>} : vector<32x32xbf16>, vector<32x64xbf16>, vector<32x64xf32> -> vector<32x64xf32>
    %c0_3 = arith.constant 0 : index
    %c0_4 = arith.constant 0 : index
    %5 = vector.load %arg3[%c0_3, %c0_4] : memref<1x64xf32, #tpu.memory_space<vmem>>, vector<1x64xf32>
    %6 = vector.broadcast %5 : vector<1x64xf32> to vector<32x64xf32>
    %7 = arith.addf %4, %6 : vector<32x64xf32>
    %c0_5 = arith.constant 0 : index
    %c0_6 = arith.constant 0 : index
    %8 = vector.load %arg4[%c0_5, %c0_6] : memref<32x64xf32, #tpu.memory_space<vmem>>, vector<32x64xf32>
    tpu.vector_store %arg4[%c0_5, %c0_6], %7 {strides = array<i32>} : memref<32x64xf32, #tpu.memory_space<vmem>>, vector<32x64xf32>,
    return
  }
  func.func @transform_0(%arg0: i32) -> (i32, i32) {
    %c0_i32 = arith.constant 0 : i32
    %c0_i32_0 = arith.constant 0 : i32
    %c0_i32_1 = arith.constant 0 : i32
    return %c0_i32, %c0_i32_0 : i32, i32
  }
  func.func @transform_1(%arg0: i32) -> (i32, i32) {
    %c0_i32 = arith.constant 0 : i32
    %c0_i32_0 = arith.constant 0 : i32
    %c0_i32_1 = arith.constant 0 : i32
    return %c0_i32, %c0_i32_0 : i32, i32
  }
  func.func @transform_2(%arg0: i32) -> (i32, i32) {
    %c0_i32 = arith.constant 0 : i32
    %c0_i32_0 = arith.constant 0 : i32
    %c0_i32_1 = arith.constant 0 : i32
    return %c0_i32, %c0_i32_0 : i32, i32
  }
  func.func @transform_3(%arg0: i32) -> (i32, i32) {
    %c0_i32 = arith.constant 0 : i32
    %c0_i32_0 = arith.constant 0 : i32
    %c0_i32_1 = arith.constant 0 : i32
    return %c0_i32, %c0_i32_0 : i32, i32
  }
}

module attributes {stable_mosaic.version = 11 : i64} {
  func.func @_layer_kernel(%arg0: i32, %arg1: memref<1x16x64xf32, #tpu.memory_space<vmem>>, %arg2: memref<1x8x64xf32, #tpu.memory_space<vmem>>, %arg3: memref<1x64xf32, #tpu.memory_space<vmem>>, %arg4: memref<1x64xf32, #tpu.memory_space<vmem>>, %arg5: memref<1x64xf32, #tpu.memory_space<vmem>>, %arg6: memref<1x64xf32, #tpu.memory_space<vmem>>, %arg7: memref<64x64xf32, #tpu.memory_space<vmem>>, %arg8: memref<64x64xf32, #tpu.memory_space<vmem>>, %arg9: memref<64x64xf32, #tpu.memory_space<vmem>>, %arg10: memref<4x16x64xf32, #tpu.memory_space<vmem>>, %arg11: memref<1x16xf32, #tpu.memory_space<vmem>>, %arg12: memref<1x16xf32, #tpu.memory_space<vmem>>, %arg13: memref<1x16xf32, #tpu.memory_space<vmem>>, %arg14: memref<1x16xf32, #tpu.memory_space<vmem>>, %arg15: memref<1x64xf32, #tpu.memory_space<vmem>>, %arg16: memref<1x64xf32, #tpu.memory_space<vmem>>, %arg17: memref<64x256xf32, #tpu.memory_space<vmem>>, %arg18: memref<256x64xf32, #tpu.memory_space<vmem>>, %arg19: memref<1x8x64xf32, #tpu.memory_space<vmem>>) attributes {dimension_semantics = [#tpu.dimension_semantics<parallel>], iteration_bounds = array<i64: 2>, scalar_prefetch = 0 : i64, scratch_operands = 0 : i64, tpu.core_type = #tpu.core_type<tc>, window_params = [{transform_indices = @transform_0, window_bounds = array<i64: 1, 16, 64>}, {transform_indices = @transform_1, window_bounds = array<i64: 1, 8, 64>}, {pipeline_mode = #tpu.pipeline_mode<synchronous>, transform_indices = @transform_2, window_bounds = array<i64: 1, 64>}, {pipeline_mode = #tpu.pipeline_mode<synchronous>, transform_indices = @transform_3, window_bounds = array<i64: 1, 64>}, {pipeline_mode = #tpu.pipeline_mode<synchronous>, transform_indices = @transform_4, window_bounds = array<i64: 1, 64>}, {pipeline_mode = #tpu.pipeline_mode<synchronous>, transform_indices = @transform_5, window_bounds = array<i64: 1, 64>}, {pipeline_mode = #tpu.pipeline_mode<synchronous>, transform_indices = @transform_6, window_bounds = array<i64: 64, 64>}, {pipeline_mode = #tpu.pipeline_mode<synchronous>, transform_indices = @transform_7, window_bounds = array<i64: 64, 64>}, {pipeline_mode = #tpu.pipeline_mode<synchronous>, transform_indices = @transform_8, window_bounds = array<i64: 64, 64>}, {pipeline_mode = #tpu.pipeline_mode<synchronous>, transform_indices = @transform_9, window_bounds = array<i64: 4, 16, 64>}, {pipeline_mode = #tpu.pipeline_mode<synchronous>, transform_indices = @transform_10, window_bounds = array<i64: 1, 16>}, {pipeline_mode = #tpu.pipeline_mode<synchronous>, transform_indices = @transform_11, window_bounds = array<i64: 1, 16>}, {pipeline_mode = #tpu.pipeline_mode<synchronous>, transform_indices = @transform_12, window_bounds = array<i64: 1, 16>}, {pipeline_mode = #tpu.pipeline_mode<synchronous>, transform_indices = @transform_13, window_bounds = array<i64: 1, 16>}, {pipeline_mode = #tpu.pipeline_mode<synchronous>, transform_indices = @transform_14, window_bounds = array<i64: 1, 64>}, {pipeline_mode = #tpu.pipeline_mode<synchronous>, transform_indices = @transform_15, window_bounds = array<i64: 1, 64>}, {pipeline_mode = #tpu.pipeline_mode<synchronous>, transform_indices = @transform_16, window_bounds = array<i64: 64, 256>}, {pipeline_mode = #tpu.pipeline_mode<synchronous>, transform_indices = @transform_17, window_bounds = array<i64: 256, 64>}, {transform_indices = @transform_18, window_bounds = array<i64: 1, 8, 64>}]} {
    %c0 = arith.constant 0 : index
    %c0_0 = arith.constant 0 : index
    %c0_1 = arith.constant 0 : index
    %0 = vector.load %arg1[%c0, %c0_0, %c0_1] : memref<1x16x64xf32, #tpu.memory_space<vmem>>, vector<1x16x64xf32>
    %1 = vector.shape_cast %0 : vector<1x16x64xf32> to vector<16x64xf32>
    %c0_2 = arith.constant 0 : index
    %c0_3 = arith.constant 0 : index
    %c0_4 = arith.constant 0 : index
    %2 = vector.load %arg2[%c0_2, %c0_3, %c0_4] : memref<1x8x64xf32, #tpu.memory_space<vmem>>, vector<1x8x64xf32>
    %3 = vector.shape_cast %2 : vector<1x8x64xf32> to vector<8x64xf32>
    %c0_5 = arith.constant 0 : index
    %c0_6 = arith.constant 0 : index
    %4 = vector.load %arg3[%c0_5, %c0_6] : memref<1x64xf32, #tpu.memory_space<vmem>>, vector<1x64xf32>
    %c0_7 = arith.constant 0 : index
    %c0_8 = arith.constant 0 : index
    %5 = vector.load %arg4[%c0_7, %c0_8] : memref<1x64xf32, #tpu.memory_space<vmem>>, vector<1x64xf32>
    %cst = arith.constant dense<0.000000e+00> : vector<16xf32>
    %6 = vector.multi_reduction <add>, %1, %cst [1] : vector<16x64xf32> to vector<16xf32>
    %7 = vector.shape_cast %6 : vector<16xf32> to vector<16x1xf32>
    %cst_9 = arith.constant 6.400000e+01 : f32
    %8 = vector.broadcast %cst_9 : f32 to vector<16x1xf32>
    %9 = arith.divf %7, %8 : vector<16x1xf32>
    %10 = vector.broadcast %9 : vector<16x1xf32> to vector<16x64xf32>
    %11 = arith.subf %1, %10 : vector<16x64xf32>
    %12 = arith.mulf %11, %11 : vector<16x64xf32>
    %cst_10 = arith.constant dense<0.000000e+00> : vector<16xf32>
    %13 = vector.multi_reduction <add>, %12, %cst_10 [1] : vector<16x64xf32> to vector<16xf32>
    %14 = vector.shape_cast %13 : vector<16xf32> to vector<16x1xf32>
    %cst_11 = arith.constant 6.400000e+01 : f32
    %15 = vector.broadcast %cst_11 : f32 to vector<16x1xf32>
    %16 = arith.divf %14, %15 : vector<16x1xf32>
    %17 = vector.broadcast %9 : vector<16x1xf32> to vector<16x64xf32>
    %18 = arith.subf %1, %17 : vector<16x64xf32>
    %cst_12 = arith.constant 9.99999974E-6 : f32
    %19 = vector.broadcast %cst_12 : f32 to vector<16x1xf32>
    %20 = arith.addf %16, %19 : vector<16x1xf32>
    %21 = math.rsqrt %20 : vector<16x1xf32>
    %22 = vector.broadcast %21 : vector<16x1xf32> to vector<16x64xf32>
    %23 = arith.mulf %18, %22 : vector<16x64xf32>
    %24 = vector.broadcast %4 : vector<1x64xf32> to vector<16x64xf32>
    %25 = arith.mulf %23, %24 : vector<16x64xf32>
    %26 = vector.broadcast %5 : vector<1x64xf32> to vector<16x64xf32>
    %27 = arith.addf %25, %26 : vector<16x64xf32>
    %c0_13 = arith.constant 0 : index
    %c0_14 = arith.constant 0 : index
    %28 = vector.load %arg5[%c0_13, %c0_14] : memref<1x64xf32, #tpu.memory_space<vmem>>, vector<1x64xf32>
    %c0_15 = arith.constant 0 : index
    %c0_16 = arith.constant 0 : index
    %29 = vector.load %arg6[%c0_15, %c0_16] : memref<1x64xf32, #tpu.memory_space<vmem>>, vector<1x64xf32>
    %cst_17 = arith.constant dense<0.000000e+00> : vector<8xf32>
    %30 = vector.multi_reduction <add>, %3, %cst_17 [1] : vector<8x64xf32> to vector<8xf32>
    %31 = vector.shape_cast %30 : vector<8xf32> to vector<8x1xf32>
    %cst_18 = arith.constant 6.400000e+01 : f32
    %32 = vector.broadcast %cst_18 : f32 to vector<8x1xf32>
    %33 = arith.divf %31, %32 : vector<8x1xf32>
    %34 = vector.broadcast %33 : vector<8x1xf32> to vector<8x64xf32>
    %35 = arith.subf %3, %34 : vector<8x64xf32>
    %36 = arith.mulf %35, %35 : vector<8x64xf32>
    %cst_19 = arith.constant dense<0.000000e+00> : vector<8xf32>
    %37 = vector.multi_reduction <add>, %36, %cst_19 [1] : vector<8x64xf32> to vector<8xf32>
    %38 = vector.shape_cast %37 : vector<8xf32> to vector<8x1xf32>
    %cst_20 = arith.constant 6.400000e+01 : f32
    %39 = vector.broadcast %cst_20 : f32 to vector<8x1xf32>
    %40 = arith.divf %38, %39 : vector<8x1xf32>
    %41 = vector.broadcast %33 : vector<8x1xf32> to vector<8x64xf32>
    %42 = arith.subf %3, %41 : vector<8x64xf32>
    %cst_21 = arith.constant 9.99999974E-6 : f32
    %43 = vector.broadcast %cst_21 : f32 to vector<8x1xf32>
    %44 = arith.addf %40, %43 : vector<8x1xf32>
    %45 = math.rsqrt %44 : vector<8x1xf32>
    %46 = vector.broadcast %45 : vector<8x1xf32> to vector<8x64xf32>
    %47 = arith.mulf %42, %46 : vector<8x64xf32>
    %48 = vector.broadcast %28 : vector<1x64xf32> to vector<8x64xf32>
    %49 = arith.mulf %47, %48 : vector<8x64xf32>
    %50 = vector.broadcast %29 : vector<1x64xf32> to vector<8x64xf32>
    %51 = arith.addf %49, %50 : vector<8x64xf32>
    %c0_22 = arith.constant 0 : index
    %c0_23 = arith.constant 0 : index
    %52 = vector.load %arg7[%c0_22, %c0_23] : memref<64x64xf32, #tpu.memory_space<vmem>>, vector<64x64xf32>
    %53 = arith.truncf %51 : vector<8x64xf32> to vector<8x64xbf16>
    %54 = arith.truncf %52 : vector<64x64xf32> to vector<64x64xbf16>
    %cst_24 = arith.constant dense<0.000000e+00> : vector<8x64xf32>
    %55 = tpu.matmul %53, %54, %cst_24 {dimension_numbers = #tpu.dot_dimension_numbers<[1], [0], [0], [1], [0, 0, 1, 1], [], []>} : vector<8x64xbf16>, vector<64x64xbf16>, vector<8x64xf32> -> vector<8x64xf32>
    %56 = vector.shape_cast %27 : vector<16x64xf32> to vector<1x16x64xf32>
    %57 = vector.shape_cast %51 : vector<8x64xf32> to vector<1x8x64xf32>
    %58 = tpu.concatenate %56, %57 in 1 : vector<1x16x64xf32>, vector<1x8x64xf32> -> vector<1x24x64xf32>
    %59 = vector.shape_cast %58 : vector<1x24x64xf32> to vector<24x64xf32>
    %c0_25 = arith.constant 0 : index
    %c0_26 = arith.constant 0 : index
    %60 = vector.load %arg8[%c0_25, %c0_26] : memref<64x64xf32, #tpu.memory_space<vmem>>, vector<64x64xf32>
    %61 = arith.truncf %59 : vector<24x64xf32> to vector<24x64xbf16>
    %62 = arith.truncf %60 : vector<64x64xf32> to vector<64x64xbf16>
    %cst_27 = arith.constant dense<0.000000e+00> : vector<24x64xf32>
    %63 = tpu.matmul %61, %62, %cst_27 {dimension_numbers = #tpu.dot_dimension_numbers<[1], [0], [0], [1], [0, 0, 1, 1], [], []>} : vector<24x64xbf16>, vector<64x64xbf16>, vector<24x64xf32> -> vector<24x64xf32>
    %c0_28 = arith.constant 0 : index
    %c0_29 = arith.constant 0 : index
    %64 = vector.load %arg9[%c0_28, %c0_29] : memref<64x64xf32, #tpu.memory_space<vmem>>, vector<64x64xf32>
    %65 = arith.truncf %59 : vector<24x64xf32> to vector<24x64xbf16>
    %66 = arith.truncf %64 : vector<64x64xf32> to vector<64x64xbf16>
    %cst_30 = arith.constant dense<0.000000e+00> : vector<24x64xf32>
    %67 = tpu.matmul %65, %66, %cst_30 {dimension_numbers = #tpu.dot_dimension_numbers<[1], [0], [0], [1], [0, 0, 1, 1], [], []>} : vector<24x64xbf16>, vector<64x64xbf16>, vector<24x64xf32> -> vector<24x64xf32>
    %68 = vector.extract_strided_slice %55 {offsets = [0, 0], sizes = [8, 16], strides = [1, 1]} : vector<8x64xf32> to vector<8x16xf32>
    %69 = vector.extract_strided_slice %55 {offsets = [0, 16], sizes = [8, 16], strides = [1, 1]} : vector<8x64xf32> to vector<8x16xf32>
    %70 = vector.extract_strided_slice %55 {offsets = [0, 32], sizes = [8, 16], strides = [1, 1]} : vector<8x64xf32> to vector<8x16xf32>
    %71 = vector.extract_strided_slice %55 {offsets = [0, 48], sizes = [8, 16], strides = [1, 1]} : vector<8x64xf32> to vector<8x16xf32>
    %72 = vector.shape_cast %68 : vector<8x16xf32> to vector<1x8x16xf32>
    %73 = vector.shape_cast %69 : vector<8x16xf32> to vector<1x8x16xf32>
    %74 = vector.shape_cast %70 : vector<8x16xf32> to vector<1x8x16xf32>
    %75 = vector.shape_cast %71 : vector<8x16xf32> to vector<1x8x16xf32>
    %76 = tpu.concatenate %72, %73, %74, %75 in 0 : vector<1x8x16xf32>, vector<1x8x16xf32>, vector<1x8x16xf32>, vector<1x8x16xf32> -> vector<4x8x16xf32>
    %77 = vector.extract_strided_slice %63 {offsets = [0, 0], sizes = [24, 16], strides = [1, 1]} : vector<24x64xf32> to vector<24x16xf32>
    %78 = vector.extract_strided_slice %63 {offsets = [0, 16], sizes = [24, 16], strides = [1, 1]} : vector<24x64xf32> to vector<24x16xf32>
    %79 = vector.extract_strided_slice %63 {offsets = [0, 32], sizes = [24, 16], strides = [1, 1]} : vector<24x64xf32> to vector<24x16xf32>
    %80 = vector.extract_strided_slice %63 {offsets = [0, 48], sizes = [24, 16], strides = [1, 1]} : vector<24x64xf32> to vector<24x16xf32>
    %81 = vector.shape_cast %77 : vector<24x16xf32> to vector<1x24x16xf32>
    %82 = vector.shape_cast %78 : vector<24x16xf32> to vector<1x24x16xf32>
    %83 = vector.shape_cast %79 : vector<24x16xf32> to vector<1x24x16xf32>
    %84 = vector.shape_cast %80 : vector<24x16xf32> to vector<1x24x16xf32>
    %85 = tpu.concatenate %81, %82, %83, %84 in 0 : vector<1x24x16xf32>, vector<1x24x16xf32>, vector<1x24x16xf32>, vector<1x24x16xf32> -> vector<4x24x16xf32>
    %86 = vector.extract_strided_slice %67 {offsets = [0, 0], sizes = [24, 16], strides = [1, 1]} : vector<24x64xf32> to vector<24x16xf32>
    %87 = vector.extract_strided_slice %67 {offsets = [0, 16], sizes = [24, 16], strides = [1, 1]} : vector<24x64xf32> to vector<24x16xf32>
    %88 = vector.extract_strided_slice %67 {offsets = [0, 32], sizes = [24, 16], strides = [1, 1]} : vector<24x64xf32> to vector<24x16xf32>
    %89 = vector.extract_strided_slice %67 {offsets = [0, 48], sizes = [24, 16], strides = [1, 1]} : vector<24x64xf32> to vector<24x16xf32>
    %90 = vector.shape_cast %86 : vector<24x16xf32> to vector<1x24x16xf32>
    %91 = vector.shape_cast %87 : vector<24x16xf32> to vector<1x24x16xf32>
    %92 = vector.shape_cast %88 : vector<24x16xf32> to vector<1x24x16xf32>
    %93 = vector.shape_cast %89 : vector<24x16xf32> to vector<1x24x16xf32>
    %94 = tpu.concatenate %90, %91, %92, %93 in 0 : vector<1x24x16xf32>, vector<1x24x16xf32>, vector<1x24x16xf32>, vector<1x24x16xf32> -> vector<4x24x16xf32>
    %c0_31 = arith.constant 0 : index
    %c0_32 = arith.constant 0 : index
    %95 = vector.load %arg11[%c0_31, %c0_32] : memref<1x16xf32, #tpu.memory_space<vmem>>, vector<1x16xf32>
    %c0_33 = arith.constant 0 : index
    %c0_34 = arith.constant 0 : index
    %96 = vector.load %arg12[%c0_33, %c0_34] : memref<1x16xf32, #tpu.memory_space<vmem>>, vector<1x16xf32>
    %cst_35 = arith.constant dense<0.000000e+00> : vector<4x8xf32>
    %97 = vector.multi_reduction <add>, %76, %cst_35 [2] : vector<4x8x16xf32> to vector<4x8xf32>
    %98 = vector.shape_cast %97 : vector<4x8xf32> to vector<4x8x1xf32>
    %cst_36 = arith.constant 1.600000e+01 : f32
    %99 = vector.broadcast %cst_36 : f32 to vector<4x8x1xf32>
    %100 = arith.divf %98, %99 : vector<4x8x1xf32>
    %101 = vector.broadcast %100 : vector<4x8x1xf32> to vector<4x8x16xf32>
    %102 = arith.subf %76, %101 : vector<4x8x16xf32>
    %103 = arith.mulf %102, %102 : vector<4x8x16xf32>
    %cst_37 = arith.constant dense<0.000000e+00> : vector<4x8xf32>
    %104 = vector.multi_reduction <add>, %103, %cst_37 [2] : vector<4x8x16xf32> to vector<4x8xf32>
    %105 = vector.shape_cast %104 : vector<4x8xf32> to vector<4x8x1xf32>
    %cst_38 = arith.constant 1.600000e+01 : f32
    %106 = vector.broadcast %cst_38 : f32 to vector<4x8x1xf32>
    %107 = arith.divf %105, %106 : vector<4x8x1xf32>
    %108 = vector.broadcast %100 : vector<4x8x1xf32> to vector<4x8x16xf32>
    %109 = arith.subf %76, %108 : vector<4x8x16xf32>
    %cst_39 = arith.constant 9.99999974E-6 : f32
    %110 = vector.broadcast %cst_39 : f32 to vector<4x8x1xf32>
    %111 = arith.addf %107, %110 : vector<4x8x1xf32>
    %112 = math.rsqrt %111 : vector<4x8x1xf32>
    %113 = vector.broadcast %112 : vector<4x8x1xf32> to vector<4x8x16xf32>
    %114 = arith.mulf %109, %113 : vector<4x8x16xf32>
    %115 = vector.shape_cast %95 : vector<1x16xf32> to vector<1x1x16xf32>
    %116 = vector.broadcast %115 : vector<1x1x16xf32> to vector<4x8x16xf32>
    %117 = arith.mulf %114, %116 : vector<4x8x16xf32>
    %118 = vector.shape_cast %96 : vector<1x16xf32> to vector<1x1x16xf32>
    %119 = vector.broadcast %118 : vector<1x1x16xf32> to vector<4x8x16xf32>
    %120 = arith.addf %117, %119 : vector<4x8x16xf32>
    %c0_40 = arith.constant 0 : index
    %c0_41 = arith.constant 0 : index
    %121 = vector.load %arg13[%c0_40, %c0_41] : memref<1x16xf32, #tpu.memory_space<vmem>>, vector<1x16xf32>
    %c0_42 = arith.constant 0 : index
    %c0_43 = arith.constant 0 : index
    %122 = vector.load %arg14[%c0_42, %c0_43] : memref<1x16xf32, #tpu.memory_space<vmem>>, vector<1x16xf32>
    %cst_44 = arith.constant dense<0.000000e+00> : vector<4x24xf32>
    %123 = vector.multi_reduction <add>, %85, %cst_44 [2] : vector<4x24x16xf32> to vector<4x24xf32>
    %124 = vector.shape_cast %123 : vector<4x24xf32> to vector<4x24x1xf32>
    %cst_45 = arith.constant 1.600000e+01 : f32
    %125 = vector.broadcast %cst_45 : f32 to vector<4x24x1xf32>
    %126 = arith.divf %124, %125 : vector<4x24x1xf32>
    %127 = vector.broadcast %126 : vector<4x24x1xf32> to vector<4x24x16xf32>
    %128 = arith.subf %85, %127 : vector<4x24x16xf32>
    %129 = arith.mulf %128, %128 : vector<4x24x16xf32>
    %cst_46 = arith.constant dense<0.000000e+00> : vector<4x24xf32>
    %130 = vector.multi_reduction <add>, %129, %cst_46 [2] : vector<4x24x16xf32> to vector<4x24xf32>
    %131 = vector.shape_cast %130 : vector<4x24xf32> to vector<4x24x1xf32>
    %cst_47 = arith.constant 1.600000e+01 : f32
    %132 = vector.broadcast %cst_47 : f32 to vector<4x24x1xf32>
    %133 = arith.divf %131, %132 : vector<4x24x1xf32>
    %134 = vector.broadcast %126 : vector<4x24x1xf32> to vector<4x24x16xf32>
    %135 = arith.subf %85, %134 : vector<4x24x16xf32>
    %cst_48 = arith.constant 9.99999974E-6 : f32
    %136 = vector.broadcast %cst_48 : f32 to vector<4x24x1xf32>
    %137 = arith.addf %133, %136 : vector<4x24x1xf32>
    %138 = math.rsqrt %137 : vector<4x24x1xf32>
    %139 = vector.broadcast %138 : vector<4x24x1xf32> to vector<4x24x16xf32>
    %140 = arith.mulf %135, %139 : vector<4x24x16xf32>
    %141 = vector.shape_cast %121 : vector<1x16xf32> to vector<1x1x16xf32>
    %142 = vector.broadcast %141 : vector<1x1x16xf32> to vector<4x24x16xf32>
    %143 = arith.mulf %140, %142 : vector<4x24x16xf32>
    %144 = vector.shape_cast %122 : vector<1x16xf32> to vector<1x1x16xf32>
    %145 = vector.broadcast %144 : vector<1x1x16xf32> to vector<4x24x16xf32>
    %146 = arith.addf %143, %145 : vector<4x24x16xf32>
    %147 = arith.truncf %120 : vector<4x8x16xf32> to vector<4x8x16xbf16>
    %148 = arith.truncf %146 : vector<4x24x16xf32> to vector<4x24x16xbf16>
    %cst_49 = arith.constant dense<0.000000e+00> : vector<4x8x24xf32>
    %149 = tpu.matmul %147, %148, %cst_49 {dimension_numbers = #tpu.dot_dimension_numbers<[2], [2], [1], [1], [0, 0, 0, 1, 1, 1], [0], [0]>} : vector<4x8x16xbf16>, vector<4x24x16xbf16>, vector<4x8x24xf32> -> vector<4x8x24xf32>
    %cst_50 = arith.constant dense<0xFF800000> : vector<4x8xf32>
    %150 = vector.multi_reduction <maximumf>, %149, %cst_50 [2] : vector<4x8x24xf32> to vector<4x8xf32>
    %151 = vector.shape_cast %150 : vector<4x8xf32> to vector<4x8x1xf32>
    %152 = vector.broadcast %151 : vector<4x8x1xf32> to vector<4x8x24xf32>
    %153 = arith.subf %149, %152 : vector<4x8x24xf32>
    %154 = math.exp %153 : vector<4x8x24xf32>
    %cst_51 = arith.constant dense<0.000000e+00> : vector<4x8xf32>
    %155 = vector.multi_reduction <add>, %154, %cst_51 [2] : vector<4x8x24xf32> to vector<4x8xf32>
    %156 = vector.shape_cast %155 : vector<4x8xf32> to vector<4x8x1xf32>
    %157 = tpu.reciprocal %156 {approx = true} : vector<4x8x1xf32> -> vector<4x8x1xf32>
    %158 = vector.broadcast %157 : vector<4x8x1xf32> to vector<4x8x24xf32>
    %159 = arith.mulf %154, %158 : vector<4x8x24xf32>
    %160 = arith.truncf %159 : vector<4x8x24xf32> to vector<4x8x24xbf16>
    %161 = arith.truncf %94 : vector<4x24x16xf32> to vector<4x24x16xbf16>
    %cst_52 = arith.constant dense<0.000000e+00> : vector<4x8x16xf32>
    %162 = tpu.matmul %160, %161, %cst_52 {dimension_numbers = #tpu.dot_dimension_numbers<[2], [1], [1], [2], [0, 0, 0, 1, 1, 2], [0], [0]>} : vector<4x8x24xbf16>, vector<4x24x16xbf16>, vector<4x8x16xf32> -> vector<4x8x16xf32>
    %c0_53 = arith.constant 0 : index
    %c0_54 = arith.constant 0 : index
    %c0_55 = arith.constant 0 : index
    %163 = vector.load %arg10[%c0_53, %c0_54, %c0_55] : memref<4x16x64xf32, #tpu.memory_space<vmem>>, vector<4x16x64xf32>
    %164 = arith.truncf %162 : vector<4x8x16xf32> to vector<4x8x16xbf16>
    %165 = arith.truncf %163 : vector<4x16x64xf32> to vector<4x16x64xbf16>
    %cst_56 = arith.constant dense<0.000000e+00> : vector<4x8x64xf32>
    %166 = tpu.matmul %164, %165, %cst_56 {dimension_numbers = #tpu.dot_dimension_numbers<[2], [1], [1], [2], [0, 0, 0, 1, 1, 2], [0], [0]>} : vector<4x8x16xbf16>, vector<4x16x64xbf16>, vector<4x8x64xf32> -> vector<4x8x64xf32>
    %167 = vector.extract_strided_slice %166 {offsets = [0, 0, 0], sizes = [1, 8, 64], strides = [1, 1, 1]} : vector<4x8x64xf32> to vector<1x8x64xf32>
    %168 = vector.shape_cast %167 : vector<1x8x64xf32> to vector<8x64xf32>
    %169 = vector.extract_strided_slice %166 {offsets = [1, 0, 0], sizes = [1, 8, 64], strides = [1, 1, 1]} : vector<4x8x64xf32> to vector<1x8x64xf32>
    %170 = vector.shape_cast %169 : vector<1x8x64xf32> to vector<8x64xf32>
    %171 = arith.addf %168, %170 : vector<8x64xf32>
    %172 = vector.extract_strided_slice %166 {offsets = [2, 0, 0], sizes = [1, 8, 64], strides = [1, 1, 1]} : vector<4x8x64xf32> to vector<1x8x64xf32>
    %173 = vector.shape_cast %172 : vector<1x8x64xf32> to vector<8x64xf32>
    %174 = arith.addf %171, %173 : vector<8x64xf32>
    %175 = vector.extract_strided_slice %166 {offsets = [3, 0, 0], sizes = [1, 8, 64], strides = [1, 1, 1]} : vector<4x8x64xf32> to vector<1x8x64xf32>
    %176 = vector.shape_cast %175 : vector<1x8x64xf32> to vector<8x64xf32>
    %177 = arith.addf %174, %176 : vector<8x64xf32>
    %178 = arith.addf %177, %3 : vector<8x64xf32>
    %c0_57 = arith.constant 0 : index
    %c0_58 = arith.constant 0 : index
    %179 = vector.load %arg15[%c0_57, %c0_58] : memref<1x64xf32, #tpu.memory_space<vmem>>, vector<1x64xf32>
    %c0_59 = arith.constant 0 : index
    %c0_60 = arith.constant 0 : index
    %180 = vector.load %arg16[%c0_59, %c0_60] : memref<1x64xf32, #tpu.memory_space<vmem>>, vector<1x64xf32>
    %cst_61 = arith.constant dense<0.000000e+00> : vector<8xf32>
    %181 = vector.multi_reduction <add>, %178, %cst_61 [1] : vector<8x64xf32> to vector<8xf32>
    %182 = vector.shape_cast %181 : vector<8xf32> to vector<8x1xf32>
    %cst_62 = arith.constant 6.400000e+01 : f32
    %183 = vector.broadcast %cst_62 : f32 to vector<8x1xf32>
    %184 = arith.divf %182, %183 : vector<8x1xf32>
    %185 = vector.broadcast %184 : vector<8x1xf32> to vector<8x64xf32>
    %186 = arith.subf %178, %185 : vector<8x64xf32>
    %187 = arith.mulf %186, %186 : vector<8x64xf32>
    %cst_63 = arith.constant dense<0.000000e+00> : vector<8xf32>
    %188 = vector.multi_reduction <add>, %187, %cst_63 [1] : vector<8x64xf32> to vector<8xf32>
    %189 = vector.shape_cast %188 : vector<8xf32> to vector<8x1xf32>
    %cst_64 = arith.constant 6.400000e+01 : f32
    %190 = vector.broadcast %cst_64 : f32 to vector<8x1xf32>
    %191 = arith.divf %189, %190 : vector<8x1xf32>
    %192 = vector.broadcast %184 : vector<8x1xf32> to vector<8x64xf32>
    %193 = arith.subf %178, %192 : vector<8x64xf32>
    %cst_65 = arith.constant 9.99999974E-6 : f32
    %194 = vector.broadcast %cst_65 : f32 to vector<8x1xf32>
    %195 = arith.addf %191, %194 : vector<8x1xf32>
    %196 = math.rsqrt %195 : vector<8x1xf32>
    %197 = vector.broadcast %196 : vector<8x1xf32> to vector<8x64xf32>
    %198 = arith.mulf %193, %197 : vector<8x64xf32>
    %199 = vector.broadcast %179 : vector<1x64xf32> to vector<8x64xf32>
    %200 = arith.mulf %198, %199 : vector<8x64xf32>
    %201 = vector.broadcast %180 : vector<1x64xf32> to vector<8x64xf32>
    %202 = arith.addf %200, %201 : vector<8x64xf32>
    %c0_66 = arith.constant 0 : index
    %c0_67 = arith.constant 0 : index
    %203 = vector.load %arg17[%c0_66, %c0_67] : memref<64x256xf32, #tpu.memory_space<vmem>>, vector<64x256xf32>
    %204 = arith.truncf %202 : vector<8x64xf32> to vector<8x64xbf16>
    %205 = arith.truncf %203 : vector<64x256xf32> to vector<64x256xbf16>
    %cst_68 = arith.constant dense<0.000000e+00> : vector<8x256xf32>
    %206 = tpu.matmul %204, %205, %cst_68 {dimension_numbers = #tpu.dot_dimension_numbers<[1], [0], [0], [1], [0, 0, 1, 1], [], []>} : vector<8x64xbf16>, vector<64x256xbf16>, vector<8x256xf32> -> vector<8x256xf32>
    %cst_69 = arith.constant 5.000000e-01 : f32
    %207 = vector.broadcast %cst_69 : f32 to vector<8x256xf32>
    %208 = arith.mulf %207, %206 : vector<8x256xf32>
    %cst_70 = arith.constant 0.707106769 : f32
    %209 = vector.broadcast %cst_70 : f32 to vector<8x256xf32>
    %210 = arith.mulf %206, %209 : vector<8x256xf32>
    %211 = math.absf %210 : vector<8x256xf32>
    %cst_71 = arith.constant 0.327591091 : f32
    %212 = vector.broadcast %cst_71 : f32 to vector<8x256xf32>
    %213 = arith.mulf %212, %211 : vector<8x256xf32>
    %cst_72 = arith.constant 1.000000e+00 : f32
    %214 = vector.broadcast %cst_72 : f32 to vector<8x256xf32>
    %215 = arith.addf %214, %213 : vector<8x256xf32>
    %cst_73 = arith.constant 1.000000e+00 : f32
    %216 = vector.broadcast %cst_73 : f32 to vector<8x256xf32>
    %217 = arith.divf %216, %215 : vector<8x256xf32>
    %cst_74 = arith.constant 1.06140542 : f32
    %218 = vector.broadcast %cst_74 : f32 to vector<8x256xf32>
    %219 = arith.mulf %218, %217 : vector<8x256xf32>
    %cst_75 = arith.constant -1.45315206 : f32
    %220 = vector.broadcast %cst_75 : f32 to vector<8x256xf32>
    %221 = arith.addf %219, %220 : vector<8x256xf32>
    %222 = arith.mulf %221, %217 : vector<8x256xf32>
    %cst_76 = arith.constant 1.42141378 : f32
    %223 = vector.broadcast %cst_76 : f32 to vector<8x256xf32>
    %224 = arith.addf %222, %223 : vector<8x256xf32>
    %225 = arith.mulf %224, %217 : vector<8x256xf32>
    %cst_77 = arith.constant -0.284496725 : f32
    %226 = vector.broadcast %cst_77 : f32 to vector<8x256xf32>
    %227 = arith.addf %225, %226 : vector<8x256xf32>
    %228 = arith.mulf %227, %217 : vector<8x256xf32>
    %cst_78 = arith.constant 0.254829586 : f32
    %229 = vector.broadcast %cst_78 : f32 to vector<8x256xf32>
    %230 = arith.addf %228, %229 : vector<8x256xf32>
    %231 = arith.mulf %230, %217 : vector<8x256xf32>
    %cst_79 = arith.constant 0.000000e+00 : f32
    %232 = vector.broadcast %cst_79 : f32 to vector<8x256xf32>
    %233 = arith.subf %232, %211 : vector<8x256xf32>
    %234 = arith.mulf %233, %211 : vector<8x256xf32>
    %235 = math.exp %234 : vector<8x256xf32>
    %236 = arith.mulf %231, %235 : vector<8x256xf32>
    %cst_80 = arith.constant 1.000000e+00 : f32
    %237 = vector.broadcast %cst_80 : f32 to vector<8x256xf32>
    %238 = arith.subf %237, %236 : vector<8x256xf32>
    %cst_81 = arith.constant 0.000000e+00 : f32
    %239 = vector.broadcast %cst_81 : f32 to vector<8x256xf32>
    %240 = arith.cmpf oge, %210, %239 : vector<8x256xf32>
    %cst_82 = arith.constant 0.000000e+00 : f32
    %241 = vector.broadcast %cst_82 : f32 to vector<8x256xf32>
    %242 = arith.subf %241, %238 : vector<8x256xf32>
    %243 = arith.select %240, %238, %242 : vector<8x256xi1>, vector<8x256xf32>
    %cst_83 = arith.constant 1.000000e+00 : f32
    %244 = vector.broadcast %cst_83 : f32 to vector<8x256xf32>
    %245 = arith.addf %244, %243 : vector<8x256xf32>
    %246 = arith.mulf %208, %245 : vector<8x256xf32>
    %c0_84 = arith.constant 0 : index
    %c0_85 = arith.constant 0 : index
    %247 = vector.load %arg18[%c0_84, %c0_85] : memref<256x64xf32, #tpu.memory_space<vmem>>, vector<256x64xf32>
    %248 = arith.truncf %246 : vector<8x256xf32> to vector<8x256xbf16>
    %249 = arith.truncf %247 : vector<256x64xf32> to vector<256x64xbf16>
    %cst_86 = arith.constant dense<0.000000e+00> : vector<8x64xf32>
    %250 = tpu.matmul %248, %249, %cst_86 {dimension_numbers = #tpu.dot_dimension_numbers<[1], [0], [0], [1], [0, 0, 1, 1], [], []>} : vector<8x256xbf16>, vector<256x64xbf16>, vector<8x64xf32> -> vector<8x64xf32>
    %251 = arith.addf %250, %178 : vector<8x64xf32>
    %252 = vector.shape_cast %251 : vector<8x64xf32> to vector<1x8x64xf32>
    %c0_87 = arith.constant 0 : index
    %c0_88 = arith.constant 0 : index
    %c0_89 = arith.constant 0 : index
    %253 = vector.load %arg19[%c0_87, %c0_88, %c0_89] : memref<1x8x64xf32, #tpu.memory_space<vmem>>, vector<1x8x64xf32>
    tpu.vector_store %arg19[%c0_87, %c0_88, %c0_89], %252 {strides = array<i32>} : memref<1x8x64xf32, #tpu.memory_space<vmem>>, vector<1x8x64xf32>,
    return
  }
  func.func @transform_0(%arg0: i32) -> (i32, i32, i32) {
    %c0_i32 = arith.constant 0 : i32
    %c0_i32_0 = arith.constant 0 : i32
    %c0_i32_1 = arith.constant 0 : i32
    return %arg0, %c0_i32, %c0_i32_0 : i32, i32, i32
  }
  func.func @transform_1(%arg0: i32) -> (i32, i32, i32) {
    %c0_i32 = arith.constant 0 : i32
    %c0_i32_0 = arith.constant 0 : i32
    %c0_i32_1 = arith.constant 0 : i32
    return %arg0, %c0_i32, %c0_i32_0 : i32, i32, i32
  }
  func.func @transform_2(%arg0: i32) -> (i32, i32) {
    %c0_i32 = arith.constant 0 : i32
    %c0_i32_0 = arith.constant 0 : i32
    %c0_i32_1 = arith.constant 0 : i32
    return %c0_i32, %c0_i32_0 : i32, i32
  }
  func.func @transform_3(%arg0: i32) -> (i32, i32) {
    %c0_i32 = arith.constant 0 : i32
    %c0_i32_0 = arith.constant 0 : i32
    %c0_i32_1 = arith.constant 0 : i32
    return %c0_i32, %c0_i32_0 : i32, i32
  }
  func.func @transform_4(%arg0: i32) -> (i32, i32) {
    %c0_i32 = arith.constant 0 : i32
    %c0_i32_0 = arith.constant 0 : i32
    %c0_i32_1 = arith.constant 0 : i32
    return %c0_i32, %c0_i32_0 : i32, i32
  }
  func.func @transform_5(%arg0: i32) -> (i32, i32) {
    %c0_i32 = arith.constant 0 : i32
    %c0_i32_0 = arith.constant 0 : i32
    %c0_i32_1 = arith.constant 0 : i32
    return %c0_i32, %c0_i32_0 : i32, i32
  }
  func.func @transform_6(%arg0: i32) -> (i32, i32) {
    %c0_i32 = arith.constant 0 : i32
    %c0_i32_0 = arith.constant 0 : i32
    %c0_i32_1 = arith.constant 0 : i32
    return %c0_i32, %c0_i32_0 : i32, i32
  }
  func.func @transform_7(%arg0: i32) -> (i32, i32) {
    %c0_i32 = arith.constant 0 : i32
    %c0_i32_0 = arith.constant 0 : i32
    %c0_i32_1 = arith.constant 0 : i32
    return %c0_i32, %c0_i32_0 : i32, i32
  }
  func.func @transform_8(%arg0: i32) -> (i32, i32) {
    %c0_i32 = arith.constant 0 : i32
    %c0_i32_0 = arith.constant 0 : i32
    %c0_i32_1 = arith.constant 0 : i32
    return %c0_i32, %c0_i32_0 : i32, i32
  }
  func.func @transform_9(%arg0: i32) -> (i32, i32, i32) {
    %c0_i32 = arith.constant 0 : i32
    %c0_i32_0 = arith.constant 0 : i32
    %c0_i32_1 = arith.constant 0 : i32
    %c0_i32_2 = arith.constant 0 : i32
    return %c0_i32, %c0_i32_0, %c0_i32_1 : i32, i32, i32
  }
  func.func @transform_10(%arg0: i32) -> (i32, i32) {
    %c0_i32 = arith.constant 0 : i32
    %c0_i32_0 = arith.constant 0 : i32
    %c0_i32_1 = arith.constant 0 : i32
    return %c0_i32, %c0_i32_0 : i32, i32
  }
  func.func @transform_11(%arg0: i32) -> (i32, i32) {
    %c0_i32 = arith.constant 0 : i32
    %c0_i32_0 = arith.constant 0 : i32
    %c0_i32_1 = arith.constant 0 : i32
    return %c0_i32, %c0_i32_0 : i32, i32
  }
  func.func @transform_12(%arg0: i32) -> (i32, i32) {
    %c0_i32 = arith.constant 0 : i32
    %c0_i32_0 = arith.constant 0 : i32
    %c0_i32_1 = arith.constant 0 : i32
    return %c0_i32, %c0_i32_0 : i32, i32
  }
  func.func @transform_13(%arg0: i32) -> (i32, i32) {
    %c0_i32 = arith.constant 0 : i32
    %c0_i32_0 = arith.constant 0 : i32
    %c0_i32_1 = arith.constant 0 : i32
    return %c0_i32, %c0_i32_0 : i32, i32
  }
  func.func @transform_14(%arg0: i32) -> (i32, i32) {
    %c0_i32 = arith.constant 0 : i32
    %c0_i32_0 = arith.constant 0 : i32
    %c0_i32_1 = arith.constant 0 : i32
    return %c0_i32, %c0_i32_0 : i32, i32
  }
  func.func @transform_15(%arg0: i32) -> (i32, i32) {
    %c0_i32 = arith.constant 0 : i32
    %c0_i32_0 = arith.constant 0 : i32
    %c0_i32_1 = arith.constant 0 : i32
    return %c0_i32, %c0_i32_0 : i32, i32
  }
  func.func @transform_16(%arg0: i32) -> (i32, i32) {
    %c0_i32 = arith.constant 0 : i32
    %c0_i32_0 = arith.constant 0 : i32
    %c0_i32_1 = arith.constant 0 : i32
    return %c0_i32, %c0_i32_0 : i32, i32
  }
  func.func @transform_17(%arg0: i32) -> (i32, i32) {
    %c0_i32 = arith.constant 0 : i32
    %c0_i32_0 = arith.constant 0 : i32
    %c0_i32_1 = arith.constant 0 : i32
    return %c0_i32, %c0_i32_0 : i32, i32
  }
  func.func @transform_18(%arg0: i32) -> (i32, i32, i32) {
    %c0_i32 = arith.constant 0 : i32
    %c0_i32_0 = arith.constant 0 : i32
    %c0_i32_1 = arith.constant 0 : i32
    return %arg0, %c0_i32, %c0_i32_0 : i32, i32, i32
  }
}

module attributes {stable_mosaic.version = 11 : i64} {
  func.func @_linear_bias_kernel(%arg0: i32, %arg1: memref<16x64xf32, #tpu.memory_space<vmem>>, %arg2: memref<64x64xf32, #tpu.memory_space<vmem>>, %arg3: memref<1x64xf32, #tpu.memory_space<vmem>>, %arg4: memref<16x64xf32, #tpu.memory_space<vmem>>) attributes {dimension_semantics = [#tpu.dimension_semantics<arbitrary>], iteration_bounds = array<i64: 1>, scalar_prefetch = 0 : i64, scratch_operands = 0 : i64, tpu.core_type = #tpu.core_type<tc>, window_params = [{pipeline_mode = #tpu.pipeline_mode<synchronous>, transform_indices = @transform_0, window_bounds = array<i64: 16, 64>}, {pipeline_mode = #tpu.pipeline_mode<synchronous>, transform_indices = @transform_1, window_bounds = array<i64: 64, 64>}, {pipeline_mode = #tpu.pipeline_mode<synchronous>, transform_indices = @transform_2, window_bounds = array<i64: 1, 64>}, {pipeline_mode = #tpu.pipeline_mode<synchronous>, transform_indices = @transform_3, window_bounds = array<i64: 16, 64>}]} {
    %c0 = arith.constant 0 : index
    %c0_0 = arith.constant 0 : index
    %0 = vector.load %arg1[%c0, %c0_0] : memref<16x64xf32, #tpu.memory_space<vmem>>, vector<16x64xf32>
    %c0_1 = arith.constant 0 : index
    %c0_2 = arith.constant 0 : index
    %1 = vector.load %arg2[%c0_1, %c0_2] : memref<64x64xf32, #tpu.memory_space<vmem>>, vector<64x64xf32>
    %2 = arith.truncf %0 : vector<16x64xf32> to vector<16x64xbf16>
    %3 = arith.truncf %1 : vector<64x64xf32> to vector<64x64xbf16>
    %cst = arith.constant dense<0.000000e+00> : vector<16x64xf32>
    %4 = tpu.matmul %2, %3, %cst {dimension_numbers = #tpu.dot_dimension_numbers<[1], [0], [0], [1], [0, 0, 1, 1], [], []>} : vector<16x64xbf16>, vector<64x64xbf16>, vector<16x64xf32> -> vector<16x64xf32>
    %c0_3 = arith.constant 0 : index
    %c0_4 = arith.constant 0 : index
    %5 = vector.load %arg3[%c0_3, %c0_4] : memref<1x64xf32, #tpu.memory_space<vmem>>, vector<1x64xf32>
    %6 = vector.broadcast %5 : vector<1x64xf32> to vector<16x64xf32>
    %7 = arith.addf %4, %6 : vector<16x64xf32>
    %c0_5 = arith.constant 0 : index
    %c0_6 = arith.constant 0 : index
    %8 = vector.load %arg4[%c0_5, %c0_6] : memref<16x64xf32, #tpu.memory_space<vmem>>, vector<16x64xf32>
    tpu.vector_store %arg4[%c0_5, %c0_6], %7 {strides = array<i32>} : memref<16x64xf32, #tpu.memory_space<vmem>>, vector<16x64xf32>,
    return
  }
  func.func @transform_0(%arg0: i32) -> (i32, i32) {
    %c0_i32 = arith.constant 0 : i32
    %c0_i32_0 = arith.constant 0 : i32
    %c0_i32_1 = arith.constant 0 : i32
    return %c0_i32, %c0_i32_0 : i32, i32
  }
  func.func @transform_1(%arg0: i32) -> (i32, i32) {
    %c0_i32 = arith.constant 0 : i32
    %c0_i32_0 = arith.constant 0 : i32
    %c0_i32_1 = arith.constant 0 : i32
    return %c0_i32, %c0_i32_0 : i32, i32
  }
  func.func @transform_2(%arg0: i32) -> (i32, i32) {
    %c0_i32 = arith.constant 0 : i32
    %c0_i32_0 = arith.constant 0 : i32
    %c0_i32_1 = arith.constant 0 : i32
    return %c0_i32, %c0_i32_0 : i32, i32
  }
  func.func @transform_3(%arg0: i32) -> (i32, i32) {
    %c0_i32 = arith.constant 0 : i32
    %c0_i32_0 = arith.constant 0 : i32
    %c0_i32_1 = arith.constant 0 : i32
    return %c0_i32, %c0_i32_0 : i32, i32
  }
}

module attributes {stable_mosaic.version = 11 : i64} {
  func.func @_layer_kernel(%arg0: i32, %arg1: memref<1x8x64xf32, #tpu.memory_space<vmem>>, %arg2: memref<1x8x64xf32, #tpu.memory_space<vmem>>, %arg3: memref<1x64xf32, #tpu.memory_space<vmem>>, %arg4: memref<1x64xf32, #tpu.memory_space<vmem>>, %arg5: memref<1x64xf32, #tpu.memory_space<vmem>>, %arg6: memref<1x64xf32, #tpu.memory_space<vmem>>, %arg7: memref<64x64xf32, #tpu.memory_space<vmem>>, %arg8: memref<64x64xf32, #tpu.memory_space<vmem>>, %arg9: memref<64x64xf32, #tpu.memory_space<vmem>>, %arg10: memref<4x16x64xf32, #tpu.memory_space<vmem>>, %arg11: memref<1x16xf32, #tpu.memory_space<vmem>>, %arg12: memref<1x16xf32, #tpu.memory_space<vmem>>, %arg13: memref<1x16xf32, #tpu.memory_space<vmem>>, %arg14: memref<1x16xf32, #tpu.memory_space<vmem>>, %arg15: memref<1x64xf32, #tpu.memory_space<vmem>>, %arg16: memref<1x64xf32, #tpu.memory_space<vmem>>, %arg17: memref<64x256xf32, #tpu.memory_space<vmem>>, %arg18: memref<256x64xf32, #tpu.memory_space<vmem>>, %arg19: memref<1x64xf32, #tpu.memory_space<vmem>>, %arg20: memref<1x64xf32, #tpu.memory_space<vmem>>, %arg21: memref<1x8x64xf32, #tpu.memory_space<vmem>>) attributes {dimension_semantics = [#tpu.dimension_semantics<parallel>], iteration_bounds = array<i64: 2>, scalar_prefetch = 0 : i64, scratch_operands = 0 : i64, tpu.core_type = #tpu.core_type<tc>, window_params = [{transform_indices = @transform_0, window_bounds = array<i64: 1, 8, 64>}, {transform_indices = @transform_1, window_bounds = array<i64: 1, 8, 64>}, {pipeline_mode = #tpu.pipeline_mode<synchronous>, transform_indices = @transform_2, window_bounds = array<i64: 1, 64>}, {pipeline_mode = #tpu.pipeline_mode<synchronous>, transform_indices = @transform_3, window_bounds = array<i64: 1, 64>}, {pipeline_mode = #tpu.pipeline_mode<synchronous>, transform_indices = @transform_4, window_bounds = array<i64: 1, 64>}, {pipeline_mode = #tpu.pipeline_mode<synchronous>, transform_indices = @transform_5, window_bounds = array<i64: 1, 64>}, {pipeline_mode = #tpu.pipeline_mode<synchronous>, transform_indices = @transform_6, window_bounds = array<i64: 64, 64>}, {pipeline_mode = #tpu.pipeline_mode<synchronous>, transform_indices = @transform_7, window_bounds = array<i64: 64, 64>}, {pipeline_mode = #tpu.pipeline_mode<synchronous>, transform_indices = @transform_8, window_bounds = array<i64: 64, 64>}, {pipeline_mode = #tpu.pipeline_mode<synchronous>, transform_indices = @transform_9, window_bounds = array<i64: 4, 16, 64>}, {pipeline_mode = #tpu.pipeline_mode<synchronous>, transform_indices = @transform_10, window_bounds = array<i64: 1, 16>}, {pipeline_mode = #tpu.pipeline_mode<synchronous>, transform_indices = @transform_11, window_bounds = array<i64: 1, 16>}, {pipeline_mode = #tpu.pipeline_mode<synchronous>, transform_indices = @transform_12, window_bounds = array<i64: 1, 16>}, {pipeline_mode = #tpu.pipeline_mode<synchronous>, transform_indices = @transform_13, window_bounds = array<i64: 1, 16>}, {pipeline_mode = #tpu.pipeline_mode<synchronous>, transform_indices = @transform_14, window_bounds = array<i64: 1, 64>}, {pipeline_mode = #tpu.pipeline_mode<synchronous>, transform_indices = @transform_15, window_bounds = array<i64: 1, 64>}, {pipeline_mode = #tpu.pipeline_mode<synchronous>, transform_indices = @transform_16, window_bounds = array<i64: 64, 256>}, {pipeline_mode = #tpu.pipeline_mode<synchronous>, transform_indices = @transform_17, window_bounds = array<i64: 256, 64>}, {pipeline_mode = #tpu.pipeline_mode<synchronous>, transform_indices = @transform_18, window_bounds = array<i64: 1, 64>}, {pipeline_mode = #tpu.pipeline_mode<synchronous>, transform_indices = @transform_19, window_bounds = array<i64: 1, 64>}, {transform_indices = @transform_20, window_bounds = array<i64: 1, 8, 64>}]} {
    %c0 = arith.constant 0 : index
    %c0_0 = arith.constant 0 : index
    %c0_1 = arith.constant 0 : index
    %0 = vector.load %arg1[%c0, %c0_0, %c0_1] : memref<1x8x64xf32, #tpu.memory_space<vmem>>, vector<1x8x64xf32>
    %1 = vector.shape_cast %0 : vector<1x8x64xf32> to vector<8x64xf32>
    %c0_2 = arith.constant 0 : index
    %c0_3 = arith.constant 0 : index
    %c0_4 = arith.constant 0 : index
    %2 = vector.load %arg2[%c0_2, %c0_3, %c0_4] : memref<1x8x64xf32, #tpu.memory_space<vmem>>, vector<1x8x64xf32>
    %3 = vector.shape_cast %2 : vector<1x8x64xf32> to vector<8x64xf32>
    %c0_5 = arith.constant 0 : index
    %c0_6 = arith.constant 0 : index
    %4 = vector.load %arg3[%c0_5, %c0_6] : memref<1x64xf32, #tpu.memory_space<vmem>>, vector<1x64xf32>
    %c0_7 = arith.constant 0 : index
    %c0_8 = arith.constant 0 : index
    %5 = vector.load %arg4[%c0_7, %c0_8] : memref<1x64xf32, #tpu.memory_space<vmem>>, vector<1x64xf32>
    %cst = arith.constant dense<0.000000e+00> : vector<8xf32>
    %6 = vector.multi_reduction <add>, %1, %cst [1] : vector<8x64xf32> to vector<8xf32>
    %7 = vector.shape_cast %6 : vector<8xf32> to vector<8x1xf32>
    %cst_9 = arith.constant 6.400000e+01 : f32
    %8 = vector.broadcast %cst_9 : f32 to vector<8x1xf32>
    %9 = arith.divf %7, %8 : vector<8x1xf32>
    %10 = vector.broadcast %9 : vector<8x1xf32> to vector<8x64xf32>
    %11 = arith.subf %1, %10 : vector<8x64xf32>
    %12 = arith.mulf %11, %11 : vector<8x64xf32>
    %cst_10 = arith.constant dense<0.000000e+00> : vector<8xf32>
    %13 = vector.multi_reduction <add>, %12, %cst_10 [1] : vector<8x64xf32> to vector<8xf32>
    %14 = vector.shape_cast %13 : vector<8xf32> to vector<8x1xf32>
    %cst_11 = arith.constant 6.400000e+01 : f32
    %15 = vector.broadcast %cst_11 : f32 to vector<8x1xf32>
    %16 = arith.divf %14, %15 : vector<8x1xf32>
    %17 = vector.broadcast %9 : vector<8x1xf32> to vector<8x64xf32>
    %18 = arith.subf %1, %17 : vector<8x64xf32>
    %cst_12 = arith.constant 9.99999974E-6 : f32
    %19 = vector.broadcast %cst_12 : f32 to vector<8x1xf32>
    %20 = arith.addf %16, %19 : vector<8x1xf32>
    %21 = math.rsqrt %20 : vector<8x1xf32>
    %22 = vector.broadcast %21 : vector<8x1xf32> to vector<8x64xf32>
    %23 = arith.mulf %18, %22 : vector<8x64xf32>
    %24 = vector.broadcast %4 : vector<1x64xf32> to vector<8x64xf32>
    %25 = arith.mulf %23, %24 : vector<8x64xf32>
    %26 = vector.broadcast %5 : vector<1x64xf32> to vector<8x64xf32>
    %27 = arith.addf %25, %26 : vector<8x64xf32>
    %c0_13 = arith.constant 0 : index
    %c0_14 = arith.constant 0 : index
    %28 = vector.load %arg5[%c0_13, %c0_14] : memref<1x64xf32, #tpu.memory_space<vmem>>, vector<1x64xf32>
    %c0_15 = arith.constant 0 : index
    %c0_16 = arith.constant 0 : index
    %29 = vector.load %arg6[%c0_15, %c0_16] : memref<1x64xf32, #tpu.memory_space<vmem>>, vector<1x64xf32>
    %cst_17 = arith.constant dense<0.000000e+00> : vector<8xf32>
    %30 = vector.multi_reduction <add>, %3, %cst_17 [1] : vector<8x64xf32> to vector<8xf32>
    %31 = vector.shape_cast %30 : vector<8xf32> to vector<8x1xf32>
    %cst_18 = arith.constant 6.400000e+01 : f32
    %32 = vector.broadcast %cst_18 : f32 to vector<8x1xf32>
    %33 = arith.divf %31, %32 : vector<8x1xf32>
    %34 = vector.broadcast %33 : vector<8x1xf32> to vector<8x64xf32>
    %35 = arith.subf %3, %34 : vector<8x64xf32>
    %36 = arith.mulf %35, %35 : vector<8x64xf32>
    %cst_19 = arith.constant dense<0.000000e+00> : vector<8xf32>
    %37 = vector.multi_reduction <add>, %36, %cst_19 [1] : vector<8x64xf32> to vector<8xf32>
    %38 = vector.shape_cast %37 : vector<8xf32> to vector<8x1xf32>
    %cst_20 = arith.constant 6.400000e+01 : f32
    %39 = vector.broadcast %cst_20 : f32 to vector<8x1xf32>
    %40 = arith.divf %38, %39 : vector<8x1xf32>
    %41 = vector.broadcast %33 : vector<8x1xf32> to vector<8x64xf32>
    %42 = arith.subf %3, %41 : vector<8x64xf32>
    %cst_21 = arith.constant 9.99999974E-6 : f32
    %43 = vector.broadcast %cst_21 : f32 to vector<8x1xf32>
    %44 = arith.addf %40, %43 : vector<8x1xf32>
    %45 = math.rsqrt %44 : vector<8x1xf32>
    %46 = vector.broadcast %45 : vector<8x1xf32> to vector<8x64xf32>
    %47 = arith.mulf %42, %46 : vector<8x64xf32>
    %48 = vector.broadcast %28 : vector<1x64xf32> to vector<8x64xf32>
    %49 = arith.mulf %47, %48 : vector<8x64xf32>
    %50 = vector.broadcast %29 : vector<1x64xf32> to vector<8x64xf32>
    %51 = arith.addf %49, %50 : vector<8x64xf32>
    %c0_22 = arith.constant 0 : index
    %c0_23 = arith.constant 0 : index
    %52 = vector.load %arg7[%c0_22, %c0_23] : memref<64x64xf32, #tpu.memory_space<vmem>>, vector<64x64xf32>
    %53 = arith.truncf %51 : vector<8x64xf32> to vector<8x64xbf16>
    %54 = arith.truncf %52 : vector<64x64xf32> to vector<64x64xbf16>
    %cst_24 = arith.constant dense<0.000000e+00> : vector<8x64xf32>
    %55 = tpu.matmul %53, %54, %cst_24 {dimension_numbers = #tpu.dot_dimension_numbers<[1], [0], [0], [1], [0, 0, 1, 1], [], []>} : vector<8x64xbf16>, vector<64x64xbf16>, vector<8x64xf32> -> vector<8x64xf32>
    %56 = vector.shape_cast %27 : vector<8x64xf32> to vector<1x8x64xf32>
    %57 = vector.shape_cast %51 : vector<8x64xf32> to vector<1x8x64xf32>
    %58 = tpu.concatenate %56, %57 in 1 : vector<1x8x64xf32>, vector<1x8x64xf32> -> vector<1x16x64xf32>
    %59 = vector.shape_cast %58 : vector<1x16x64xf32> to vector<16x64xf32>
    %c0_25 = arith.constant 0 : index
    %c0_26 = arith.constant 0 : index
    %60 = vector.load %arg8[%c0_25, %c0_26] : memref<64x64xf32, #tpu.memory_space<vmem>>, vector<64x64xf32>
    %61 = arith.truncf %59 : vector<16x64xf32> to vector<16x64xbf16>
    %62 = arith.truncf %60 : vector<64x64xf32> to vector<64x64xbf16>
    %cst_27 = arith.constant dense<0.000000e+00> : vector<16x64xf32>
    %63 = tpu.matmul %61, %62, %cst_27 {dimension_numbers = #tpu.dot_dimension_numbers<[1], [0], [0], [1], [0, 0, 1, 1], [], []>} : vector<16x64xbf16>, vector<64x64xbf16>, vector<16x64xf32> -> vector<16x64xf32>
    %c0_28 = arith.constant 0 : index
    %c0_29 = arith.constant 0 : index
    %64 = vector.load %arg9[%c0_28, %c0_29] : memref<64x64xf32, #tpu.memory_space<vmem>>, vector<64x64xf32>
    %65 = arith.truncf %59 : vector<16x64xf32> to vector<16x64xbf16>
    %66 = arith.truncf %64 : vector<64x64xf32> to vector<64x64xbf16>
    %cst_30 = arith.constant dense<0.000000e+00> : vector<16x64xf32>
    %67 = tpu.matmul %65, %66, %cst_30 {dimension_numbers = #tpu.dot_dimension_numbers<[1], [0], [0], [1], [0, 0, 1, 1], [], []>} : vector<16x64xbf16>, vector<64x64xbf16>, vector<16x64xf32> -> vector<16x64xf32>
    %68 = vector.extract_strided_slice %55 {offsets = [0, 0], sizes = [8, 16], strides = [1, 1]} : vector<8x64xf32> to vector<8x16xf32>
    %69 = vector.extract_strided_slice %55 {offsets = [0, 16], sizes = [8, 16], strides = [1, 1]} : vector<8x64xf32> to vector<8x16xf32>
    %70 = vector.extract_strided_slice %55 {offsets = [0, 32], sizes = [8, 16], strides = [1, 1]} : vector<8x64xf32> to vector<8x16xf32>
    %71 = vector.extract_strided_slice %55 {offsets = [0, 48], sizes = [8, 16], strides = [1, 1]} : vector<8x64xf32> to vector<8x16xf32>
    %72 = vector.shape_cast %68 : vector<8x16xf32> to vector<1x8x16xf32>
    %73 = vector.shape_cast %69 : vector<8x16xf32> to vector<1x8x16xf32>
    %74 = vector.shape_cast %70 : vector<8x16xf32> to vector<1x8x16xf32>
    %75 = vector.shape_cast %71 : vector<8x16xf32> to vector<1x8x16xf32>
    %76 = tpu.concatenate %72, %73, %74, %75 in 0 : vector<1x8x16xf32>, vector<1x8x16xf32>, vector<1x8x16xf32>, vector<1x8x16xf32> -> vector<4x8x16xf32>
    %77 = vector.extract_strided_slice %63 {offsets = [0, 0], sizes = [16, 16], strides = [1, 1]} : vector<16x64xf32> to vector<16x16xf32>
    %78 = vector.extract_strided_slice %63 {offsets = [0, 16], sizes = [16, 16], strides = [1, 1]} : vector<16x64xf32> to vector<16x16xf32>
    %79 = vector.extract_strided_slice %63 {offsets = [0, 32], sizes = [16, 16], strides = [1, 1]} : vector<16x64xf32> to vector<16x16xf32>
    %80 = vector.extract_strided_slice %63 {offsets = [0, 48], sizes = [16, 16], strides = [1, 1]} : vector<16x64xf32> to vector<16x16xf32>
    %81 = vector.shape_cast %77 : vector<16x16xf32> to vector<1x16x16xf32>
    %82 = vector.shape_cast %78 : vector<16x16xf32> to vector<1x16x16xf32>
    %83 = vector.shape_cast %79 : vector<16x16xf32> to vector<1x16x16xf32>
    %84 = vector.shape_cast %80 : vector<16x16xf32> to vector<1x16x16xf32>
    %85 = tpu.concatenate %81, %82, %83, %84 in 0 : vector<1x16x16xf32>, vector<1x16x16xf32>, vector<1x16x16xf32>, vector<1x16x16xf32> -> vector<4x16x16xf32>
    %86 = vector.extract_strided_slice %67 {offsets = [0, 0], sizes = [16, 16], strides = [1, 1]} : vector<16x64xf32> to vector<16x16xf32>
    %87 = vector.extract_strided_slice %67 {offsets = [0, 16], sizes = [16, 16], strides = [1, 1]} : vector<16x64xf32> to vector<16x16xf32>
    %88 = vector.extract_strided_slice %67 {offsets = [0, 32], sizes = [16, 16], strides = [1, 1]} : vector<16x64xf32> to vector<16x16xf32>
    %89 = vector.extract_strided_slice %67 {offsets = [0, 48], sizes = [16, 16], strides = [1, 1]} : vector<16x64xf32> to vector<16x16xf32>
    %90 = vector.shape_cast %86 : vector<16x16xf32> to vector<1x16x16xf32>
    %91 = vector.shape_cast %87 : vector<16x16xf32> to vector<1x16x16xf32>
    %92 = vector.shape_cast %88 : vector<16x16xf32> to vector<1x16x16xf32>
    %93 = vector.shape_cast %89 : vector<16x16xf32> to vector<1x16x16xf32>
    %94 = tpu.concatenate %90, %91, %92, %93 in 0 : vector<1x16x16xf32>, vector<1x16x16xf32>, vector<1x16x16xf32>, vector<1x16x16xf32> -> vector<4x16x16xf32>
    %c0_31 = arith.constant 0 : index
    %c0_32 = arith.constant 0 : index
    %95 = vector.load %arg11[%c0_31, %c0_32] : memref<1x16xf32, #tpu.memory_space<vmem>>, vector<1x16xf32>
    %c0_33 = arith.constant 0 : index
    %c0_34 = arith.constant 0 : index
    %96 = vector.load %arg12[%c0_33, %c0_34] : memref<1x16xf32, #tpu.memory_space<vmem>>, vector<1x16xf32>
    %cst_35 = arith.constant dense<0.000000e+00> : vector<4x8xf32>
    %97 = vector.multi_reduction <add>, %76, %cst_35 [2] : vector<4x8x16xf32> to vector<4x8xf32>
    %98 = vector.shape_cast %97 : vector<4x8xf32> to vector<4x8x1xf32>
    %cst_36 = arith.constant 1.600000e+01 : f32
    %99 = vector.broadcast %cst_36 : f32 to vector<4x8x1xf32>
    %100 = arith.divf %98, %99 : vector<4x8x1xf32>
    %101 = vector.broadcast %100 : vector<4x8x1xf32> to vector<4x8x16xf32>
    %102 = arith.subf %76, %101 : vector<4x8x16xf32>
    %103 = arith.mulf %102, %102 : vector<4x8x16xf32>
    %cst_37 = arith.constant dense<0.000000e+00> : vector<4x8xf32>
    %104 = vector.multi_reduction <add>, %103, %cst_37 [2] : vector<4x8x16xf32> to vector<4x8xf32>
    %105 = vector.shape_cast %104 : vector<4x8xf32> to vector<4x8x1xf32>
    %cst_38 = arith.constant 1.600000e+01 : f32
    %106 = vector.broadcast %cst_38 : f32 to vector<4x8x1xf32>
    %107 = arith.divf %105, %106 : vector<4x8x1xf32>
    %108 = vector.broadcast %100 : vector<4x8x1xf32> to vector<4x8x16xf32>
    %109 = arith.subf %76, %108 : vector<4x8x16xf32>
    %cst_39 = arith.constant 9.99999974E-6 : f32
    %110 = vector.broadcast %cst_39 : f32 to vector<4x8x1xf32>
    %111 = arith.addf %107, %110 : vector<4x8x1xf32>
    %112 = math.rsqrt %111 : vector<4x8x1xf32>
    %113 = vector.broadcast %112 : vector<4x8x1xf32> to vector<4x8x16xf32>
    %114 = arith.mulf %109, %113 : vector<4x8x16xf32>
    %115 = vector.shape_cast %95 : vector<1x16xf32> to vector<1x1x16xf32>
    %116 = vector.broadcast %115 : vector<1x1x16xf32> to vector<4x8x16xf32>
    %117 = arith.mulf %114, %116 : vector<4x8x16xf32>
    %118 = vector.shape_cast %96 : vector<1x16xf32> to vector<1x1x16xf32>
    %119 = vector.broadcast %118 : vector<1x1x16xf32> to vector<4x8x16xf32>
    %120 = arith.addf %117, %119 : vector<4x8x16xf32>
    %c0_40 = arith.constant 0 : index
    %c0_41 = arith.constant 0 : index
    %121 = vector.load %arg13[%c0_40, %c0_41] : memref<1x16xf32, #tpu.memory_space<vmem>>, vector<1x16xf32>
    %c0_42 = arith.constant 0 : index
    %c0_43 = arith.constant 0 : index
    %122 = vector.load %arg14[%c0_42, %c0_43] : memref<1x16xf32, #tpu.memory_space<vmem>>, vector<1x16xf32>
    %cst_44 = arith.constant dense<0.000000e+00> : vector<4x16xf32>
    %123 = vector.multi_reduction <add>, %85, %cst_44 [2] : vector<4x16x16xf32> to vector<4x16xf32>
    %124 = vector.shape_cast %123 : vector<4x16xf32> to vector<4x16x1xf32>
    %cst_45 = arith.constant 1.600000e+01 : f32
    %125 = vector.broadcast %cst_45 : f32 to vector<4x16x1xf32>
    %126 = arith.divf %124, %125 : vector<4x16x1xf32>
    %127 = vector.broadcast %126 : vector<4x16x1xf32> to vector<4x16x16xf32>
    %128 = arith.subf %85, %127 : vector<4x16x16xf32>
    %129 = arith.mulf %128, %128 : vector<4x16x16xf32>
    %cst_46 = arith.constant dense<0.000000e+00> : vector<4x16xf32>
    %130 = vector.multi_reduction <add>, %129, %cst_46 [2] : vector<4x16x16xf32> to vector<4x16xf32>
    %131 = vector.shape_cast %130 : vector<4x16xf32> to vector<4x16x1xf32>
    %cst_47 = arith.constant 1.600000e+01 : f32
    %132 = vector.broadcast %cst_47 : f32 to vector<4x16x1xf32>
    %133 = arith.divf %131, %132 : vector<4x16x1xf32>
    %134 = vector.broadcast %126 : vector<4x16x1xf32> to vector<4x16x16xf32>
    %135 = arith.subf %85, %134 : vector<4x16x16xf32>
    %cst_48 = arith.constant 9.99999974E-6 : f32
    %136 = vector.broadcast %cst_48 : f32 to vector<4x16x1xf32>
    %137 = arith.addf %133, %136 : vector<4x16x1xf32>
    %138 = math.rsqrt %137 : vector<4x16x1xf32>
    %139 = vector.broadcast %138 : vector<4x16x1xf32> to vector<4x16x16xf32>
    %140 = arith.mulf %135, %139 : vector<4x16x16xf32>
    %141 = vector.shape_cast %121 : vector<1x16xf32> to vector<1x1x16xf32>
    %142 = vector.broadcast %141 : vector<1x1x16xf32> to vector<4x16x16xf32>
    %143 = arith.mulf %140, %142 : vector<4x16x16xf32>
    %144 = vector.shape_cast %122 : vector<1x16xf32> to vector<1x1x16xf32>
    %145 = vector.broadcast %144 : vector<1x1x16xf32> to vector<4x16x16xf32>
    %146 = arith.addf %143, %145 : vector<4x16x16xf32>
    %147 = arith.truncf %120 : vector<4x8x16xf32> to vector<4x8x16xbf16>
    %148 = arith.truncf %146 : vector<4x16x16xf32> to vector<4x16x16xbf16>
    %cst_49 = arith.constant dense<0.000000e+00> : vector<4x8x16xf32>
    %149 = tpu.matmul %147, %148, %cst_49 {dimension_numbers = #tpu.dot_dimension_numbers<[2], [2], [1], [1], [0, 0, 0, 1, 1, 1], [0], [0]>} : vector<4x8x16xbf16>, vector<4x16x16xbf16>, vector<4x8x16xf32> -> vector<4x8x16xf32>
    %cst_50 = arith.constant dense<0xFF800000> : vector<4x8xf32>
    %150 = vector.multi_reduction <maximumf>, %149, %cst_50 [2] : vector<4x8x16xf32> to vector<4x8xf32>
    %151 = vector.shape_cast %150 : vector<4x8xf32> to vector<4x8x1xf32>
    %152 = vector.broadcast %151 : vector<4x8x1xf32> to vector<4x8x16xf32>
    %153 = arith.subf %149, %152 : vector<4x8x16xf32>
    %154 = math.exp %153 : vector<4x8x16xf32>
    %cst_51 = arith.constant dense<0.000000e+00> : vector<4x8xf32>
    %155 = vector.multi_reduction <add>, %154, %cst_51 [2] : vector<4x8x16xf32> to vector<4x8xf32>
    %156 = vector.shape_cast %155 : vector<4x8xf32> to vector<4x8x1xf32>
    %157 = tpu.reciprocal %156 {approx = true} : vector<4x8x1xf32> -> vector<4x8x1xf32>
    %158 = vector.broadcast %157 : vector<4x8x1xf32> to vector<4x8x16xf32>
    %159 = arith.mulf %154, %158 : vector<4x8x16xf32>
    %160 = arith.truncf %159 : vector<4x8x16xf32> to vector<4x8x16xbf16>
    %161 = arith.truncf %94 : vector<4x16x16xf32> to vector<4x16x16xbf16>
    %cst_52 = arith.constant dense<0.000000e+00> : vector<4x8x16xf32>
    %162 = tpu.matmul %160, %161, %cst_52 {dimension_numbers = #tpu.dot_dimension_numbers<[2], [1], [1], [2], [0, 0, 0, 1, 1, 2], [0], [0]>} : vector<4x8x16xbf16>, vector<4x16x16xbf16>, vector<4x8x16xf32> -> vector<4x8x16xf32>
    %c0_53 = arith.constant 0 : index
    %c0_54 = arith.constant 0 : index
    %c0_55 = arith.constant 0 : index
    %163 = vector.load %arg10[%c0_53, %c0_54, %c0_55] : memref<4x16x64xf32, #tpu.memory_space<vmem>>, vector<4x16x64xf32>
    %164 = arith.truncf %162 : vector<4x8x16xf32> to vector<4x8x16xbf16>
    %165 = arith.truncf %163 : vector<4x16x64xf32> to vector<4x16x64xbf16>
    %cst_56 = arith.constant dense<0.000000e+00> : vector<4x8x64xf32>
    %166 = tpu.matmul %164, %165, %cst_56 {dimension_numbers = #tpu.dot_dimension_numbers<[2], [1], [1], [2], [0, 0, 0, 1, 1, 2], [0], [0]>} : vector<4x8x16xbf16>, vector<4x16x64xbf16>, vector<4x8x64xf32> -> vector<4x8x64xf32>
    %167 = vector.extract_strided_slice %166 {offsets = [0, 0, 0], sizes = [1, 8, 64], strides = [1, 1, 1]} : vector<4x8x64xf32> to vector<1x8x64xf32>
    %168 = vector.shape_cast %167 : vector<1x8x64xf32> to vector<8x64xf32>
    %169 = vector.extract_strided_slice %166 {offsets = [1, 0, 0], sizes = [1, 8, 64], strides = [1, 1, 1]} : vector<4x8x64xf32> to vector<1x8x64xf32>
    %170 = vector.shape_cast %169 : vector<1x8x64xf32> to vector<8x64xf32>
    %171 = arith.addf %168, %170 : vector<8x64xf32>
    %172 = vector.extract_strided_slice %166 {offsets = [2, 0, 0], sizes = [1, 8, 64], strides = [1, 1, 1]} : vector<4x8x64xf32> to vector<1x8x64xf32>
    %173 = vector.shape_cast %172 : vector<1x8x64xf32> to vector<8x64xf32>
    %174 = arith.addf %171, %173 : vector<8x64xf32>
    %175 = vector.extract_strided_slice %166 {offsets = [3, 0, 0], sizes = [1, 8, 64], strides = [1, 1, 1]} : vector<4x8x64xf32> to vector<1x8x64xf32>
    %176 = vector.shape_cast %175 : vector<1x8x64xf32> to vector<8x64xf32>
    %177 = arith.addf %174, %176 : vector<8x64xf32>
    %178 = arith.addf %177, %3 : vector<8x64xf32>
    %c0_57 = arith.constant 0 : index
    %c0_58 = arith.constant 0 : index
    %179 = vector.load %arg15[%c0_57, %c0_58] : memref<1x64xf32, #tpu.memory_space<vmem>>, vector<1x64xf32>
    %c0_59 = arith.constant 0 : index
    %c0_60 = arith.constant 0 : index
    %180 = vector.load %arg16[%c0_59, %c0_60] : memref<1x64xf32, #tpu.memory_space<vmem>>, vector<1x64xf32>
    %cst_61 = arith.constant dense<0.000000e+00> : vector<8xf32>
    %181 = vector.multi_reduction <add>, %178, %cst_61 [1] : vector<8x64xf32> to vector<8xf32>
    %182 = vector.shape_cast %181 : vector<8xf32> to vector<8x1xf32>
    %cst_62 = arith.constant 6.400000e+01 : f32
    %183 = vector.broadcast %cst_62 : f32 to vector<8x1xf32>
    %184 = arith.divf %182, %183 : vector<8x1xf32>
    %185 = vector.broadcast %184 : vector<8x1xf32> to vector<8x64xf32>
    %186 = arith.subf %178, %185 : vector<8x64xf32>
    %187 = arith.mulf %186, %186 : vector<8x64xf32>
    %cst_63 = arith.constant dense<0.000000e+00> : vector<8xf32>
    %188 = vector.multi_reduction <add>, %187, %cst_63 [1] : vector<8x64xf32> to vector<8xf32>
    %189 = vector.shape_cast %188 : vector<8xf32> to vector<8x1xf32>
    %cst_64 = arith.constant 6.400000e+01 : f32
    %190 = vector.broadcast %cst_64 : f32 to vector<8x1xf32>
    %191 = arith.divf %189, %190 : vector<8x1xf32>
    %192 = vector.broadcast %184 : vector<8x1xf32> to vector<8x64xf32>
    %193 = arith.subf %178, %192 : vector<8x64xf32>
    %cst_65 = arith.constant 9.99999974E-6 : f32
    %194 = vector.broadcast %cst_65 : f32 to vector<8x1xf32>
    %195 = arith.addf %191, %194 : vector<8x1xf32>
    %196 = math.rsqrt %195 : vector<8x1xf32>
    %197 = vector.broadcast %196 : vector<8x1xf32> to vector<8x64xf32>
    %198 = arith.mulf %193, %197 : vector<8x64xf32>
    %199 = vector.broadcast %179 : vector<1x64xf32> to vector<8x64xf32>
    %200 = arith.mulf %198, %199 : vector<8x64xf32>
    %201 = vector.broadcast %180 : vector<1x64xf32> to vector<8x64xf32>
    %202 = arith.addf %200, %201 : vector<8x64xf32>
    %c0_66 = arith.constant 0 : index
    %c0_67 = arith.constant 0 : index
    %203 = vector.load %arg17[%c0_66, %c0_67] : memref<64x256xf32, #tpu.memory_space<vmem>>, vector<64x256xf32>
    %204 = arith.truncf %202 : vector<8x64xf32> to vector<8x64xbf16>
    %205 = arith.truncf %203 : vector<64x256xf32> to vector<64x256xbf16>
    %cst_68 = arith.constant dense<0.000000e+00> : vector<8x256xf32>
    %206 = tpu.matmul %204, %205, %cst_68 {dimension_numbers = #tpu.dot_dimension_numbers<[1], [0], [0], [1], [0, 0, 1, 1], [], []>} : vector<8x64xbf16>, vector<64x256xbf16>, vector<8x256xf32> -> vector<8x256xf32>
    %cst_69 = arith.constant 5.000000e-01 : f32
    %207 = vector.broadcast %cst_69 : f32 to vector<8x256xf32>
    %208 = arith.mulf %207, %206 : vector<8x256xf32>
    %cst_70 = arith.constant 0.707106769 : f32
    %209 = vector.broadcast %cst_70 : f32 to vector<8x256xf32>
    %210 = arith.mulf %206, %209 : vector<8x256xf32>
    %211 = math.absf %210 : vector<8x256xf32>
    %cst_71 = arith.constant 0.327591091 : f32
    %212 = vector.broadcast %cst_71 : f32 to vector<8x256xf32>
    %213 = arith.mulf %212, %211 : vector<8x256xf32>
    %cst_72 = arith.constant 1.000000e+00 : f32
    %214 = vector.broadcast %cst_72 : f32 to vector<8x256xf32>
    %215 = arith.addf %214, %213 : vector<8x256xf32>
    %cst_73 = arith.constant 1.000000e+00 : f32
    %216 = vector.broadcast %cst_73 : f32 to vector<8x256xf32>
    %217 = arith.divf %216, %215 : vector<8x256xf32>
    %cst_74 = arith.constant 1.06140542 : f32
    %218 = vector.broadcast %cst_74 : f32 to vector<8x256xf32>
    %219 = arith.mulf %218, %217 : vector<8x256xf32>
    %cst_75 = arith.constant -1.45315206 : f32
    %220 = vector.broadcast %cst_75 : f32 to vector<8x256xf32>
    %221 = arith.addf %219, %220 : vector<8x256xf32>
    %222 = arith.mulf %221, %217 : vector<8x256xf32>
    %cst_76 = arith.constant 1.42141378 : f32
    %223 = vector.broadcast %cst_76 : f32 to vector<8x256xf32>
    %224 = arith.addf %222, %223 : vector<8x256xf32>
    %225 = arith.mulf %224, %217 : vector<8x256xf32>
    %cst_77 = arith.constant -0.284496725 : f32
    %226 = vector.broadcast %cst_77 : f32 to vector<8x256xf32>
    %227 = arith.addf %225, %226 : vector<8x256xf32>
    %228 = arith.mulf %227, %217 : vector<8x256xf32>
    %cst_78 = arith.constant 0.254829586 : f32
    %229 = vector.broadcast %cst_78 : f32 to vector<8x256xf32>
    %230 = arith.addf %228, %229 : vector<8x256xf32>
    %231 = arith.mulf %230, %217 : vector<8x256xf32>
    %cst_79 = arith.constant 0.000000e+00 : f32
    %232 = vector.broadcast %cst_79 : f32 to vector<8x256xf32>
    %233 = arith.subf %232, %211 : vector<8x256xf32>
    %234 = arith.mulf %233, %211 : vector<8x256xf32>
    %235 = math.exp %234 : vector<8x256xf32>
    %236 = arith.mulf %231, %235 : vector<8x256xf32>
    %cst_80 = arith.constant 1.000000e+00 : f32
    %237 = vector.broadcast %cst_80 : f32 to vector<8x256xf32>
    %238 = arith.subf %237, %236 : vector<8x256xf32>
    %cst_81 = arith.constant 0.000000e+00 : f32
    %239 = vector.broadcast %cst_81 : f32 to vector<8x256xf32>
    %240 = arith.cmpf oge, %210, %239 : vector<8x256xf32>
    %cst_82 = arith.constant 0.000000e+00 : f32
    %241 = vector.broadcast %cst_82 : f32 to vector<8x256xf32>
    %242 = arith.subf %241, %238 : vector<8x256xf32>
    %243 = arith.select %240, %238, %242 : vector<8x256xi1>, vector<8x256xf32>
    %cst_83 = arith.constant 1.000000e+00 : f32
    %244 = vector.broadcast %cst_83 : f32 to vector<8x256xf32>
    %245 = arith.addf %244, %243 : vector<8x256xf32>
    %246 = arith.mulf %208, %245 : vector<8x256xf32>
    %c0_84 = arith.constant 0 : index
    %c0_85 = arith.constant 0 : index
    %247 = vector.load %arg18[%c0_84, %c0_85] : memref<256x64xf32, #tpu.memory_space<vmem>>, vector<256x64xf32>
    %248 = arith.truncf %246 : vector<8x256xf32> to vector<8x256xbf16>
    %249 = arith.truncf %247 : vector<256x64xf32> to vector<256x64xbf16>
    %cst_86 = arith.constant dense<0.000000e+00> : vector<8x64xf32>
    %250 = tpu.matmul %248, %249, %cst_86 {dimension_numbers = #tpu.dot_dimension_numbers<[1], [0], [0], [1], [0, 0, 1, 1], [], []>} : vector<8x256xbf16>, vector<256x64xbf16>, vector<8x64xf32> -> vector<8x64xf32>
    %251 = arith.addf %250, %178 : vector<8x64xf32>
    %c0_87 = arith.constant 0 : index
    %c0_88 = arith.constant 0 : index
    %252 = vector.load %arg19[%c0_87, %c0_88] : memref<1x64xf32, #tpu.memory_space<vmem>>, vector<1x64xf32>
    %c0_89 = arith.constant 0 : index
    %c0_90 = arith.constant 0 : index
    %253 = vector.load %arg20[%c0_89, %c0_90] : memref<1x64xf32, #tpu.memory_space<vmem>>, vector<1x64xf32>
    %cst_91 = arith.constant dense<0.000000e+00> : vector<8xf32>
    %254 = vector.multi_reduction <add>, %251, %cst_91 [1] : vector<8x64xf32> to vector<8xf32>
    %255 = vector.shape_cast %254 : vector<8xf32> to vector<8x1xf32>
    %cst_92 = arith.constant 6.400000e+01 : f32
    %256 = vector.broadcast %cst_92 : f32 to vector<8x1xf32>
    %257 = arith.divf %255, %256 : vector<8x1xf32>
    %258 = vector.broadcast %257 : vector<8x1xf32> to vector<8x64xf32>
    %259 = arith.subf %251, %258 : vector<8x64xf32>
    %260 = arith.mulf %259, %259 : vector<8x64xf32>
    %cst_93 = arith.constant dense<0.000000e+00> : vector<8xf32>
    %261 = vector.multi_reduction <add>, %260, %cst_93 [1] : vector<8x64xf32> to vector<8xf32>
    %262 = vector.shape_cast %261 : vector<8xf32> to vector<8x1xf32>
    %cst_94 = arith.constant 6.400000e+01 : f32
    %263 = vector.broadcast %cst_94 : f32 to vector<8x1xf32>
    %264 = arith.divf %262, %263 : vector<8x1xf32>
    %265 = vector.broadcast %257 : vector<8x1xf32> to vector<8x64xf32>
    %266 = arith.subf %251, %265 : vector<8x64xf32>
    %cst_95 = arith.constant 9.99999974E-6 : f32
    %267 = vector.broadcast %cst_95 : f32 to vector<8x1xf32>
    %268 = arith.addf %264, %267 : vector<8x1xf32>
    %269 = math.rsqrt %268 : vector<8x1xf32>
    %270 = vector.broadcast %269 : vector<8x1xf32> to vector<8x64xf32>
    %271 = arith.mulf %266, %270 : vector<8x64xf32>
    %272 = vector.broadcast %252 : vector<1x64xf32> to vector<8x64xf32>
    %273 = arith.mulf %271, %272 : vector<8x64xf32>
    %274 = vector.broadcast %253 : vector<1x64xf32> to vector<8x64xf32>
    %275 = arith.addf %273, %274 : vector<8x64xf32>
    %276 = vector.shape_cast %275 : vector<8x64xf32> to vector<1x8x64xf32>
    %c0_96 = arith.constant 0 : index
    %c0_97 = arith.constant 0 : index
    %c0_98 = arith.constant 0 : index
    %277 = vector.load %arg21[%c0_96, %c0_97, %c0_98] : memref<1x8x64xf32, #tpu.memory_space<vmem>>, vector<1x8x64xf32>
    tpu.vector_store %arg21[%c0_96, %c0_97, %c0_98], %276 {strides = array<i32>} : memref<1x8x64xf32, #tpu.memory_space<vmem>>, vector<1x8x64xf32>,
    return
  }
  func.func @transform_0(%arg0: i32) -> (i32, i32, i32) {
    %c0_i32 = arith.constant 0 : i32
    %c0_i32_0 = arith.constant 0 : i32
    %c0_i32_1 = arith.constant 0 : i32
    return %arg0, %c0_i32, %c0_i32_0 : i32, i32, i32
  }
  func.func @transform_1(%arg0: i32) -> (i32, i32, i32) {
    %c0_i32 = arith.constant 0 : i32
    %c0_i32_0 = arith.constant 0 : i32
    %c0_i32_1 = arith.constant 0 : i32
    return %arg0, %c0_i32, %c0_i32_0 : i32, i32, i32
  }
  func.func @transform_2(%arg0: i32) -> (i32, i32) {
    %c0_i32 = arith.constant 0 : i32
    %c0_i32_0 = arith.constant 0 : i32
    %c0_i32_1 = arith.constant 0 : i32
    return %c0_i32, %c0_i32_0 : i32, i32
  }
  func.func @transform_3(%arg0: i32) -> (i32, i32) {
    %c0_i32 = arith.constant 0 : i32
    %c0_i32_0 = arith.constant 0 : i32
    %c0_i32_1 = arith.constant 0 : i32
    return %c0_i32, %c0_i32_0 : i32, i32
  }
  func.func @transform_4(%arg0: i32) -> (i32, i32) {
    %c0_i32 = arith.constant 0 : i32
    %c0_i32_0 = arith.constant 0 : i32
    %c0_i32_1 = arith.constant 0 : i32
    return %c0_i32, %c0_i32_0 : i32, i32
  }
  func.func @transform_5(%arg0: i32) -> (i32, i32) {
    %c0_i32 = arith.constant 0 : i32
    %c0_i32_0 = arith.constant 0 : i32
    %c0_i32_1 = arith.constant 0 : i32
    return %c0_i32, %c0_i32_0 : i32, i32
  }
  func.func @transform_6(%arg0: i32) -> (i32, i32) {
    %c0_i32 = arith.constant 0 : i32
    %c0_i32_0 = arith.constant 0 : i32
    %c0_i32_1 = arith.constant 0 : i32
    return %c0_i32, %c0_i32_0 : i32, i32
  }
  func.func @transform_7(%arg0: i32) -> (i32, i32) {
    %c0_i32 = arith.constant 0 : i32
    %c0_i32_0 = arith.constant 0 : i32
    %c0_i32_1 = arith.constant 0 : i32
    return %c0_i32, %c0_i32_0 : i32, i32
  }
  func.func @transform_8(%arg0: i32) -> (i32, i32) {
    %c0_i32 = arith.constant 0 : i32
    %c0_i32_0 = arith.constant 0 : i32
    %c0_i32_1 = arith.constant 0 : i32
    return %c0_i32, %c0_i32_0 : i32, i32
  }
  func.func @transform_9(%arg0: i32) -> (i32, i32, i32) {
    %c0_i32 = arith.constant 0 : i32
    %c0_i32_0 = arith.constant 0 : i32
    %c0_i32_1 = arith.constant 0 : i32
    %c0_i32_2 = arith.constant 0 : i32
    return %c0_i32, %c0_i32_0, %c0_i32_1 : i32, i32, i32
  }
  func.func @transform_10(%arg0: i32) -> (i32, i32) {
    %c0_i32 = arith.constant 0 : i32
    %c0_i32_0 = arith.constant 0 : i32
    %c0_i32_1 = arith.constant 0 : i32
    return %c0_i32, %c0_i32_0 : i32, i32
  }
  func.func @transform_11(%arg0: i32) -> (i32, i32) {
    %c0_i32 = arith.constant 0 : i32
    %c0_i32_0 = arith.constant 0 : i32
    %c0_i32_1 = arith.constant 0 : i32
    return %c0_i32, %c0_i32_0 : i32, i32
  }
  func.func @transform_12(%arg0: i32) -> (i32, i32) {
    %c0_i32 = arith.constant 0 : i32
    %c0_i32_0 = arith.constant 0 : i32
    %c0_i32_1 = arith.constant 0 : i32
    return %c0_i32, %c0_i32_0 : i32, i32
  }
  func.func @transform_13(%arg0: i32) -> (i32, i32) {
    %c0_i32 = arith.constant 0 : i32
    %c0_i32_0 = arith.constant 0 : i32
    %c0_i32_1 = arith.constant 0 : i32
    return %c0_i32, %c0_i32_0 : i32, i32
  }
  func.func @transform_14(%arg0: i32) -> (i32, i32) {
    %c0_i32 = arith.constant 0 : i32
    %c0_i32_0 = arith.constant 0 : i32
    %c0_i32_1 = arith.constant 0 : i32
    return %c0_i32, %c0_i32_0 : i32, i32
  }
  func.func @transform_15(%arg0: i32) -> (i32, i32) {
    %c0_i32 = arith.constant 0 : i32
    %c0_i32_0 = arith.constant 0 : i32
    %c0_i32_1 = arith.constant 0 : i32
    return %c0_i32, %c0_i32_0 : i32, i32
  }
  func.func @transform_16(%arg0: i32) -> (i32, i32) {
    %c0_i32 = arith.constant 0 : i32
    %c0_i32_0 = arith.constant 0 : i32
    %c0_i32_1 = arith.constant 0 : i32
    return %c0_i32, %c0_i32_0 : i32, i32
  }
  func.func @transform_17(%arg0: i32) -> (i32, i32) {
    %c0_i32 = arith.constant 0 : i32
    %c0_i32_0 = arith.constant 0 : i32
    %c0_i32_1 = arith.constant 0 : i32
    return %c0_i32, %c0_i32_0 : i32, i32
  }
  func.func @transform_18(%arg0: i32) -> (i32, i32) {
    %c0_i32 = arith.constant 0 : i32
    %c0_i32_0 = arith.constant 0 : i32
    %c0_i32_1 = arith.constant 0 : i32
    return %c0_i32, %c0_i32_0 : i32, i32
  }
  func.func @transform_19(%arg0: i32) -> (i32, i32) {
    %c0_i32 = arith.constant 0 : i32
    %c0_i32_0 = arith.constant 0 : i32
    %c0_i32_1 = arith.constant 0 : i32
    return %c0_i32, %c0_i32_0 : i32, i32
  }
  func.func @transform_20(%arg0: i32) -> (i32, i32, i32) {
    %c0_i32 = arith.constant 0 : i32
    %c0_i32_0 = arith.constant 0 : i32
    %c0_i32_1 = arith.constant 0 : i32
    return %arg0, %c0_i32, %c0_i32_0 : i32, i32, i32
  }
}

</mosaic_0001>

<llo_original>
// kernel: resampler_plus_qk_forward.5
$region0: #{resampler_plus_qk_forward.5}
  #allocation0 [shape = 'u32[]', space=smem, size = 0x4, offset = 0x4, fixed_abs, tag = 'smem constant byte address 0x4 - core index']
  #allocation1 [shape = 'u32[72,128]{1,0:T(1,128)}', space=vmem, size = 0x9000, scoped, tag = 'internal scratch']
  %s0 = inlined_call_operand.vmem [shape: f32[32,32], index: 0, kind: input, shape index: {}]
  %s1 = inlined_call_operand.hbm [shape: f32[32,64], index: 1, kind: input, shape index: {}]
  %s2 = inlined_call_operand.vmem [shape: f32[1,64], index: 2, kind: input, shape index: {}]
  %s3 = inlined_call_operand.vmem [shape: f32[32,64], index: 3, kind: output, shape index: {}]
  %s4 = sld [smem:[#allocation0]]
  $region26: #{resampler_plus_qk_forward.5} parent=0
    _
  %s6 = ssub.s32 1, %s4
  %s7 = scalar_select 0, %s6, %s4
  $region1: #{resampler_plus_qk_forward.5} parent=0
    #allocation2 [shape = 'u8[16384]{0}', space=vmem, size = 0x4000, scoped, tag = 'input window, operand 1, single buffered']
    #allocation3 [shape = 's32[1]{0}', space=sflag, size = 0x4, scoped, tag = 'scoped memory for resampler_plus_qk_forward.5']
    %8 = vsyncpa [#allocation3], 0
    // Predicated region
    $region2: #{resampler_plus_qk_forward.5} parent=1 // pred_check
      _
    $region3: #{resampler_plus_qk_forward.5} parent=1 // pred_check_branch
      %10 = sbr.rel (0) target = $region5
    $region4: #{resampler_plus_qk_forward.5} parent=1 // pred_region
      _
    $region5: #{resampler_plus_qk_forward.5} parent=1 // pred_fallthru
      _
    // Predicated region
    $region6: #{resampler_plus_qk_forward.5} parent=1 // pred_check
      _
    $region7: #{resampler_plus_qk_forward.5} parent=1 // pred_check_branch
      %12 = sbr.rel (0) target = $region9
    $region8: #{resampler_plus_qk_forward.5} parent=1 // pred_region
      %14 = vsyncadd [#allocation3], 0
      %s15 = sshll.u32 %s1, 4
      %s16 = int_to_ptr.hbm [resolvable:$true] %s15
      %s17 = sshll.u32 [#allocation2], 4
      %s18 = int_to_ptr.vmem [resolvable:$true] %s17
      %23 = dma.hbm_to_vmem [thread:$0]  %s16, 512, %s18, [#allocation3], 128, 128, 8
    $region9: #{resampler_plus_qk_forward.5} parent=1 // pred_fallthru
      _
    // Predicated region
    $region10: #{resampler_plus_qk_forward.5} parent=1 // pred_check
      _
    $region11: #{resampler_plus_qk_forward.5} parent=1 // pred_check_branch
      %25 = sbr.rel (0) target = $region13
    $region12: #{resampler_plus_qk_forward.5} parent=1 // pred_region
      _
    $region13: #{resampler_plus_qk_forward.5} parent=1 // pred_fallthru
      _
    // Predicated region
    $region14: #{resampler_plus_qk_forward.5} parent=1 // pred_check
      _
    $region15: #{resampler_plus_qk_forward.5} parent=1 // pred_check_branch
      %27 = sbr.rel (0) target = $region17
    $region16: #{resampler_plus_qk_forward.5} parent=1 // pred_region
      %29 = dma.done [#allocation3], 512
    $region17: #{resampler_plus_qk_forward.5} parent=1 // pred_fallthru
      _
    %v31 = vld [vmem:[%s0] sm:$0xff]
    %v32 = vld [vmem:[%s0 + $0x8] sm:$0xff]
    %v33 = vld [vmem:[%s0 + $0x10] sm:$0xff]
    %v34 = vld [vmem:[%s0 + $0x18] sm:$0xff]
    %v35 = vld [vmem:[#allocation2] sm:$0xff]
    %v36 = vld [vmem:[#allocation2 + $0x8] sm:$0xff]
    %v37 = vld [vmem:[#allocation2 + $0x10] sm:$0xff]
    %v38 = vld [vmem:[#allocation2 + $0x18] sm:$0xff]
    %v39 = vpack.c.bf16 %v32, %v31
    %v40 = vpack.c.bf16 %v34, %v33
    %v41 = vpack.c.bf16 %v36, %v35
    %v42 = vpack.c.bf16 %v38, %v37
    %v43 = vld [vmem:[%s2] sm:$0x1]
    %v45 = vperm.slane %v43, 0
    %vm47 = vcmask 261120
    %v49 = vsel %vm47, %v39, 0
    %v52 = vsel %vm47, %v40, 0
    %54 = vmatpush.bf16.msra.mxu0 0
    %55 = vmatpush.bf16.msra.mxu0 0
    %56 = vmatpush.bf16.msra.mxu0 0
    %57 = vmatpush.bf16.msra.mxu0 0
    %58 = vmatpush.bf16.msra.mxu0 0
    %59 = vmatpush.bf16.msra.mxu0 0
    %60 = vmatpush.bf16.msra.mxu0 %v42
    %61 = vmatpush.bf16.msra.mxu0 %v41
    %62 = vmatmul.bf16.gmra.mxu0 %v49
    %v63 = vpop.f32.mrf.mxu0
    %v64 = vadd.f32 %v45, %v63
    %v65 = vpop.f32.mrf.mxu0
    %v66 = vadd.f32 %v45, %v65
    %67 = vmatmul.bf16.gmra.mxu0 %v52
    %v68 = vpop.f32.mrf.mxu0
    %v69 = vadd.f32 %v45, %v68
    %v70 = vpop.f32.mrf.mxu0
    %v71 = vadd.f32 %v45, %v70
    %72 = vdwg.mxu0
    %vm73 = vcmask 523264
    %74 = vst.msk [vmem:[%s3] sm:$0xff] %vm73, %v64
    %75 = vst.msk [vmem:[%s3 + $0x8] sm:$0xff] %vm73, %v66
    %76 = vst.msk [vmem:[%s3 + $0x10] sm:$0xff] %vm73, %v69
    %77 = vst.msk [vmem:[%s3 + $0x18] sm:$0xff] %vm73, %v71
    // Predicated region
    $region18: #{resampler_plus_qk_forward.5} parent=1 // pred_check
      _
    $region19: #{resampler_plus_qk_forward.5} parent=1 // pred_check_branch
      %79 = sbr.rel (0) target = $region21
    $region20: #{resampler_plus_qk_forward.5} parent=1 // pred_region
      _
    $region21: #{resampler_plus_qk_forward.5} parent=1 // pred_fallthru
      _
    // Predicated region
    $region22: #{resampler_plus_qk_forward.5} parent=1 // pred_check
      _
    $region23: #{resampler_plus_qk_forward.5} parent=1 // pred_check_branch
      %81 = sbr.rel (0) target = $region25
    $region24: #{resampler_plus_qk_forward.5} parent=1 // pred_region
      _
    $region25: #{resampler_plus_qk_forward.5} parent=1 // pred_fallthru
      _
    %82 = vsyncpa [#allocation3], 1

// kernel: resampler_plus_qk_forward.8
$region0: #{resampler_plus_qk_forward.8}
  #allocation0 [shape = 'u32[]', space=smem, size = 0x4, offset = 0x4, fixed_abs, tag = 'smem constant byte address 0x4 - core index']
  #allocation1 [shape = 'u32[72,128]{1,0:T(1,128)}', space=vmem, size = 0x9000, scoped, tag = 'internal scratch']
  %s0 = inlined_call_operand.vmem [shape: f32[16,64], index: 0, kind: input, shape index: {}]
  %s1 = inlined_call_operand.vmem [shape: f32[64,64], index: 1, kind: input, shape index: {}]
  %s2 = inlined_call_operand.vmem [shape: f32[1,64], index: 2, kind: input, shape index: {}]
  %s3 = inlined_call_operand.vmem [shape: f32[16,64], index: 3, kind: output, shape index: {}]
  %s4 = sld [smem:[#allocation0]]
  $region22: #{resampler_plus_qk_forward.8} parent=0
    _
  %s6 = ssub.s32 1, %s4
  %s7 = scalar_select 0, %s6, %s4
  // Predicated region
  $region2: #{resampler_plus_qk_forward.8} parent=0 // pred_check
    _
  $region3: #{resampler_plus_qk_forward.8} parent=0 // pred_check_branch
    %9 = sbr.rel (0) target = $region5
  $region4: #{resampler_plus_qk_forward.8} parent=0 // pred_region
    _
  $region5: #{resampler_plus_qk_forward.8} parent=0 // pred_fallthru
    _
  // Predicated region
  $region6: #{resampler_plus_qk_forward.8} parent=0 // pred_check
    _
  $region7: #{resampler_plus_qk_forward.8} parent=0 // pred_check_branch
    %11 = sbr.rel (0) target = $region9
  $region8: #{resampler_plus_qk_forward.8} parent=0 // pred_region
    _
  $region9: #{resampler_plus_qk_forward.8} parent=0 // pred_fallthru
    _
  // Predicated region
  $region10: #{resampler_plus_qk_forward.8} parent=0 // pred_check
    _
  $region11: #{resampler_plus_qk_forward.8} parent=0 // pred_check_branch
    %13 = sbr.rel (0) target = $region13
  $region12: #{resampler_plus_qk_forward.8} parent=0 // pred_region
    _
  $region13: #{resampler_plus_qk_forward.8} parent=0 // pred_fallthru
    _
  %v15 = vld [vmem:[%s0] sm:$0xff]
  %v16 = vld [vmem:[%s0 + $0x8] sm:$0xff]
  %v17 = vld [vmem:[%s1] sm:$0xff]
  %v18 = vld [vmem:[%s1 + $0x8] sm:$0xff]
  %v19 = vld [vmem:[%s1 + $0x10] sm:$0xff]
  %v20 = vld [vmem:[%s1 + $0x18] sm:$0xff]
  %v21 = vld [vmem:[%s1 + $0x20] sm:$0xff]
  %v22 = vld [vmem:[%s1 + $0x28] sm:$0xff]
  %v23 = vld [vmem:[%s1 + $0x30] sm:$0xff]
  %v24 = vld [vmem:[%s1 + $0x38] sm:$0xff]
  %v25 = vpack.c.bf16 %v16, %v15
  %v26 = vpack.c.bf16 %v18, %v17
  %v27 = vpack.c.bf16 %v20, %v19
  %v28 = vpack.c.bf16 %v22, %v21
  %v29 = vpack.c.bf16 %v24, %v23
  %v30 = vld [vmem:[%s2] sm:$0x1]
  %v32 = vperm.slane %v30, 0
  %vm34 = vcmask 523264
  %v36 = vsel %vm34, %v25, 0
  %38 = vmatpush.bf16.msra.mxu0 0
  %39 = vmatpush.bf16.msra.mxu0 0
  %40 = vmatpush.bf16.msra.mxu0 0
  %41 = vmatpush.bf16.msra.mxu0 0
  %42 = vmatpush.bf16.msra.mxu0 %v29
  %43 = vmatpush.bf16.msra.mxu0 %v28
  %44 = vmatpush.bf16.msra.mxu0 %v27
  %45 = vmatpush.bf16.msra.mxu0 %v26
  %46 = vmatmul.bf16.gmra.mxu0 %v36
  %v47 = vpop.f32.mrf.mxu0
  %v48 = vadd.f32 %v32, %v47
  %v49 = vpop.f32.mrf.mxu0
  %v50 = vadd.f32 %v32, %v49
  %51 = vdwg.mxu0
  %52 = vst.msk [vmem:[%s3] sm:$0xff] %vm34, %v48
  %53 = vst.msk [vmem:[%s3 + $0x8] sm:$0xff] %vm34, %v50
  // Predicated region
  $region14: #{resampler_plus_qk_forward.8} parent=0 // pred_check
    _
  $region15: #{resampler_plus_qk_forward.8} parent=0 // pred_check_branch
    %55 = sbr.rel (0) target = $region17
  $region16: #{resampler_plus_qk_forward.8} parent=0 // pred_region
    _
  $region17: #{resampler_plus_qk_forward.8} parent=0 // pred_fallthru
    _
  // Predicated region
  $region18: #{resampler_plus_qk_forward.8} parent=0 // pred_check
    _
  $region19: #{resampler_plus_qk_forward.8} parent=0 // pred_check_branch
    %57 = sbr.rel (0) target = $region21
  $region20: #{resampler_plus_qk_forward.8} parent=0 // pred_region
    _
  $region21: #{resampler_plus_qk_forward.8} parent=0 // pred_fallthru
    _

// kernel: resampler_plus_qk_forward.6
$region0: #{resampler_plus_qk_forward.6}
  #allocation0 [shape = 'u32[]', space=smem, size = 0x4, offset = 0x4, fixed_abs, tag = 'smem constant byte address 0x4 - core index']
  #allocation1 [shape = 'u32[72,128]{1,0:T(1,128)}', space=vmem, size = 0x9000, scoped, tag = 'internal scratch']
  %s0 = inlined_call_operand.vmem [shape: f32[2,16,64], index: 0, kind: input, shape index: {}]
  %s1 = inlined_call_operand.vmem [shape: f32[2,8,64], index: 1, kind: input, shape index: {}]
  %s2 = inlined_call_operand.vmem [shape: f32[1,64], index: 2, kind: input, shape index: {}]
  %s3 = inlined_call_operand.vmem [shape: f32[1,64], index: 3, kind: input, shape index: {}]
  %s4 = inlined_call_operand.vmem [shape: f32[1,64], index: 4, kind: input, shape index: {}]
  %s5 = inlined_call_operand.vmem [shape: f32[1,64], index: 5, kind: input, shape index: {}]
  %s6 = inlined_call_operand.vmem [shape: f32[64,64], index: 6, kind: input, shape index: {}]
  %s7 = inlined_call_operand.vmem [shape: f32[64,64], index: 7, kind: input, shape index: {}]
  %s8 = inlined_call_operand.vmem [shape: f32[64,64], index: 8, kind: input, shape index: {}]
  %s9 = inlined_call_operand.vmem [shape: f32[4,16,64], index: 9, kind: input, shape index: {}]
  %s10 = inlined_call_operand.vmem [shape: f32[1,16], index: 10, kind: input, shape index: {}]
  %s11 = inlined_call_operand.vmem [shape: f32[1,16], index: 11, kind: input, shape index: {}]
  %s12 = inlined_call_operand.vmem [shape: f32[1,16], index: 12, kind: input, shape index: {}]
  %s13 = inlined_call_operand.vmem [shape: f32[1,16], index: 13, kind: input, shape index: {}]
  %s14 = inlined_call_operand.vmem [shape: f32[1,64], index: 14, kind: input, shape index: {}]
  %s15 = inlined_call_operand.vmem [shape: f32[1,64], index: 15, kind: input, shape index: {}]
  %s16 = inlined_call_operand.vmem [shape: f32[64,256], index: 16, kind: input, shape index: {}]
  %s17 = inlined_call_operand.vmem [shape: f32[256,64], index: 17, kind: input, shape index: {}]
  %s18 = inlined_call_operand.vmem [shape: f32[2,8,64], index: 18, kind: output, shape index: {}]
  %s19 = sld [smem:[#allocation0]]
  $region105: #{resampler_plus_qk_forward.6} parent=0
    _
  %s21 = ssub.s32 1, %s19
  %s22 = scalar_select 0, %s21, %s19
  loop: start=0, step=1, limit=4
  $region2: #{resampler_plus_qk_forward.6} parent=0 // loop_pre_header
    _
  $region3: #{resampler_plus_qk_forward.6} parent=0 // loop_header
    %s24 = sphi 0, %s28
    %p25 = scmp.ge.s32.totalorder %s24, 4
    %s34 = sphi 0, %s36
    %s37 = sphi 0, %s34
    %s38 = sphi 0, %s37
    %s54 = sphi 0, %s38
    %s60 = sphi 0, %s62
    %s63 = sphi 0, %s60
    %s64 = sphi 0, %s63
    %s80 = sphi 0, %s64
    %s84 = sphi 0, %s84
    %s86 = sphi 0, %s84
    %s87 = sphi 0, %s86
    %s101 = sphi 0, %s87
    %s105 = sphi 0, %s105
    %s107 = sphi 0, %s105
    %s108 = sphi 0, %s107
    %s122 = sphi 0, %s108
    %s126 = sphi 0, %s126
    %s128 = sphi 0, %s126
    %s129 = sphi 0, %s128
    %s143 = sphi 0, %s129
    %s147 = sphi 0, %s147
    %s149 = sphi 0, %s147
    %s150 = sphi 0, %s149
    %s164 = sphi 0, %s150
    %s168 = sphi 0, %s168
    %s170 = sphi 0, %s168
    %s171 = sphi 0, %s170
    %s185 = sphi 0, %s171
    %s189 = sphi 0, %s189
    %s191 = sphi 0, %s189
    %s192 = sphi 0, %s191
    %s206 = sphi 0, %s192
    %s210 = sphi 0, %s210
    %s212 = sphi 0, %s210
    %s213 = sphi 0, %s212
    %s227 = sphi 0, %s213
    %s231 = sphi 0, %s231
    %s233 = sphi 0, %s231
    %s234 = sphi 0, %s233
    %s248 = sphi 0, %s234
    %s252 = sphi 0, %s252
    %s254 = sphi 0, %s252
    %s255 = sphi 0, %s254
    %s269 = sphi 0, %s255
    %s273 = sphi 0, %s273
    %s275 = sphi 0, %s273
    %s276 = sphi 0, %s275
    %s290 = sphi 0, %s276
    %s294 = sphi 0, %s294
    %s296 = sphi 0, %s294
    %s297 = sphi 0, %s296
    %s311 = sphi 0, %s297
    %s315 = sphi 0, %s315
    %s317 = sphi 0, %s315
    %s318 = sphi 0, %s317
    %s332 = sphi 0, %s318
    %s336 = sphi 0, %s336
    %s338 = sphi 0, %s336
    %s339 = sphi 0, %s338
    %s353 = sphi 0, %s339
    %s357 = sphi 0, %s357
    %s359 = sphi 0, %s357
    %s360 = sphi 0, %s359
    %s374 = sphi 0, %s360
    %s378 = sphi 0, %s378
    %s380 = sphi 0, %s378
    %s381 = sphi 0, %s380
    %s395 = sphi 0, %s381
    %s399 = sphi 0, %s399
    %s401 = sphi 0, %s399
    %s402 = sphi 0, %s401
    %s416 = sphi 0, %s402
    %s422 = sphi 0, %s424
    %s425 = sphi 0, %s422
    %s426 = sphi 0, %s425
    %s442 = sphi 0, %s426
  $region4: #{resampler_plus_qk_forward.6} parent=0 // loop_header_branch
    %27 = sbr.rel (%p25) target = $region8
  $region5: #{resampler_plus_qk_forward.6} parent=0 // loop_body
    %s29 = ssub.s32 %s24, 1
    %s30 = ssub.s32 %s24, 2
    %s31 = sadd.s32 %s24, 1
    %s32 = ssub.s32 %s24, %s31
    %p33 = scmp.eq.s32.totalorder %s32, 0
    %s35 = sadd.s32 %s34, 1
    %s36 = scalar_select %p33, %s34, %s35
    %p39 = pneg %p33
    %p40 = scmp.eq.s32.totalorder %s24, 1
    %p41 = por %p39, %p40
    %p42 = scmp.ne.s32.totalorder %s34, %s37
    %p43 = scmp.eq.s32.totalorder %s24, 0
    %p44 = por %p42, %p43
    %p45 = scmp.ne.s32.totalorder %s34, %s37
    %p46 = scmp.eq.s32.totalorder %s29, 1
    %p47 = por %p45, %p46
    %p48 = scmp.ne.s32.totalorder %s37, %s38
    %p49 = scmp.eq.s32.totalorder %s29, 0
    %p50 = por %p48, %p49
    %p51 = scmp.ne.s32.totalorder %s37, %s38
    %p52 = scmp.eq.s32.totalorder %s30, 1
    %p53 = por %p51, %p52
    %p55 = scmp.ne.s32.totalorder %s38, %s54
    %p56 = scmp.eq.s32.totalorder %s30, 0
    %p57 = por %p55, %p56
    %s58 = ssub.s32 %s24, %s31
    %p59 = scmp.eq.s32.totalorder %s58, 0
    %s61 = sadd.s32 %s60, 1
    %s62 = scalar_select %p59, %s60, %s61
    %p65 = pneg %p59
    %p66 = scmp.eq.s32.totalorder %s24, 1
    %p67 = por %p65, %p66
    %p68 = scmp.ne.s32.totalorder %s60, %s63
    %p69 = scmp.eq.s32.totalorder %s24, 0
    %p70 = por %p68, %p69
    %p71 = scmp.ne.s32.totalorder %s60, %s63
    %p72 = scmp.eq.s32.totalorder %s29, 1
    %p73 = por %p71, %p72
    %p74 = scmp.ne.s32.totalorder %s63, %s64
    %p75 = scmp.eq.s32.totalorder %s29, 0
    %p76 = por %p74, %p75
    %p77 = scmp.ne.s32.totalorder %s63, %s64
    %p78 = scmp.eq.s32.totalorder %s30, 1
    %p79 = por %p77, %p78
    %p81 = scmp.ne.s32.totalorder %s64, %s80
    %p82 = scmp.eq.s32.totalorder %s30, 0
    %p83 = por %p81, %p82
    %s85 = sadd.s32 %s84, 1
    %p88 = scmp.eq.s32.totalorder %s24, 1
    %p89 = scmp.ne.s32.totalorder %s84, %s86
    %p90 = scmp.eq.s32.totalorder %s24, 0
    %p91 = por %p89, %p90
    %p92 = scmp.ne.s32.totalorder %s84, %s86
    %p93 = scmp.eq.s32.totalorder %s29, 1
    %p94 = por %p92, %p93
    %p95 = scmp.ne.s32.totalorder %s86, %s87
    %p96 = scmp.eq.s32.totalorder %s29, 0
    %p97 = por %p95, %p96
    %p98 = scmp.ne.s32.totalorder %s86, %s87
    %p99 = scmp.eq.s32.totalorder %s30, 1
    %p100 = por %p98, %p99
    %p102 = scmp.ne.s32.totalorder %s87, %s101
    %p103 = scmp.eq.s32.totalorder %s30, 0
    %p104 = por %p102, %p103
    %s106 = sadd.s32 %s105, 1
    %p109 = scmp.eq.s32.totalorder %s24, 1
    %p110 = scmp.ne.s32.totalorder %s105, %s107
    %p111 = scmp.eq.s32.totalorder %s24, 0
    %p112 = por %p110, %p111
    %p113 = scmp.ne.s32.totalorder %s105, %s107
    %p114 = scmp.eq.s32.totalorder %s29, 1
    %p115 = por %p113, %p114
    %p116 = scmp.ne.s32.totalorder %s107, %s108
    %p117 = scmp.eq.s32.totalorder %s29, 0
    %p118 = por %p116, %p117
    %p119 = scmp.ne.s32.totalorder %s107, %s108
    %p120 = scmp.eq.s32.totalorder %s30, 1
    %p121 = por %p119, %p120
    %p123 = scmp.ne.s32.totalorder %s108, %s122
    %p124 = scmp.eq.s32.totalorder %s30, 0
    %p125 = por %p123, %p124
    %s127 = sadd.s32 %s126, 1
    %p130 = scmp.eq.s32.totalorder %s24, 1
    %p131 = scmp.ne.s32.totalorder %s126, %s128
    %p132 = scmp.eq.s32.totalorder %s24, 0
    %p133 = por %p131, %p132
    %p134 = scmp.ne.s32.totalorder %s126, %s128
    %p135 = scmp.eq.s32.totalorder %s29, 1
    %p136 = por %p134, %p135
    %p137 = scmp.ne.s32.totalorder %s128, %s129
    %p138 = scmp.eq.s32.totalorder %s29, 0
    %p139 = por %p137, %p138
    %p140 = scmp.ne.s32.totalorder %s128, %s129
    %p141 = scmp.eq.s32.totalorder %s30, 1
    %p142 = por %p140, %p141
    %p144 = scmp.ne.s32.totalorder %s129, %s143
    %p145 = scmp.eq.s32.totalorder %s30, 0
    %p146 = por %p144, %p145
    %s148 = sadd.s32 %s147, 1
    %p151 = scmp.eq.s32.totalorder %s24, 1
    %p152 = scmp.ne.s32.totalorder %s147, %s149
    %p153 = scmp.eq.s32.totalorder %s24, 0
    %p154 = por %p152, %p153
    %p155 = scmp.ne.s32.totalorder %s147, %s149
    %p156 = scmp.eq.s32.totalorder %s29, 1
    %p157 = por %p155, %p156
    %p158 = scmp.ne.s32.totalorder %s149, %s150
    %p159 = scmp.eq.s32.totalorder %s29, 0
    %p160 = por %p158, %p159
    %p161 = scmp.ne.s32.totalorder %s149, %s150
    %p162 = scmp.eq.s32.totalorder %s30, 1
    %p163 = por %p161, %p162
    %p165 = scmp.ne.s32.totalorder %s150, %s164
    %p166 = scmp.eq.s32.totalorder %s30, 0
    %p167 = por %p165, %p166
    %s169 = sadd.s32 %s168, 1
    %p172 = scmp.eq.s32.totalorder %s24, 1
    %p173 = scmp.ne.s32.totalorder %s168, %s170
    %p174 = scmp.eq.s32.totalorder %s24, 0
    %p175 = por %p173, %p174
    %p176 = scmp.ne.s32.totalorder %s168, %s170
    %p177 = scmp.eq.s32.totalorder %s29, 1
    %p178 = por %p176, %p177
    %p179 = scmp.ne.s32.totalorder %s170, %s171
    %p180 = scmp.eq.s32.totalorder %s29, 0
    %p181 = por %p179, %p180
    %p182 = scmp.ne.s32.totalorder %s170, %s171
    %p183 = scmp.eq.s32.totalorder %s30, 1
    %p184 = por %p182, %p183
    %p186 = scmp.ne.s32.totalorder %s171, %s185
    %p187 = scmp.eq.s32.totalorder %s30, 0
    %p188 = por %p186, %p187
    %s190 = sadd.s32 %s189, 1
    %p193 = scmp.eq.s32.totalorder %s24, 1
    %p194 = scmp.ne.s32.totalorder %s189, %s191
    %p195 = scmp.eq.s32.totalorder %s24, 0
    %p196 = por %p194, %p195
    %p197 = scmp.ne.s32.totalorder %s189, %s191
    %p198 = scmp.eq.s32.totalorder %s29, 1
    %p199 = por %p197, %p198
    %p200 = scmp.ne.s32.totalorder %s191, %s192
    %p201 = scmp.eq.s32.totalorder %s29, 0
    %p202 = por %p200, %p201
    %p203 = scmp.ne.s32.totalorder %s191, %s192
    %p204 = scmp.eq.s32.totalorder %s30, 1
    %p205 = por %p203, %p204
    %p207 = scmp.ne.s32.totalorder %s192, %s206
    %p208 = scmp.eq.s32.totalorder %s30, 0
    %p209 = por %p207, %p208
    %s211 = sadd.s32 %s210, 1
    %p214 = scmp.eq.s32.totalorder %s24, 1
    %p215 = scmp.ne.s32.totalorder %s210, %s212
    %p216 = scmp.eq.s32.totalorder %s24, 0
    %p217 = por %p215, %p216
    %p218 = scmp.ne.s32.totalorder %s210, %s212
    %p219 = scmp.eq.s32.totalorder %s29, 1
    %p220 = por %p218, %p219
    %p221 = scmp.ne.s32.totalorder %s212, %s213
    %p222 = scmp.eq.s32.totalorder %s29, 0
    %p223 = por %p221, %p222
    %p224 = scmp.ne.s32.totalorder %s212, %s213
    %p225 = scmp.eq.s32.totalorder %s30, 1
    %p226 = por %p224, %p225
    %p228 = scmp.ne.s32.totalorder %s213, %s227
    %p229 = scmp.eq.s32.totalorder %s30, 0
    %p230 = por %p228, %p229
    %s232 = sadd.s32 %s231, 1
    %p235 = scmp.eq.s32.totalorder %s24, 1
    %p236 = scmp.ne.s32.totalorder %s231, %s233
    %p237 = scmp.eq.s32.totalorder %s24, 0
    %p238 = por %p236, %p237
    %p239 = scmp.ne.s32.totalorder %s231, %s233
    %p240 = scmp.eq.s32.totalorder %s29, 1
    %p241 = por %p239, %p240
    %p242 = scmp.ne.s32.totalorder %s233, %s234
    %p243 = scmp.eq.s32.totalorder %s29, 0
    %p244 = por %p242, %p243
    %p245 = scmp.ne.s32.totalorder %s233, %s234
    %p246 = scmp.eq.s32.totalorder %s30, 1
    %p247 = por %p245, %p246
    %p249 = scmp.ne.s32.totalorder %s234, %s248
    %p250 = scmp.eq.s32.totalorder %s30, 0
    %p251 = por %p249, %p250
    %s253 = sadd.s32 %s252, 1
    %p256 = scmp.eq.s32.totalorder %s24, 1
    %p257 = scmp.ne.s32.totalorder %s252, %s254
    %p258 = scmp.eq.s32.totalorder %s24, 0
    %p259 = por %p257, %p258
    %p260 = scmp.ne.s32.totalorder %s252, %s254
    %p261 = scmp.eq.s32.totalorder %s29, 1
    %p262 = por %p260, %p261
    %p263 = scmp.ne.s32.totalorder %s254, %s255
    %p264 = scmp.eq.s32.totalorder %s29, 0
    %p265 = por %p263, %p264
    %p266 = scmp.ne.s32.totalorder %s254, %s255
    %p267 = scmp.eq.s32.totalorder %s30, 1
    %p268 = por %p266, %p267
    %p270 = scmp.ne.s32.totalorder %s255, %s269
    %p271 = scmp.eq.s32.totalorder %s30, 0
    %p272 = por %p270, %p271
    %s274 = sadd.s32 %s273, 1
    %p277 = scmp.eq.s32.totalorder %s24, 1
    %p278 = scmp.ne.s32.totalorder %s273, %s275
    %p279 = scmp.eq.s32.totalorder %s24, 0
    %p280 = por %p278, %p279
    %p281 = scmp.ne.s32.totalorder %s273, %s275
    %p282 = scmp.eq.s32.totalorder %s29, 1
    %p283 = por %p281, %p282
    %p284 = scmp.ne.s32.totalorder %s275, %s276
    %p285 = scmp.eq.s32.totalorder %s29, 0
    %p286 = por %p284, %p285
    %p287 = scmp.ne.s32.totalorder %s275, %s276
    %p288 = scmp.eq.s32.totalorder %s30, 1
    %p289 = por %p287, %p288
    %p291 = scmp.ne.s32.totalorder %s276, %s290
    %p292 = scmp.eq.s32.totalorder %s30, 0
    %p293 = por %p291, %p292
    %s295 = sadd.s32 %s294, 1
    %p298 = scmp.eq.s32.totalorder %s24, 1
    %p299 = scmp.ne.s32.totalorder %s294, %s296
    %p300 = scmp.eq.s32.totalorder %s24, 0
    %p301 = por %p299, %p300
    %p302 = scmp.ne.s32.totalorder %s294, %s296
    %p303 = scmp.eq.s32.totalorder %s29, 1
    %p304 = por %p302, %p303
    %p305 = scmp.ne.s32.totalorder %s296, %s297
    %p306 = scmp.eq.s32.totalorder %s29, 0
    %p307 = por %p305, %p306
    %p308 = scmp.ne.s32.totalorder %s296, %s297
    %p309 = scmp.eq.s32.totalorder %s30, 1
    %p310 = por %p308, %p309
    %p312 = scmp.ne.s32.totalorder %s297, %s311
    %p313 = scmp.eq.s32.totalorder %s30, 0
    %p314 = por %p312, %p313
    %s316 = sadd.s32 %s315, 1
    %p319 = scmp.eq.s32.totalorder %s24, 1
    %p320 = scmp.ne.s32.totalorder %s315, %s317
    %p321 = scmp.eq.s32.totalorder %s24, 0
    %p322 = por %p320, %p321
    %p323 = scmp.ne.s32.totalorder %s315, %s317
    %p324 = scmp.eq.s32.totalorder %s29, 1
    %p325 = por %p323, %p324
    %p326 = scmp.ne.s32.totalorder %s317, %s318
    %p327 = scmp.eq.s32.totalorder %s29, 0
    %p328 = por %p326, %p327
    %p329 = scmp.ne.s32.totalorder %s317, %s318
    %p330 = scmp.eq.s32.totalorder %s30, 1
    %p331 = por %p329, %p330
    %p333 = scmp.ne.s32.totalorder %s318, %s332
    %p334 = scmp.eq.s32.totalorder %s30, 0
    %p335 = por %p333, %p334
    %s337 = sadd.s32 %s336, 1
    %p340 = scmp.eq.s32.totalorder %s24, 1
    %p341 = scmp.ne.s32.totalorder %s336, %s338
    %p342 = scmp.eq.s32.totalorder %s24, 0
    %p343 = por %p341, %p342
    %p344 = scmp.ne.s32.totalorder %s336, %s338
    %p345 = scmp.eq.s32.totalorder %s29, 1
    %p346 = por %p344, %p345
    %p347 = scmp.ne.s32.totalorder %s338, %s339
    %p348 = scmp.eq.s32.totalorder %s29, 0
    %p349 = por %p347, %p348
    %p350 = scmp.ne.s32.totalorder %s338, %s339
    %p351 = scmp.eq.s32.totalorder %s30, 1
    %p352 = por %p350, %p351
    %p354 = scmp.ne.s32.totalorder %s339, %s353
    %p355 = scmp.eq.s32.totalorder %s30, 0
    %p356 = por %p354, %p355
    %s358 = sadd.s32 %s357, 1
    %p361 = scmp.eq.s32.totalorder %s24, 1
    %p362 = scmp.ne.s32.totalorder %s357, %s359
    %p363 = scmp.eq.s32.totalorder %s24, 0
    %p364 = por %p362, %p363
    %p365 = scmp.ne.s32.totalorder %s357, %s359
    %p366 = scmp.eq.s32.totalorder %s29, 1
    %p367 = por %p365, %p366
    %p368 = scmp.ne.s32.totalorder %s359, %s360
    %p369 = scmp.eq.s32.totalorder %s29, 0
    %p370 = por %p368, %p369
    %p371 = scmp.ne.s32.totalorder %s359, %s360
    %p372 = scmp.eq.s32.totalorder %s30, 1
    %p373 = por %p371, %p372
    %p375 = scmp.ne.s32.totalorder %s360, %s374
    %p376 = scmp.eq.s32.totalorder %s30, 0
    %p377 = por %p375, %p376
    %s379 = sadd.s32 %s378, 1
    %p382 = scmp.eq.s32.totalorder %s24, 1
    %p383 = scmp.ne.s32.totalorder %s378, %s380
    %p384 = scmp.eq.s32.totalorder %s24, 0
    %p385 = por %p383, %p384
    %p386 = scmp.ne.s32.totalorder %s378, %s380
    %p387 = scmp.eq.s32.totalorder %s29, 1
    %p388 = por %p386, %p387
    %p389 = scmp.ne.s32.totalorder %s380, %s381
    %p390 = scmp.eq.s32.totalorder %s29, 0
    %p391 = por %p389, %p390
    %p392 = scmp.ne.s32.totalorder %s380, %s381
    %p393 = scmp.eq.s32.totalorder %s30, 1
    %p394 = por %p392, %p393
    %p396 = scmp.ne.s32.totalorder %s381, %s395
    %p397 = scmp.eq.s32.totalorder %s30, 0
    %p398 = por %p396, %p397
    %s400 = sadd.s32 %s399, 1
    %p403 = scmp.eq.s32.totalorder %s24, 1
    %p404 = scmp.ne.s32.totalorder %s399, %s401
    %p405 = scmp.eq.s32.totalorder %s24, 0
    %p406 = por %p404, %p405
    %p407 = scmp.ne.s32.totalorder %s399, %s401
    %p408 = scmp.eq.s32.totalorder %s29, 1
    %p409 = por %p407, %p408
    %p410 = scmp.ne.s32.totalorder %s401, %s402
    %p411 = scmp.eq.s32.totalorder %s29, 0
    %p412 = por %p410, %p411
    %p413 = scmp.ne.s32.totalorder %s401, %s402
    %p414 = scmp.eq.s32.totalorder %s30, 1
    %p415 = por %p413, %p414
    %p417 = scmp.ne.s32.totalorder %s402, %s416
    %p418 = scmp.eq.s32.totalorder %s30, 0
    %p419 = por %p417, %p418
    %s420 = ssub.s32 %s24, %s31
    %p421 = scmp.eq.s32.totalorder %s420, 0
    %s423 = sadd.s32 %s422, 1
    %s424 = scalar_select %p421, %s422, %s423
    %p427 = pneg %p421
    %p428 = scmp.eq.s32.totalorder %s24, 1
    %p429 = por %p427, %p428
    %p430 = scmp.ne.s32.totalorder %s422, %s425
    %p431 = scmp.eq.s32.totalorder %s24, 0
    %p432 = por %p430, %p431
    %p433 = scmp.ne.s32.totalorder %s422, %s425
    %p434 = scmp.eq.s32.totalorder %s29, 1
    %p435 = por %p433, %p434
    %p436 = scmp.ne.s32.totalorder %s425, %s426
    %p437 = scmp.eq.s32.totalorder %s29, 0
    %p438 = por %p436, %p437
    %p439 = scmp.ne.s32.totalorder %s425, %s426
    %p440 = scmp.eq.s32.totalorder %s30, 1
    %p441 = por %p439, %p440
    %p443 = scmp.ne.s32.totalorder %s426, %s442
    %p444 = scmp.eq.s32.totalorder %s30, 0
    %p445 = por %p443, %p444
    %p446 = scmp.le.s32.totalorder 1, %s24
    %p447 = scmp.lt.s32.totalorder %s24, 3
    %p448 = pnand %p446, %p447
    %p449 = pneg %p448
    // Predicated region
    $region9: #{resampler_plus_qk_forward.6} parent=5 // pred_check
      _
    $region10: #{resampler_plus_qk_forward.6} parent=5 // pred_check_branch
      %451 = sbr.rel (%p448) target = $region12
    $region11: #{resampler_plus_qk_forward.6} parent=5 // pred_region
      %s452 = ssub.s32 %s24, 1
      // Predicated region
      $region13: #{resampler_plus_qk_forward.6} parent=11 // pred_check
        %p453 = pneg %p97
      $region14: #{resampler_plus_qk_forward.6} parent=11 // pred_check_branch
        %455 = sbr.rel (%p453) target = $region16
      $region15: #{resampler_plus_qk_forward.6} parent=11 // pred_region
        _
      $region16: #{resampler_plus_qk_forward.6} parent=11 // pred_fallthru
        _
      // Predicated region
      $region17: #{resampler_plus_qk_forward.6} parent=11 // pred_check
        %p456 = pneg %p118
      $region18: #{resampler_plus_qk_forward.6} parent=11 // pred_check_branch
        %458 = sbr.rel (%p456) target = $region20
      $region19: #{resampler_plus_qk_forward.6} parent=11 // pred_region
        _
      $region20: #{resampler_plus_qk_forward.6} parent=11 // pred_fallthru
        _
      // Predicated region
      $region21: #{resampler_plus_qk_forward.6} parent=11 // pred_check
        %p459 = pneg %p139
      $region22: #{resampler_plus_qk_forward.6} parent=11 // pred_check_branch
        %461 = sbr.rel (%p459) target = $region24
      $region23: #{resampler_plus_qk_forward.6} parent=11 // pred_region
        _
      $region24: #{resampler_plus_qk_forward.6} parent=11 // pred_fallthru
        _
      // Predicated region
      $region25: #{resampler_plus_qk_forward.6} parent=11 // pred_check
        %p462 = pneg %p160
      $region26: #{resampler_plus_qk_forward.6} parent=11 // pred_check_branch
        %464 = sbr.rel (%p462) target = $region28
      $region27: #{resampler_plus_qk_forward.6} parent=11 // pred_region
        _
      $region28: #{resampler_plus_qk_forward.6} parent=11 // pred_fallthru
        _
      // Predicated region
      $region29: #{resampler_plus_qk_forward.6} parent=11 // pred_check
        %p465 = pneg %p181
      $region30: #{resampler_plus_qk_forward.6} parent=11 // pred_check_branch
        %467 = sbr.rel (%p465) target = $region32
      $region31: #{resampler_plus_qk_forward.6} parent=11 // pred_region
        _
      $region32: #{resampler_plus_qk_forward.6} parent=11 // pred_fallthru
        _
      // Predicated region
      $region33: #{resampler_plus_qk_forward.6} parent=11 // pred_check
        %p468 = pneg %p202
      $region34: #{resampler_plus_qk_forward.6} parent=11 // pred_check_branch
        %470 = sbr.rel (%p468) target = $region36
      $region35: #{resampler_plus_qk_forward.6} parent=11 // pred_region
        _
      $region36: #{resampler_plus_qk_forward.6} parent=11 // pred_fallthru
        _
      // Predicated region
      $region37: #{resampler_plus_qk_forward.6} parent=11 // pred_check
        %p471 = pneg %p223
      $region38: #{resampler_plus_qk_forward.6} parent=11 // pred_check_branch
        %473 = sbr.rel (%p471) target = $region40
      $region39: #{resampler_plus_qk_forward.6} parent=11 // pred_region
        _
      $region40: #{resampler_plus_qk_forward.6} parent=11 // pred_fallthru
        _
      // Predicated region
      $region41: #{resampler_plus_qk_forward.6} parent=11 // pred_check
        %p474 = pneg %p244
      $region42: #{resampler_plus_qk_forward.6} parent=11 // pred_check_branch
        %476 = sbr.rel (%p474) target = $region44
      $region43: #{resampler_plus_qk_forward.6} parent=11 // pred_region
        _
      $region44: #{resampler_plus_qk_forward.6} parent=11 // pred_fallthru
        _
      // Predicated region
      $region45: #{resampler_plus_qk_forward.6} parent=11 // pred_check
        %p477 = pneg %p265
      $region46: #{resampler_plus_qk_forward.6} parent=11 // pred_check_branch
        %479 = sbr.rel (%p477) target = $region48
      $region47: #{resampler_plus_qk_forward.6} parent=11 // pred_region
        _
      $region48: #{resampler_plus_qk_forward.6} parent=11 // pred_fallthru
        _
      // Predicated region
      $region49: #{resampler_plus_qk_forward.6} parent=11 // pred_check
        %p480 = pneg %p286
      $region50: #{resampler_plus_qk_forward.6} parent=11 // pred_check_branch
        %482 = sbr.rel (%p480) target = $region52
      $region51: #{resampler_plus_qk_forward.6} parent=11 // pred_region
        _
      $region52: #{resampler_plus_qk_forward.6} parent=11 // pred_fallthru
        _
      // Predicated region
      $region53: #{resampler_plus_qk_forward.6} parent=11 // pred_check
        %p483 = pneg %p307
      $region54: #{resampler_plus_qk_forward.6} parent=11 // pred_check_branch
        %485 = sbr.rel (%p483) target = $region56
      $region55: #{resampler_plus_qk_forward.6} parent=11 // pred_region
        _
      $region56: #{resampler_plus_qk_forward.6} parent=11 // pred_fallthru
        _
      // Predicated region
      $region57: #{resampler_plus_qk_forward.6} parent=11 // pred_check
        %p486 = pneg %p328
      $region58: #{resampler_plus_qk_forward.6} parent=11 // pred_check_branch
        %488 = sbr.rel (%p486) target = $region60
      $region59: #{resampler_plus_qk_forward.6} parent=11 // pred_region
        _
      $region60: #{resampler_plus_qk_forward.6} parent=11 // pred_fallthru
        _
      // Predicated region
      $region61: #{resampler_plus_qk_forward.6} parent=11 // pred_check
        %p489 = pneg %p349
      $region62: #{resampler_plus_qk_forward.6} parent=11 // pred_check_branch
        %491 = sbr.rel (%p489) target = $region64
      $region63: #{resampler_plus_qk_forward.6} parent=11 // pred_region
        _
      $region64: #{resampler_plus_qk_forward.6} parent=11 // pred_fallthru
        _
      // Predicated region
      $region65: #{resampler_plus_qk_forward.6} parent=11 // pred_check
        %p492 = pneg %p370
      $region66: #{resampler_plus_qk_forward.6} parent=11 // pred_check_branch
        %494 = sbr.rel (%p492) target = $region68
      $region67: #{resampler_plus_qk_forward.6} parent=11 // pred_region
        _
      $region68: #{resampler_plus_qk_forward.6} parent=11 // pred_fallthru
        _
      // Predicated region
      $region69: #{resampler_plus_qk_forward.6} parent=11 // pred_check
        %p495 = pneg %p391
      $region70: #{resampler_plus_qk_forward.6} parent=11 // pred_check_branch
        %497 = sbr.rel (%p495) target = $region72
      $region71: #{resampler_plus_qk_forward.6} parent=11 // pred_region
        _
      $region72: #{resampler_plus_qk_forward.6} parent=11 // pred_fallthru
        _
      // Predicated region
      $region73: #{resampler_plus_qk_forward.6} parent=11 // pred_check
        %p498 = pneg %p412
      $region74: #{resampler_plus_qk_forward.6} parent=11 // pred_check_branch
        %500 = sbr.rel (%p498) target = $region76
      $region75: #{resampler_plus_qk_forward.6} parent=11 // pred_region
        _
      $region76: #{resampler_plus_qk_forward.6} parent=11 // pred_fallthru
        _
    $region12: #{resampler_plus_qk_forward.6} parent=5 // pred_fallthru
      _
    %p501 = scmp.lt.s32.totalorder %s24, 2
    // Predicated region
    $region77: #{resampler_plus_qk_forward.6} parent=5 // pred_check
      %p502 = pneg %p501
    $region78: #{resampler_plus_qk_forward.6} parent=5 // pred_check_branch
      %504 = sbr.rel (%p502) target = $region80
    $region79: #{resampler_plus_qk_forward.6} parent=5 // pred_region
      // Predicated region
      $region81: #{resampler_plus_qk_forward.6} parent=79 // pred_check
        %p505 = pneg %p44
      $region82: #{resampler_plus_qk_forward.6} parent=79 // pred_check_branch
        %507 = sbr.rel (%p505) target = $region84
      $region83: #{resampler_plus_qk_forward.6} parent=79 // pred_region
        %p508 = scmp.lt.s32.totalorder %s24, 1
        %s509 = scalar_select %p508, %s24, 1
        %s510 = smul.addr %s509, 2
        %s511 = smul.addr %s510, 8
        %s512 = scalar_lea.vmem %s0, %s511
      $region84: #{resampler_plus_qk_forward.6} parent=79 // pred_fallthru
        _
      // Predicated region
      $region85: #{resampler_plus_qk_forward.6} parent=79 // pred_check
        %p513 = pneg %p70
      $region86: #{resampler_plus_qk_forward.6} parent=79 // pred_check_branch
        %515 = sbr.rel (%p513) target = $region88
      $region87: #{resampler_plus_qk_forward.6} parent=79 // pred_region
        %p516 = scmp.lt.s32.totalorder %s24, 1
        %s517 = scalar_select %p516, %s24, 1
        %s518 = smul.addr %s517, 8
        %s519 = scalar_lea.vmem %s1, %s518
      $region88: #{resampler_plus_qk_forward.6} parent=79 // pred_fallthru
        _
    $region80: #{resampler_plus_qk_forward.6} parent=5 // pred_fallthru
      _
    %p520 = scmp.le.s32.totalorder 1, %s24
    %p521 = scmp.lt.s32.totalorder %s24, 3
    %p522 = pnand %p520, %p521
    %p523 = pneg %p522
    // Predicated region
    $region89: #{resampler_plus_qk_forward.6} parent=5 // pred_check
      _
    $region90: #{resampler_plus_qk_forward.6} parent=5 // pred_check_branch
      %525 = sbr.rel (%p522) target = $region92
    $region91: #{resampler_plus_qk_forward.6} parent=5 // pred_region
      %s526 = ssub.s32 %s24, 1
      %p527 = scmp.lt.s32.totalorder %s29, 1
      %s528 = scalar_select %p527, %s29, 1
      %s529 = smul.addr %s528, 2
      %s530 = smul.addr %s529, 8
      %s531 = scalar_lea.vmem %s0, %s530
      %p532 = pneg %p50
      %p533 = pneg %p47
      %p534 = scmp.lt.s32.totalorder %s29, 1
      %s535 = scalar_select %p534, %s29, 1
      %s536 = smul.addr %s535, 8
      %s537 = scalar_lea.vmem %s1, %s536
      %p538 = pneg %p76
      %p539 = pneg %p73
      %p540 = pneg %p97
      %p541 = pneg %p94
      %p542 = pneg %p118
      %p543 = pneg %p115
      %p544 = pneg %p139
      %p545 = pneg %p136
      %p546 = pneg %p160
      %p547 = pneg %p157
      %p548 = pneg %p181
      %p549 = pneg %p178
      %p550 = pneg %p202
      %p551 = pneg %p199
      %p552 = pneg %p223
      %p553 = pneg %p220
      %p554 = pneg %p244
      %p555 = pneg %p241
      %p556 = pneg %p265
      %p557 = pneg %p262
      %p558 = pneg %p286
      %p559 = pneg %p283
      %p560 = pneg %p307
      %p561 = pneg %p304
      %p562 = pneg %p328
      %p563 = pneg %p325
      %p564 = pneg %p349
      %p565 = pneg %p346
      %p566 = pneg %p370
      %p567 = pneg %p367
      %p568 = pneg %p391
      %p569 = pneg %p388
      %p570 = pneg %p412
      %p571 = pneg %p409
      %p572 = pneg %p438
      %p573 = pneg %p435
      %p574 = scmp.lt.s32.totalorder %s29, 1
      %s575 = scalar_select %p574, %s29, 1
      %s576 = smul.addr %s575, 8
      %s577 = scalar_lea.vmem %s18, %s576
      %p578 = scmp.lt.s32.totalorder %s29, 1
      %s579 = scalar_select %p578, %s29, 1
      %s580 = smul.addr %s579, 2
      %s581 = smul.addr %s580, 8
      %s582 = scalar_lea.vmem %s0, %s581
      %p583 = scmp.lt.s32.totalorder %s29, 1
      %s584 = scalar_select %p583, %s29, 1
      %s585 = smul.addr %s584, 8
      %s586 = scalar_lea.vmem %s1, %s585
      %p587 = scmp.lt.s32.totalorder %s29, 1
      %s588 = scalar_select %p587, %s29, 1
      %s589 = smul.addr %s588, 8
      %s590 = scalar_lea.vmem %s18, %s589
      %v592 = vld [vmem:[%s582] sm:$0xff]
      %v593 = vld [vmem:[%s582 + $0x8] sm:$0xff]
      %v594 = vld [vmem:[%s586] sm:$0xff]
      %v595 = vld [vmem:[%s2] sm:$0x1]
      %v596 = vld [vmem:[%s3] sm:$0x1]
      %vm597 = vcmask 523264
      %v598 = vsel %vm597, %v592, 0.0
      %599 = vadd.xlane.f32.xlu0 %v598
      %v600 = vpop.xlane.xlu0 %599
      %v601 = vsel %vm597, %v593, 0.0
      %602 = vadd.xlane.f32.xlu0 %v601
      %v603 = vpop.xlane.xlu0 %602
      %v604 = vrcp.pop 64.0
      %v605 = vmul.f32 64.0, %v604
      %v606 = vsub.f32 1.0, %v605
      %v607 = vmul.f32 %v604, %v606
      %v608 = vadd.f32 %v604, %v607
      %vm609 = vweird.f32 %v604
      %v610 = vsel %vm609, %v604, %v608
      %v611 = vmul.f32 %v600, %v610
      %v612 = vmul.f32 %v603, %v610
      %v613 = vsub.f32 %v592, %v611
      %v614 = vsub.f32 %v593, %v612
      %v615 = vmul.f32 %v613, %v613
      %v616 = vmul.f32 %v614, %v614
      %v617 = vsel %vm597, %v615, 0.0
      %618 = vadd.xlane.f32.xlu0 %v617
      %v619 = vpop.xlane.xlu0 %618
      %v620 = vsel %vm597, %v616, 0.0
      %621 = vadd.xlane.f32.xlu0 %v620
      %v622 = vpop.xlane.xlu0 %621
      %v623 = vmul.f32 %v619, %v610
      %v624 = vmul.f32 %v622, %v610
      %v625 = vadd.f32 %v623, 1e-05
      %v626 = vadd.f32 %v624, 1e-05
      %v627 = vrsqrt.pop %v625
      %v628 = vmul.f32 %v627, %v625
      %v629 = vmul.f32 %v628, %v627
      %v630 = vmul.f32 0.5, %v629
      %v631 = vsub.f32 1.5, %v630
      %v632 = vmul.f32 %v627, %v631
      %vm633 = vweird.f32 %v625
      %vm634 = vweird.f32 %v627
      %vm635 = vmor %vm633, %vm634
      %v636 = vsel %vm635, %v627, %v632
      %v637 = vrsqrt.pop %v626
      %v638 = vmul.f32 %v637, %v626
      %v639 = vmul.f32 %v638, %v637
      %v640 = vmul.f32 0.5, %v639
      %v641 = vsub.f32 1.5, %v640
      %v642 = vmul.f32 %v637, %v641
      %vm643 = vweird.f32 %v626
      %vm644 = vweird.f32 %v637
      %vm645 = vmor %vm643, %vm644
      %v646 = vsel %vm645, %v637, %v642
      %v647 = vmul.f32 %v613, %v636
      %v648 = vmul.f32 %v614, %v646
      %v650 = vperm.slane %v595, 0
      %v652 = vmul.f32 %v647, %v650
      %v653 = vmul.f32 %v648, %v650
      %v655 = vperm.slane %v596, 0
      %v657 = vadd.f32 %v652, %v655
      %v658 = vadd.f32 %v653, %v655
      %v659 = vld [vmem:[%s4] sm:$0x1]
      %v660 = vld [vmem:[%s5] sm:$0x1]
      %v661 = vsel %vm597, %v594, 0.0
      %662 = vadd.xlane.f32.xlu0 %v661
      %v663 = vpop.xlane.xlu0 %662
      %v664 = vmul.f32 %v663, %v610
      %v665 = vsub.f32 %v594, %v664
      %v666 = vmul.f32 %v665, %v665
      %v667 = vsel %vm597, %v666, 0.0
      %668 = vadd.xlane.f32.xlu0 %v667
      %v669 = vpop.xlane.xlu0 %668
      %v670 = vmul.f32 %v669, %v610
      %v671 = vadd.f32 %v670, 1e-05
      %v672 = vrsqrt.pop %v671
      %v673 = vmul.f32 %v672, %v671
      %v674 = vmul.f32 %v673, %v672
      %v675 = vmul.f32 0.5, %v674
      %v676 = vsub.f32 1.5, %v675
      %v677 = vmul.f32 %v672, %v676
      %vm678 = vweird.f32 %v671
      %vm679 = vweird.f32 %v672
      %vm680 = vmor %vm678, %vm679
      %v681 = vsel %vm680, %v672, %v677
      %v682 = vmul.f32 %v665, %v681
      %v684 = vperm.slane %v659, 0
      %v686 = vmul.f32 %v682, %v684
      %v688 = vperm.slane %v660, 0
      %v690 = vadd.f32 %v686, %v688
      %v691 = vld [vmem:[%s6] sm:$0xff]
      %v692 = vld [vmem:[%s6 + $0x8] sm:$0xff]
      %v693 = vld [vmem:[%s6 + $0x10] sm:$0xff]
      %v694 = vld [vmem:[%s6 + $0x18] sm:$0xff]
      %v695 = vld [vmem:[%s6 + $0x20] sm:$0xff]
      %v696 = vld [vmem:[%s6 + $0x28] sm:$0xff]
      %v697 = vld [vmem:[%s6 + $0x30] sm:$0xff]
      %v698 = vld [vmem:[%s6 + $0x38] sm:$0xff]
      %v699 = vpack.c.bf16 %v690, %v690
      %v700 = vpack.c.bf16 %v692, %v691
      %v701 = vpack.c.bf16 %v694, %v693
      %v702 = vpack.c.bf16 %v696, %v695
      %v703 = vpack.c.bf16 %v698, %v697
      %v705 = vsel %vm597, %v699, 0
      %707 = vmatpush.bf16.msra.mxu0 0
      %708 = vmatpush.bf16.msra.mxu0 0
      %709 = vmatpush.bf16.msra.mxu0 0
      %710 = vmatpush.bf16.msra.mxu0 0
      %711 = vmatpush.bf16.msra.mxu0 %v703
      %712 = vmatpush.bf16.msra.mxu0 %v702
      %713 = vmatpush.bf16.msra.mxu0 %v701
      %714 = vmatpush.bf16.msra.mxu0 %v700
      %715 = vmatmul.bf16.gmra.mxu0 %v705
      %v716 = vpop.f32.mrf.mxu0
      %v717 = vadd.f32 0.0, %v716
      %v718 = vpop.f32.mrf.mxu0
      %719 = vdwg.mxu0
      %v720 = vld [vmem:[%s7] sm:$0xff]
      %v721 = vld [vmem:[%s7 + $0x8] sm:$0xff]
      %v722 = vld [vmem:[%s7 + $0x10] sm:$0xff]
      %v723 = vld [vmem:[%s7 + $0x18] sm:$0xff]
      %v724 = vld [vmem:[%s7 + $0x20] sm:$0xff]
      %v725 = vld [vmem:[%s7 + $0x28] sm:$0xff]
      %v726 = vld [vmem:[%s7 + $0x30] sm:$0xff]
      %v727 = vld [vmem:[%s7 + $0x38] sm:$0xff]
      %v728 = vpack.c.bf16 %v658, %v657
      %v729 = vpack.c.bf16 %v721, %v720
      %v730 = vpack.c.bf16 %v723, %v722
      %v731 = vpack.c.bf16 %v725, %v724
      %v732 = vpack.c.bf16 %v727, %v726
      %v734 = vsel %vm597, %v728, 0
      %736 = vmatpush.bf16.msra.mxu0 0
      %737 = vmatpush.bf16.msra.mxu0 0
      %738 = vmatpush.bf16.msra.mxu0 0
      %739 = vmatpush.bf16.msra.mxu0 0
      %740 = vmatpush.bf16.msra.mxu0 %v732
      %741 = vmatpush.bf16.msra.mxu0 %v731
      %742 = vmatpush.bf16.msra.mxu0 %v730
      %743 = vmatpush.bf16.msra.mxu0 %v729
      %744 = vmatmul.bf16.gmra.mxu0 %v734
      %v745 = vpop.f32.mrf.mxu0
      %v746 = vadd.f32 0.0, %v745
      %v747 = vpop.f32.mrf.mxu0
      %v748 = vadd.f32 0.0, %v747
      %749 = vmatmul.bf16.gmra.mxu0 %v705
      %v750 = vpop.f32.mrf.mxu0
      %v751 = vadd.f32 0.0, %v750
      %v752 = vpop.f32.mrf.mxu0
      %753 = vdwg.mxu0
      %v754 = vld [vmem:[%s8] sm:$0xff]
      %v755 = vld [vmem:[%s8 + $0x8] sm:$0xff]
      %v756 = vld [vmem:[%s8 + $0x10] sm:$0xff]
      %v757 = vld [vmem:[%s8 + $0x18] sm:$0xff]
      %v758 = vld [vmem:[%s8 + $0x20] sm:$0xff]
      %v759 = vld [vmem:[%s8 + $0x28] sm:$0xff]
      %v760 = vld [vmem:[%s8 + $0x30] sm:$0xff]
      %v761 = vld [vmem:[%s8 + $0x38] sm:$0xff]
      %v762 = vpack.c.bf16 %v755, %v754
      %v763 = vpack.c.bf16 %v757, %v756
      %v764 = vpack.c.bf16 %v759, %v758
      %v765 = vpack.c.bf16 %v761, %v760
      %766 = vmatpush.bf16.msra.mxu0 0
      %767 = vmatpush.bf16.msra.mxu0 0
      %768 = vmatpush.bf16.msra.mxu0 0
      %769 = vmatpush.bf16.msra.mxu0 0
      %770 = vmatpush.bf16.msra.mxu0 %v765
      %771 = vmatpush.bf16.msra.mxu0 %v764
      %772 = vmatpush.bf16.msra.mxu0 %v763
      %773 = vmatpush.bf16.msra.mxu0 %v762
      %774 = vmatmul.bf16.gmra.mxu0 %v734
      %v775 = vpop.f32.mrf.mxu0
      %v776 = vadd.f32 0.0, %v775
      %v777 = vpop.f32.mrf.mxu0
      %v778 = vadd.f32 0.0, %v777
      %779 = vmatmul.bf16.gmra.mxu0 %v705
      %v780 = vpop.f32.mrf.mxu0
      %v781 = vadd.f32 0.0, %v780
      %v782 = vpop.f32.mrf.mxu0
      %783 = vdwg.mxu0
      %785 = vrot.lane.b32.xlu0 %v717, 112
      %v786 = vpop.permute.xlu0 %785
      %788 = vrot.lane.b32.xlu0 %v717, 96
      %v789 = vpop.permute.xlu0 %788
      %791 = vrot.lane.b32.xlu0 %v717, 80
      %v792 = vpop.permute.xlu0 %791
      %797 = vrot.lane.b32.xlu0 %v746, 112
      %v798 = vpop.permute.xlu0 %797
      %799 = vrot.lane.b32.xlu0 %v748, 112
      %v800 = vpop.permute.xlu0 %799
      %801 = vrot.lane.b32.xlu0 %v751, 112
      %v802 = vpop.permute.xlu0 %801
      %806 = vrot.lane.b32.xlu0 %v746, 96
      %v807 = vpop.permute.xlu0 %806
      %808 = vrot.lane.b32.xlu0 %v748, 96
      %v809 = vpop.permute.xlu0 %808
      %810 = vrot.lane.b32.xlu0 %v751, 96
      %v811 = vpop.permute.xlu0 %810
      %815 = vrot.lane.b32.xlu0 %v746, 80
      %v816 = vpop.permute.xlu0 %815
      %817 = vrot.lane.b32.xlu0 %v748, 80
      %v818 = vpop.permute.xlu0 %817
      %819 = vrot.lane.b32.xlu0 %v751, 80
      %v820 = vpop.permute.xlu0 %819
      %827 = vrot.lane.b32.xlu0 %v776, 112
      %v828 = vpop.permute.xlu0 %827
      %829 = vrot.lane.b32.xlu0 %v778, 112
      %v830 = vpop.permute.xlu0 %829
      %831 = vrot.lane.b32.xlu0 %v781, 112
      %v832 = vpop.permute.xlu0 %831
      %836 = vrot.lane.b32.xlu0 %v776, 96
      %v837 = vpop.permute.xlu0 %836
      %838 = vrot.lane.b32.xlu0 %v778, 96
      %v839 = vpop.permute.xlu0 %838
      %840 = vrot.lane.b32.xlu0 %v781, 96
      %v841 = vpop.permute.xlu0 %840
      %845 = vrot.lane.b32.xlu0 %v776, 80
      %v846 = vpop.permute.xlu0 %845
      %847 = vrot.lane.b32.xlu0 %v778, 80
      %v848 = vpop.permute.xlu0 %847
      %849 = vrot.lane.b32.xlu0 %v781, 80
      %v850 = vpop.permute.xlu0 %849
      %v854 = vld [vmem:[%s10] sm:$0x1]
      %v855 = vld [vmem:[%s11] sm:$0x1]
      %vm856 = vcmask 130048
      %v857 = vsel %vm856, %v717, 0.0
      %858 = vadd.xlane.f32.xlu0 %v857
      %v859 = vpop.xlane.xlu0 %858
      %v860 = vsel %vm856, %v786, 0.0
      %861 = vadd.xlane.f32.xlu0 %v860
      %v862 = vpop.xlane.xlu0 %861
      %v863 = vsel %vm856, %v789, 0.0
      %864 = vadd.xlane.f32.xlu0 %v863
      %v865 = vpop.xlane.xlu0 %864
      %v866 = vsel %vm856, %v792, 0.0
      %867 = vadd.xlane.f32.xlu0 %v866
      %v868 = vpop.xlane.xlu0 %867
      %v869 = vrcp.pop 16.0
      %v870 = vmul.f32 16.0, %v869
      %v871 = vsub.f32 1.0, %v870
      %v872 = vmul.f32 %v869, %v871
      %v873 = vadd.f32 %v869, %v872
      %vm874 = vweird.f32 %v869
      %v875 = vsel %vm874, %v869, %v873
      %v876 = vmul.f32 %v859, %v875
      %v877 = vmul.f32 %v862, %v875
      %v878 = vmul.f32 %v865, %v875
      %v879 = vmul.f32 %v868, %v875
      %v880 = vsub.f32 %v717, %v876
      %v881 = vsub.f32 %v786, %v877
      %v882 = vsub.f32 %v789, %v878
      %v883 = vsub.f32 %v792, %v879
      %v884 = vmul.f32 %v880, %v880
      %v885 = vmul.f32 %v881, %v881
      %v886 = vmul.f32 %v882, %v882
      %v887 = vmul.f32 %v883, %v883
      %v888 = vsel %vm856, %v884, 0.0
      %889 = vadd.xlane.f32.xlu0 %v888
      %v890 = vpop.xlane.xlu0 %889
      %v891 = vsel %vm856, %v885, 0.0
      %892 = vadd.xlane.f32.xlu0 %v891
      %v893 = vpop.xlane.xlu0 %892
      %v894 = vsel %vm856, %v886, 0.0
      %895 = vadd.xlane.f32.xlu0 %v894
      %v896 = vpop.xlane.xlu0 %895
      %v897 = vsel %vm856, %v887, 0.0
      %898 = vadd.xlane.f32.xlu0 %v897
      %v899 = vpop.xlane.xlu0 %898
      %v900 = vmul.f32 %v890, %v875
      %v901 = vmul.f32 %v893, %v875
      %v902 = vmul.f32 %v896, %v875
      %v903 = vmul.f32 %v899, %v875
      %v904 = vadd.f32 %v900, 1e-05
      %v905 = vadd.f32 %v901, 1e-05
      %v906 = vadd.f32 %v902, 1e-05
      %v907 = vadd.f32 %v903, 1e-05
      %v908 = vrsqrt.pop %v904
      %v909 = vmul.f32 %v908, %v904
      %v910 = vmul.f32 %v909, %v908
      %v911 = vmul.f32 0.5, %v910
      %v912 = vsub.f32 1.5, %v911
      %v913 = vmul.f32 %v908, %v912
      %vm914 = vweird.f32 %v904
      %vm915 = vweird.f32 %v908
      %vm916 = vmor %vm914, %vm915
      %v917 = vsel %vm916, %v908, %v913
      %v918 = vrsqrt.pop %v905
      %v919 = vmul.f32 %v918, %v905
      %v920 = vmul.f32 %v919, %v918
      %v921 = vmul.f32 0.5, %v920
      %v922 = vsub.f32 1.5, %v921
      %v923 = vmul.f32 %v918, %v922
      %vm924 = vweird.f32 %v905
      %vm925 = vweird.f32 %v918
      %vm926 = vmor %vm924, %vm925
      %v927 = vsel %vm926, %v918, %v923
      %v928 = vrsqrt.pop %v906
      %v929 = vmul.f32 %v928, %v906
      %v930 = vmul.f32 %v929, %v928
      %v931 = vmul.f32 0.5, %v930
      %v932 = vsub.f32 1.5, %v931
      %v933 = vmul.f32 %v928, %v932
      %vm934 = vweird.f32 %v906
      %vm935 = vweird.f32 %v928
      %vm936 = vmor %vm934, %vm935
      %v937 = vsel %vm936, %v928, %v933
      %v938 = vrsqrt.pop %v907
      %v939 = vmul.f32 %v938, %v907
      %v940 = vmul.f32 %v939, %v938
      %v941 = vmul.f32 0.5, %v940
      %v942 = vsub.f32 1.5, %v941
      %v943 = vmul.f32 %v938, %v942
      %vm944 = vweird.f32 %v907
      %vm945 = vweird.f32 %v938
      %vm946 = vmor %vm944, %vm945
      %v947 = vsel %vm946, %v938, %v943
      %v948 = vmul.f32 %v880, %v917
      %v949 = vmul.f32 %v881, %v927
      %v950 = vmul.f32 %v882, %v937
      %v951 = vmul.f32 %v883, %v947
      %v953 = vperm.slane %v854, 0
      %v955 = vmul.f32 %v948, %v953
      %v956 = vmul.f32 %v949, %v953
      %v957 = vmul.f32 %v950, %v953
      %v958 = vmul.f32 %v951, %v953
      %v960 = vperm.slane %v855, 0
      %v962 = vadd.f32 %v955, %v960
      %v963 = vadd.f32 %v956, %v960
      %v964 = vadd.f32 %v957, %v960
      %v965 = vadd.f32 %v958, %v960
      %v966 = vld [vmem:[%s12] sm:$0x1]
      %v967 = vld [vmem:[%s13] sm:$0x1]
      %v968 = vsel %vm856, %v746, 0.0
      %969 = vadd.xlane.f32.xlu0 %v968
      %v970 = vpop.xlane.xlu0 %969
      %v971 = vsel %vm856, %v748, 0.0
      %972 = vadd.xlane.f32.xlu0 %v971
      %v973 = vpop.xlane.xlu0 %972
      %v974 = vsel %vm856, %v751, 0.0
      %975 = vadd.xlane.f32.xlu0 %v974
      %v976 = vpop.xlane.xlu0 %975
      %v977 = vsel %vm856, %v798, 0.0
      %978 = vadd.xlane.f32.xlu0 %v977
      %v979 = vpop.xlane.xlu0 %978
      %v980 = vsel %vm856, %v800, 0.0
      %981 = vadd.xlane.f32.xlu0 %v980
      %v982 = vpop.xlane.xlu0 %981
      %v983 = vsel %vm856, %v802, 0.0
      %984 = vadd.xlane.f32.xlu0 %v983
      %v985 = vpop.xlane.xlu0 %984
      %v986 = vsel %vm856, %v807, 0.0
      %987 = vadd.xlane.f32.xlu0 %v986
      %v988 = vpop.xlane.xlu0 %987
      %v989 = vsel %vm856, %v809, 0.0
      %990 = vadd.xlane.f32.xlu0 %v989
      %v991 = vpop.xlane.xlu0 %990
      %v992 = vsel %vm856, %v811, 0.0
      %993 = vadd.xlane.f32.xlu0 %v992
      %v994 = vpop.xlane.xlu0 %993
      %v995 = vsel %vm856, %v816, 0.0
      %996 = vadd.xlane.f32.xlu0 %v995
      %v997 = vpop.xlane.xlu0 %996
      %v998 = vsel %vm856, %v818, 0.0
      %999 = vadd.xlane.f32.xlu0 %v998
      %v1000 = vpop.xlane.xlu0 %999
      %v1001 = vsel %vm856, %v820, 0.0
      %1002 = vadd.xlane.f32.xlu0 %v1001
      %v1003 = vpop.xlane.xlu0 %1002
      %v1004 = vmul.f32 %v970, %v875
      %v1005 = vmul.f32 %v973, %v875
      %v1006 = vmul.f32 %v976, %v875
      %v1007 = vmul.f32 %v979, %v875
      %v1008 = vmul.f32 %v982, %v875
      %v1009 = vmul.f32 %v985, %v875
      %v1010 = vmul.f32 %v988, %v875
      %v1011 = vmul.f32 %v991, %v875
      %v1012 = vmul.f32 %v994, %v875
      %v1013 = vmul.f32 %v997, %v875
      %v1014 = vmul.f32 %v1000, %v875
      %v1015 = vmul.f32 %v1003, %v875
      %v1016 = vsub.f32 %v746, %v1004
      %v1017 = vsub.f32 %v748, %v1005
      %v1018 = vsub.f32 %v751, %v1006
      %v1019 = vsub.f32 %v798, %v1007
      %v1020 = vsub.f32 %v800, %v1008
      %v1021 = vsub.f32 %v802, %v1009
      %v1022 = vsub.f32 %v807, %v1010
      %v1023 = vsub.f32 %v809, %v1011
      %v1024 = vsub.f32 %v811, %v1012
      %v1025 = vsub.f32 %v816, %v1013
      %v1026 = vsub.f32 %v818, %v1014
      %v1027 = vsub.f32 %v820, %v1015
      %v1028 = vmul.f32 %v1016, %v1016
      %v1029 = vmul.f32 %v1017, %v1017
      %v1030 = vmul.f32 %v1018, %v1018
      %v1031 = vmul.f32 %v1019, %v1019
      %v1032 = vmul.f32 %v1020, %v1020
      %v1033 = vmul.f32 %v1021, %v1021
      %v1034 = vmul.f32 %v1022, %v1022
      %v1035 = vmul.f32 %v1023, %v1023
      %v1036 = vmul.f32 %v1024, %v1024
      %v1037 = vmul.f32 %v1025, %v1025
      %v1038 = vmul.f32 %v1026, %v1026
      %v1039 = vmul.f32 %v1027, %v1027
      %v1040 = vsel %vm856, %v1028, 0.0
      %1041 = vadd.xlane.f32.xlu0 %v1040
      %v1042 = vpop.xlane.xlu0 %1041
      %v1043 = vsel %vm856, %v1029, 0.0
      %1044 = vadd.xlane.f32.xlu0 %v1043
      %v1045 = vpop.xlane.xlu0 %1044
      %v1046 = vsel %vm856, %v1030, 0.0
      %1047 = vadd.xlane.f32.xlu0 %v1046
      %v1048 = vpop.xlane.xlu0 %1047
      %v1049 = vsel %vm856, %v1031, 0.0
      %1050 = vadd.xlane.f32.xlu0 %v1049
      %v1051 = vpop.xlane.xlu0 %1050
      %v1052 = vsel %vm856, %v1032, 0.0
      %1053 = vadd.xlane.f32.xlu0 %v1052
      %v1054 = vpop.xlane.xlu0 %1053
      %v1055 = vsel %vm856, %v1033, 0.0
      %1056 = vadd.xlane.f32.xlu0 %v1055
      %v1057 = vpop.xlane.xlu0 %1056
      %v1058 = vsel %vm856, %v1034, 0.0
      %1059 = vadd.xlane.f32.xlu0 %v1058
      %v1060 = vpop.xlane.xlu0 %1059
      %v1061 = vsel %vm856, %v1035, 0.0
      %1062 = vadd.xlane.f32.xlu0 %v1061
      %v1063 = vpop.xlane.xlu0 %1062
      %v1064 = vsel %vm856, %v1036, 0.0
      %1065 = vadd.xlane.f32.xlu0 %v1064
      %v1066 = vpop.xlane.xlu0 %1065
      %v1067 = vsel %vm856, %v1037, 0.0
      %1068 = vadd.xlane.f32.xlu0 %v1067
      %v1069 = vpop.xlane.xlu0 %1068
      %v1070 = vsel %vm856, %v1038, 0.0
      %1071 = vadd.xlane.f32.xlu0 %v1070
      %v1072 = vpop.xlane.xlu0 %1071
      %v1073 = vsel %vm856, %v1039, 0.0
      %1074 = vadd.xlane.f32.xlu0 %v1073
      %v1075 = vpop.xlane.xlu0 %1074
      %v1076 = vmul.f32 %v1042, %v875
      %v1077 = vmul.f32 %v1045, %v875
      %v1078 = vmul.f32 %v1048, %v875
      %v1079 = vmul.f32 %v1051, %v875
      %v1080 = vmul.f32 %v1054, %v875
      %v1081 = vmul.f32 %v1057, %v875
      %v1082 = vmul.f32 %v1060, %v875
      %v1083 = vmul.f32 %v1063, %v875
      %v1084 = vmul.f32 %v1066, %v875
      %v1085 = vmul.f32 %v1069, %v875
      %v1086 = vmul.f32 %v1072, %v875
      %v1087 = vmul.f32 %v1075, %v875
      %v1088 = vadd.f32 %v1076, 1e-05
      %v1089 = vadd.f32 %v1077, 1e-05
      %v1090 = vadd.f32 %v1078, 1e-05
      %v1091 = vadd.f32 %v1079, 1e-05
      %v1092 = vadd.f32 %v1080, 1e-05
      %v1093 = vadd.f32 %v1081, 1e-05
      %v1094 = vadd.f32 %v1082, 1e-05
      %v1095 = vadd.f32 %v1083, 1e-05
      %v1096 = vadd.f32 %v1084, 1e-05
      %v1097 = vadd.f32 %v1085, 1e-05
      %v1098 = vadd.f32 %v1086, 1e-05
      %v1099 = vadd.f32 %v1087, 1e-05
      %v1100 = vrsqrt.pop %v1088
      %v1101 = vmul.f32 %v1100, %v1088
      %v1102 = vmul.f32 %v1101, %v1100
      %v1103 = vmul.f32 0.5, %v1102
      %v1104 = vsub.f32 1.5, %v1103
      %v1105 = vmul.f32 %v1100, %v1104
      %vm1106 = vweird.f32 %v1088
      %vm1107 = vweird.f32 %v1100
      %vm1108 = vmor %vm1106, %vm1107
      %v1109 = vsel %vm1108, %v1100, %v1105
      %v1110 = vrsqrt.pop %v1089
      %v1111 = vmul.f32 %v1110, %v1089
      %v1112 = vmul.f32 %v1111, %v1110
      %v1113 = vmul.f32 0.5, %v1112
      %v1114 = vsub.f32 1.5, %v1113
      %v1115 = vmul.f32 %v1110, %v1114
      %vm1116 = vweird.f32 %v1089
      %vm1117 = vweird.f32 %v1110
      %vm1118 = vmor %vm1116, %vm1117
      %v1119 = vsel %vm1118, %v1110, %v1115
      %v1120 = vrsqrt.pop %v1090
      %v1121 = vmul.f32 %v1120, %v1090
      %v1122 = vmul.f32 %v1121, %v1120
      %v1123 = vmul.f32 0.5, %v1122
      %v1124 = vsub.f32 1.5, %v1123
      %v1125 = vmul.f32 %v1120, %v1124
      %vm1126 = vweird.f32 %v1090
      %vm1127 = vweird.f32 %v1120
      %vm1128 = vmor %vm1126, %vm1127
      %v1129 = vsel %vm1128, %v1120, %v1125
      %v1130 = vrsqrt.pop %v1091
      %v1131 = vmul.f32 %v1130, %v1091
      %v1132 = vmul.f32 %v1131, %v1130
      %v1133 = vmul.f32 0.5, %v1132
      %v1134 = vsub.f32 1.5, %v1133
      %v1135 = vmul.f32 %v1130, %v1134
      %vm1136 = vweird.f32 %v1091
      %vm1137 = vweird.f32 %v1130
      %vm1138 = vmor %vm1136, %vm1137
      %v1139 = vsel %vm1138, %v1130, %v1135
      %v1140 = vrsqrt.pop %v1092
      %v1141 = vmul.f32 %v1140, %v1092
      %v1142 = vmul.f32 %v1141, %v1140
      %v1143 = vmul.f32 0.5, %v1142
      %v1144 = vsub.f32 1.5, %v1143
      %v1145 = vmul.f32 %v1140, %v1144
      %vm1146 = vweird.f32 %v1092
      %vm1147 = vweird.f32 %v1140
      %vm1148 = vmor %vm1146, %vm1147
      %v1149 = vsel %vm1148, %v1140, %v1145
      %v1150 = vrsqrt.pop %v1093
      %v1151 = vmul.f32 %v1150, %v1093
      %v1152 = vmul.f32 %v1151, %v1150
      %v1153 = vmul.f32 0.5, %v1152
      %v1154 = vsub.f32 1.5, %v1153
      %v1155 = vmul.f32 %v1150, %v1154
      %vm1156 = vweird.f32 %v1093
      %vm1157 = vweird.f32 %v1150
      %vm1158 = vmor %vm1156, %vm1157
      %v1159 = vsel %vm1158, %v1150, %v1155
      %v1160 = vrsqrt.pop %v1094
      %v1161 = vmul.f32 %v1160, %v1094
      %v1162 = vmul.f32 %v1161, %v1160
      %v1163 = vmul.f32 0.5, %v1162
      %v1164 = vsub.f32 1.5, %v1163
      %v1165 = vmul.f32 %v1160, %v1164
      %vm1166 = vweird.f32 %v1094
      %vm1167 = vweird.f32 %v1160
      %vm1168 = vmor %vm1166, %vm1167
      %v1169 = vsel %vm1168, %v1160, %v1165
      %v1170 = vrsqrt.pop %v1095
      %v1171 = vmul.f32 %v1170, %v1095
      %v1172 = vmul.f32 %v1171, %v1170
      %v1173 = vmul.f32 0.5, %v1172
      %v1174 = vsub.f32 1.5, %v1173
      %v1175 = vmul.f32 %v1170, %v1174
      %vm1176 = vweird.f32 %v1095
      %vm1177 = vweird.f32 %v1170
      %vm1178 = vmor %vm1176, %vm1177
      %v1179 = vsel %vm1178, %v1170, %v1175
      %v1180 = vrsqrt.pop %v1096
      %v1181 = vmul.f32 %v1180, %v1096
      %v1182 = vmul.f32 %v1181, %v1180
      %v1183 = vmul.f32 0.5, %v1182
      %v1184 = vsub.f32 1.5, %v1183
      %v1185 = vmul.f32 %v1180, %v1184
      %vm1186 = vweird.f32 %v1096
      %vm1187 = vweird.f32 %v1180
      %vm1188 = vmor %vm1186, %vm1187
      %v1189 = vsel %vm1188, %v1180, %v1185
      %v1190 = vrsqrt.pop %v1097
      %v1191 = vmul.f32 %v1190, %v1097
      %v1192 = vmul.f32 %v1191, %v1190
      %v1193 = vmul.f32 0.5, %v1192
      %v1194 = vsub.f32 1.5, %v1193
      %v1195 = vmul.f32 %v1190, %v1194
      %vm1196 = vweird.f32 %v1097
      %vm1197 = vweird.f32 %v1190
      %vm1198 = vmor %vm1196, %vm1197
      %v1199 = vsel %vm1198, %v1190, %v1195
      %v1200 = vrsqrt.pop %v1098
      %v1201 = vmul.f32 %v1200, %v1098
      %v1202 = vmul.f32 %v1201, %v1200
      %v1203 = vmul.f32 0.5, %v1202
      %v1204 = vsub.f32 1.5, %v1203
      %v1205 = vmul.f32 %v1200, %v1204
      %vm1206 = vweird.f32 %v1098
      %vm1207 = vweird.f32 %v1200
      %vm1208 = vmor %vm1206, %vm1207
      %v1209 = vsel %vm1208, %v1200, %v1205
      %v1210 = vrsqrt.pop %v1099
      %v1211 = vmul.f32 %v1210, %v1099
      %v1212 = vmul.f32 %v1211, %v1210
      %v1213 = vmul.f32 0.5, %v1212
      %v1214 = vsub.f32 1.5, %v1213
      %v1215 = vmul.f32 %v1210, %v1214
      %vm1216 = vweird.f32 %v1099
      %vm1217 = vweird.f32 %v1210
      %vm1218 = vmor %vm1216, %vm1217
      %v1219 = vsel %vm1218, %v1210, %v1215
      %v1220 = vmul.f32 %v1016, %v1109
      %v1221 = vmul.f32 %v1017, %v1119
      %v1222 = vmul.f32 %v1018, %v1129
      %v1223 = vmul.f32 %v1019, %v1139
      %v1224 = vmul.f32 %v1020, %v1149
      %v1225 = vmul.f32 %v1021, %v1159
      %v1226 = vmul.f32 %v1022, %v1169
      %v1227 = vmul.f32 %v1023, %v1179
      %v1228 = vmul.f32 %v1024, %v1189
      %v1229 = vmul.f32 %v1025, %v1199
      %v1230 = vmul.f32 %v1026, %v1209
      %v1231 = vmul.f32 %v1027, %v1219
      %v1233 = vperm.slane %v966, 0
      %v1235 = vmul.f32 %v1220, %v1233
      %v1236 = vmul.f32 %v1221, %v1233
      %v1237 = vmul.f32 %v1222, %v1233
      %v1238 = vmul.f32 %v1223, %v1233
      %v1239 = vmul.f32 %v1224, %v1233
      %v1240 = vmul.f32 %v1225, %v1233
      %v1241 = vmul.f32 %v1226, %v1233
      %v1242 = vmul.f32 %v1227, %v1233
      %v1243 = vmul.f32 %v1228, %v1233
      %v1244 = vmul.f32 %v1229, %v1233
      %v1245 = vmul.f32 %v1230, %v1233
      %v1246 = vmul.f32 %v1231, %v1233
      %v1248 = vperm.slane %v967, 0
      %v1250 = vadd.f32 %v1235, %v1248
      %v1251 = vadd.f32 %v1236, %v1248
      %v1252 = vadd.f32 %v1237, %v1248
      %v1253 = vadd.f32 %v1238, %v1248
      %v1254 = vadd.f32 %v1239, %v1248
      %v1255 = vadd.f32 %v1240, %v1248
      %v1256 = vadd.f32 %v1241, %v1248
      %v1257 = vadd.f32 %v1242, %v1248
      %v1258 = vadd.f32 %v1243, %v1248
      %v1259 = vadd.f32 %v1244, %v1248
      %v1260 = vadd.f32 %v1245, %v1248
      %v1261 = vadd.f32 %v1246, %v1248
      %v1262 = vpack.c.bf16 %v962, %v962
      %v1263 = vpack.c.bf16 %v963, %v963
      %v1264 = vpack.c.bf16 %v964, %v964
      %v1265 = vpack.c.bf16 %v965, %v965
      %v1266 = vpack.c.bf16 %v1250, %v1250
      %v1267 = vpack.c.bf16 %v1251, %v1251
      %v1268 = vpack.c.bf16 %v1252, %v1252
      %v1269 = vpack.c.bf16 %v1253, %v1253
      %v1270 = vpack.c.bf16 %v1254, %v1254
      %v1271 = vpack.c.bf16 %v1255, %v1255
      %v1272 = vpack.c.bf16 %v1256, %v1256
      %v1273 = vpack.c.bf16 %v1257, %v1257
      %v1274 = vpack.c.bf16 %v1258, %v1258
      %v1275 = vpack.c.bf16 %v1259, %v1259
      %v1276 = vpack.c.bf16 %v1260, %v1260
      %v1277 = vpack.c.bf16 %v1261, %v1261
      %v1281 = vunpack.c.l.b16 %v1266
      %v1282 = vunpack.c.l.b16 %v1267
      %v1283 = vunpack.c.l.b16 %v1268
      %v1284 = vpack.c.b16 %v1282, %v1281
      %v1285 = vpack.c.b16 %v1283, %v1283
      %v1287 = vsel %vm856, %v1262, 0
      %v1290 = vsel %vm856, %v1284, 0
      %v1293 = vsel %vm856, %v1285, 0
      %1295 = vmatpush.bf16.xpose.msra.mxu0 0
      %1296 = vmatpush.bf16.xpose.msra.mxu0 0
      %1297 = vmatpush.bf16.xpose.msra.mxu0 0
      %1298 = vmatpush.bf16.xpose.msra.mxu0 0
      %1299 = vmatpush.bf16.xpose.msra.mxu0 0
      %1300 = vmatpush.bf16.xpose.msra.mxu0 0
      %1301 = vmatpush.bf16.xpose.msra.mxu0 %v1293
      %1302 = vmatpush.bf16.xpose.msra.mxu0 %v1290
      %1303 = vmatmul.bf16.gmra.mxu0 %v1287
      %v1304 = vpop.f32.mrf.mxu0
      %v1305 = vadd.f32 0.0, %v1304
      %v1306 = vpop.f32.mrf.mxu0
      %1307 = vdwg.mxu0
      %v1311 = vunpack.c.l.b16 %v1269
      %v1312 = vunpack.c.l.b16 %v1270
      %v1313 = vunpack.c.l.b16 %v1271
      %v1314 = vpack.c.b16 %v1312, %v1311
      %v1315 = vpack.c.b16 %v1313, %v1313
      %v1317 = vsel %vm856, %v1263, 0
      %v1320 = vsel %vm856, %v1314, 0
      %v1323 = vsel %vm856, %v1315, 0
      %1325 = vmatpush.bf16.xpose.msra.mxu0 0
      %1326 = vmatpush.bf16.xpose.msra.mxu0 0
      %1327 = vmatpush.bf16.xpose.msra.mxu0 0
      %1328 = vmatpush.bf16.xpose.msra.mxu0 0
      %1329 = vmatpush.bf16.xpose.msra.mxu0 0
      %1330 = vmatpush.bf16.xpose.msra.mxu0 0
      %1331 = vmatpush.bf16.xpose.msra.mxu0 %v1323
      %1332 = vmatpush.bf16.xpose.msra.mxu0 %v1320
      %1333 = vmatmul.bf16.gmra.mxu0 %v1317
      %v1334 = vpop.f32.mrf.mxu0
      %v1335 = vadd.f32 0.0, %v1334
      %v1336 = vpop.f32.mrf.mxu0
      %1337 = vdwg.mxu0
      %v1341 = vunpack.c.l.b16 %v1272
      %v1342 = vunpack.c.l.b16 %v1273
      %v1343 = vunpack.c.l.b16 %v1274
      %v1344 = vpack.c.b16 %v1342, %v1341
      %v1345 = vpack.c.b16 %v1343, %v1343
      %v1347 = vsel %vm856, %v1264, 0
      %v1350 = vsel %vm856, %v1344, 0
      %v1353 = vsel %vm856, %v1345, 0
      %1355 = vmatpush.bf16.xpose.msra.mxu0 0
      %1356 = vmatpush.bf16.xpose.msra.mxu0 0
      %1357 = vmatpush.bf16.xpose.msra.mxu0 0
      %1358 = vmatpush.bf16.xpose.msra.mxu0 0
      %1359 = vmatpush.bf16.xpose.msra.mxu0 0
      %1360 = vmatpush.bf16.xpose.msra.mxu0 0
      %1361 = vmatpush.bf16.xpose.msra.mxu0 %v1353
      %1362 = vmatpush.bf16.xpose.msra.mxu0 %v1350
      %1363 = vmatmul.bf16.gmra.mxu0 %v1347
      %v1364 = vpop.f32.mrf.mxu0
      %v1365 = vadd.f32 0.0, %v1364
      %v1366 = vpop.f32.mrf.mxu0
      %1367 = vdwg.mxu0
      %v1371 = vunpack.c.l.b16 %v1275
      %v1372 = vunpack.c.l.b16 %v1276
      %v1373 = vunpack.c.l.b16 %v1277
      %v1374 = vpack.c.b16 %v1372, %v1371
      %v1375 = vpack.c.b16 %v1373, %v1373
      %v1377 = vsel %vm856, %v1265, 0
      %v1380 = vsel %vm856, %v1374, 0
      %v1383 = vsel %vm856, %v1375, 0
      %1385 = vmatpush.bf16.xpose.msra.mxu0 0
      %1386 = vmatpush.bf16.xpose.msra.mxu0 0
      %1387 = vmatpush.bf16.xpose.msra.mxu0 0
      %1388 = vmatpush.bf16.xpose.msra.mxu0 0
      %1389 = vmatpush.bf16.xpose.msra.mxu0 0
      %1390 = vmatpush.bf16.xpose.msra.mxu0 0
      %1391 = vmatpush.bf16.xpose.msra.mxu0 %v1383
      %1392 = vmatpush.bf16.xpose.msra.mxu0 %v1380
      %1393 = vmatmul.bf16.gmra.mxu0 %v1377
      %v1394 = vpop.f32.mrf.mxu0
      %v1395 = vadd.f32 0.0, %v1394
      %v1396 = vpop.f32.mrf.mxu0
      %1397 = vdwg.mxu0
      %vm1398 = vcmask 195584
      %v1399 = vsel %vm1398, %v1305, -inf
      %1400 = vmax.xlane.f32.xlu0 %v1399
      %v1401 = vpop.xlane.xlu0 %1400
      %v1402 = vsel %vm1398, %v1335, -inf
      %1403 = vmax.xlane.f32.xlu0 %v1402
      %v1404 = vpop.xlane.xlu0 %1403
      %v1405 = vsel %vm1398, %v1365, -inf
      %1406 = vmax.xlane.f32.xlu0 %v1405
      %v1407 = vpop.xlane.xlu0 %1406
      %v1408 = vsel %vm1398, %v1395, -inf
      %1409 = vmax.xlane.f32.xlu0 %v1408
      %v1410 = vpop.xlane.xlu0 %1409
      %v1411 = vsub.f32 %v1305, %v1401
      %v1412 = vsub.f32 %v1335, %v1404
      %v1413 = vsub.f32 %v1365, %v1407
      %v1414 = vsub.f32 %v1395, %v1410
      %v1415 = vmul.f32 %v1411, 1.442695
      %v1416 = vpow.pop %v1415
      %v1417 = vmul.f32 %v1412, 1.442695
      %v1418 = vpow.pop %v1417
      %v1419 = vmul.f32 %v1413, 1.442695
      %v1420 = vpow.pop %v1419
      %v1421 = vmul.f32 %v1414, 1.442695
      %v1422 = vpow.pop %v1421
      %v1423 = vsel %vm1398, %v1416, 0.0
      %1424 = vadd.xlane.f32.xlu0 %v1423
      %v1425 = vpop.xlane.xlu0 %1424
      %v1426 = vsel %vm1398, %v1418, 0.0
      %1427 = vadd.xlane.f32.xlu0 %v1426
      %v1428 = vpop.xlane.xlu0 %1427
      %v1429 = vsel %vm1398, %v1420, 0.0
      %1430 = vadd.xlane.f32.xlu0 %v1429
      %v1431 = vpop.xlane.xlu0 %1430
      %v1432 = vsel %vm1398, %v1422, 0.0
      %1433 = vadd.xlane.f32.xlu0 %v1432
      %v1434 = vpop.xlane.xlu0 %1433
      %v1435 = vrcp.pop %v1425
      %v1436 = vrcp.pop %v1428
      %v1437 = vrcp.pop %v1431
      %v1438 = vrcp.pop %v1434
      %v1439 = vmul.f32 %v1416, %v1435
      %v1440 = vmul.f32 %v1418, %v1436
      %v1441 = vmul.f32 %v1420, %v1437
      %v1442 = vmul.f32 %v1422, %v1438
      %v1443 = vpack.c.bf16 %v1439, %v1439
      %v1444 = vpack.c.bf16 %v1440, %v1440
      %v1445 = vpack.c.bf16 %v1441, %v1441
      %v1446 = vpack.c.bf16 %v1442, %v1442
      %v1447 = vpack.c.bf16 %v776, %v776
      %v1448 = vpack.c.bf16 %v778, %v778
      %v1449 = vpack.c.bf16 %v781, %v781
      %v1450 = vpack.c.bf16 %v828, %v828
      %v1451 = vpack.c.bf16 %v830, %v830
      %v1452 = vpack.c.bf16 %v832, %v832
      %v1453 = vpack.c.bf16 %v837, %v837
      %v1454 = vpack.c.bf16 %v839, %v839
      %v1455 = vpack.c.bf16 %v841, %v841
      %v1456 = vpack.c.bf16 %v846, %v846
      %v1457 = vpack.c.bf16 %v848, %v848
      %v1458 = vpack.c.bf16 %v850, %v850
      %v1462 = vunpack.c.l.b16 %v1447
      %v1463 = vunpack.c.l.b16 %v1448
      %v1464 = vunpack.c.l.b16 %v1449
      %v1465 = vpack.c.b16 %v1463, %v1462
      %v1466 = vpack.c.b16 %v1464, %v1464
      %v1469 = vsel %vm1398, %v1443, 0
      %vm1471 = vcmask 1043456
      %v1473 = vsel %vm1471, %v1466, 0
      %1475 = vmatpush.bf16.msra.mxu0 0
      %1476 = vmatpush.bf16.msra.mxu0 0
      %1477 = vmatpush.bf16.msra.mxu0 0
      %1478 = vmatpush.bf16.msra.mxu0 0
      %1479 = vmatpush.bf16.msra.mxu0 0
      %1480 = vmatpush.bf16.msra.mxu0 0
      %1481 = vmatpush.bf16.msra.mxu0 %v1473
      %1482 = vmatpush.bf16.msra.mxu0 %v1465
      %1483 = vmatmul.bf16.gmra.mxu0 %v1469
      %v1484 = vpop.f32.mrf.mxu0
      %v1485 = vadd.f32 0.0, %v1484
      %v1486 = vpop.f32.mrf.mxu0
      %1487 = vdwg.mxu0
      %v1491 = vunpack.c.l.b16 %v1450
      %v1492 = vunpack.c.l.b16 %v1451
      %v1493 = vunpack.c.l.b16 %v1452
      %v1494 = vpack.c.b16 %v1492, %v1491
      %v1495 = vpack.c.b16 %v1493, %v1493
      %v1498 = vsel %vm1398, %v1444, 0
      %v1501 = vsel %vm1471, %v1495, 0
      %1503 = vmatpush.bf16.msra.mxu0 0
      %1504 = vmatpush.bf16.msra.mxu0 0
      %1505 = vmatpush.bf16.msra.mxu0 0
      %1506 = vmatpush.bf16.msra.mxu0 0
      %1507 = vmatpush.bf16.msra.mxu0 0
      %1508 = vmatpush.bf16.msra.mxu0 0
      %1509 = vmatpush.bf16.msra.mxu0 %v1501
      %1510 = vmatpush.bf16.msra.mxu0 %v1494
      %1511 = vmatmul.bf16.gmra.mxu0 %v1498
      %v1512 = vpop.f32.mrf.mxu0
      %v1513 = vadd.f32 0.0, %v1512
      %v1514 = vpop.f32.mrf.mxu0
      %1515 = vdwg.mxu0
      %v1519 = vunpack.c.l.b16 %v1453
      %v1520 = vunpack.c.l.b16 %v1454
      %v1521 = vunpack.c.l.b16 %v1455
      %v1522 = vpack.c.b16 %v1520, %v1519
      %v1523 = vpack.c.b16 %v1521, %v1521
      %v1526 = vsel %vm1398, %v1445, 0
      %v1529 = vsel %vm1471, %v1523, 0
      %1531 = vmatpush.bf16.msra.mxu0 0
      %1532 = vmatpush.bf16.msra.mxu0 0
      %1533 = vmatpush.bf16.msra.mxu0 0
      %1534 = vmatpush.bf16.msra.mxu0 0
      %1535 = vmatpush.bf16.msra.mxu0 0
      %1536 = vmatpush.bf16.msra.mxu0 0
      %1537 = vmatpush.bf16.msra.mxu0 %v1529
      %1538 = vmatpush.bf16.msra.mxu0 %v1522
      %1539 = vmatmul.bf16.gmra.mxu0 %v1526
      %v1540 = vpop.f32.mrf.mxu0
      %v1541 = vadd.f32 0.0, %v1540
      %v1542 = vpop.f32.mrf.mxu0
      %1543 = vdwg.mxu0
      %v1547 = vunpack.c.l.b16 %v1456
      %v1548 = vunpack.c.l.b16 %v1457
      %v1549 = vunpack.c.l.b16 %v1458
      %v1550 = vpack.c.b16 %v1548, %v1547
      %v1551 = vpack.c.b16 %v1549, %v1549
      %v1554 = vsel %vm1398, %v1446, 0
      %v1557 = vsel %vm1471, %v1551, 0
      %1559 = vmatpush.bf16.msra.mxu0 0
      %1560 = vmatpush.bf16.msra.mxu0 0
      %1561 = vmatpush.bf16.msra.mxu0 0
      %1562 = vmatpush.bf16.msra.mxu0 0
      %1563 = vmatpush.bf16.msra.mxu0 0
      %1564 = vmatpush.bf16.msra.mxu0 0
      %1565 = vmatpush.bf16.msra.mxu0 %v1557
      %1566 = vmatpush.bf16.msra.mxu0 %v1550
      %1567 = vmatmul.bf16.gmra.mxu0 %v1554
      %v1568 = vpop.f32.mrf.mxu0
      %v1569 = vadd.f32 0.0, %v1568
      %v1570 = vpop.f32.mrf.mxu0
      %1571 = vdwg.mxu0
      %v1572 = vld [vmem:[%s9] sm:$0xff]
      %v1573 = vld [vmem:[%s9 + $0x8] sm:$0xff]
      %v1574 = vld [vmem:[%s9 + $0x10] sm:$0xff]
      %v1575 = vld [vmem:[%s9 + $0x18] sm:$0xff]
      %v1576 = vld [vmem:[%s9 + $0x20] sm:$0xff]
      %v1577 = vld [vmem:[%s9 + $0x28] sm:$0xff]
      %v1578 = vld [vmem:[%s9 + $0x30] sm:$0xff]
      %v1579 = vld [vmem:[%s9 + $0x38] sm:$0xff]
      %v1580 = vpack.c.bf16 %v1485, %v1485
      %v1581 = vpack.c.bf16 %v1513, %v1513
      %v1582 = vpack.c.bf16 %v1541, %v1541
      %v1583 = vpack.c.bf16 %v1569, %v1569
      %v1584 = vpack.c.bf16 %v1572, %v1572
      %v1585 = vpack.c.bf16 %v1573, %v1573
      %v1586 = vpack.c.bf16 %v1574, %v1574
      %v1587 = vpack.c.bf16 %v1575, %v1575
      %v1588 = vpack.c.bf16 %v1576, %v1576
      %v1589 = vpack.c.bf16 %v1577, %v1577
      %v1590 = vpack.c.bf16 %v1578, %v1578
      %v1591 = vpack.c.bf16 %v1579, %v1579
      %v1594 = vunpack.c.l.b16 %v1584
      %v1595 = vunpack.c.l.b16 %v1585
      %v1596 = vpack.c.b16 %v1595, %v1594
      %v1599 = vsel %vm856, %v1580, 0
      %1601 = vmatpush.bf16.msra.mxu0 0
      %1602 = vmatpush.bf16.msra.mxu0 0
      %1603 = vmatpush.bf16.msra.mxu0 0
      %1604 = vmatpush.bf16.msra.mxu0 0
      %1605 = vmatpush.bf16.msra.mxu0 0
      %1606 = vmatpush.bf16.msra.mxu0 0
      %1607 = vmatpush.bf16.msra.mxu0 0
      %1608 = vmatpush.bf16.msra.mxu0 %v1596
      %1609 = vmatmul.bf16.gmra.mxu0 %v1599
      %v1610 = vpop.f32.mrf.mxu0
      %v1611 = vadd.f32 0.0, %v1610
      %v1612 = vpop.f32.mrf.mxu0
      %1613 = vdwg.mxu0
      %v1616 = vunpack.c.l.b16 %v1586
      %v1617 = vunpack.c.l.b16 %v1587
      %v1618 = vpack.c.b16 %v1617, %v1616
      %v1621 = vsel %vm856, %v1581, 0
      %1623 = vmatpush.bf16.msra.mxu0 0
      %1624 = vmatpush.bf16.msra.mxu0 0
      %1625 = vmatpush.bf16.msra.mxu0 0
      %1626 = vmatpush.bf16.msra.mxu0 0
      %1627 = vmatpush.bf16.msra.mxu0 0
      %1628 = vmatpush.bf16.msra.mxu0 0
      %1629 = vmatpush.bf16.msra.mxu0 0
      %1630 = vmatpush.bf16.msra.mxu0 %v1618
      %1631 = vmatmul.bf16.gmra.mxu0 %v1621
      %v1632 = vpop.f32.mrf.mxu0
      %v1633 = vadd.f32 0.0, %v1632
      %v1634 = vpop.f32.mrf.mxu0
      %1635 = vdwg.mxu0
      %v1638 = vunpack.c.l.b16 %v1588
      %v1639 = vunpack.c.l.b16 %v1589
      %v1640 = vpack.c.b16 %v1639, %v1638
      %v1643 = vsel %vm856, %v1582, 0
      %1645 = vmatpush.bf16.msra.mxu0 0
      %1646 = vmatpush.bf16.msra.mxu0 0
      %1647 = vmatpush.bf16.msra.mxu0 0
      %1648 = vmatpush.bf16.msra.mxu0 0
      %1649 = vmatpush.bf16.msra.mxu0 0
      %1650 = vmatpush.bf16.msra.mxu0 0
      %1651 = vmatpush.bf16.msra.mxu0 0
      %1652 = vmatpush.bf16.msra.mxu0 %v1640
      %1653 = vmatmul.bf16.gmra.mxu0 %v1643
      %v1654 = vpop.f32.mrf.mxu0
      %v1655 = vadd.f32 0.0, %v1654
      %v1656 = vpop.f32.mrf.mxu0
      %1657 = vdwg.mxu0
      %v1660 = vunpack.c.l.b16 %v1590
      %v1661 = vunpack.c.l.b16 %v1591
      %v1662 = vpack.c.b16 %v1661, %v1660
      %v1665 = vsel %vm856, %v1583, 0
      %1667 = vmatpush.bf16.msra.mxu0 0
      %1668 = vmatpush.bf16.msra.mxu0 0
      %1669 = vmatpush.bf16.msra.mxu0 0
      %1670 = vmatpush.bf16.msra.mxu0 0
      %1671 = vmatpush.bf16.msra.mxu0 0
      %1672 = vmatpush.bf16.msra.mxu0 0
      %1673 = vmatpush.bf16.msra.mxu0 0
      %1674 = vmatpush.bf16.msra.mxu0 %v1662
      %1675 = vmatmul.bf16.gmra.mxu0 %v1665
      %v1676 = vpop.f32.mrf.mxu0
      %v1677 = vadd.f32 0.0, %v1676
      %v1678 = vpop.f32.mrf.mxu0
      %1679 = vdwg.mxu0
      %v1680 = vadd.f32 %v1611, %v1633
      %v1681 = vadd.f32 %v1680, %v1655
      %v1682 = vadd.f32 %v1681, %v1677
      %v1683 = vadd.f32 %v1682, %v594
      %v1684 = vld [vmem:[%s14] sm:$0x1]
      %v1685 = vld [vmem:[%s15] sm:$0x1]
      %v1686 = vsel %vm597, %v1683, 0.0
      %1687 = vadd.xlane.f32.xlu0 %v1686
      %v1688 = vpop.xlane.xlu0 %1687
      %v1689 = vmul.f32 %v1688, %v610
      %v1690 = vsub.f32 %v1683, %v1689
      %v1691 = vmul.f32 %v1690, %v1690
      %v1692 = vsel %vm597, %v1691, 0.0
      %1693 = vadd.xlane.f32.xlu0 %v1692
      %v1694 = vpop.xlane.xlu0 %1693
      %v1695 = vmul.f32 %v1694, %v610
      %v1696 = vadd.f32 %v1695, 1e-05
      %v1697 = vrsqrt.pop %v1696
      %v1698 = vmul.f32 %v1697, %v1696
      %v1699 = vmul.f32 %v1698, %v1697
      %v1700 = vmul.f32 0.5, %v1699
      %v1701 = vsub.f32 1.5, %v1700
      %v1702 = vmul.f32 %v1697, %v1701
      %vm1703 = vweird.f32 %v1696
      %vm1704 = vweird.f32 %v1697
      %vm1705 = vmor %vm1703, %vm1704
      %v1706 = vsel %vm1705, %v1697, %v1702
      %v1707 = vmul.f32 %v1690, %v1706
      %v1709 = vperm.slane %v1684, 0
      %v1711 = vmul.f32 %v1707, %v1709
      %v1713 = vperm.slane %v1685, 0
      %v1715 = vadd.f32 %v1711, %v1713
      %v1716 = vld [vmem:[%s16] sm:$0xff]
      %v1717 = vld [vmem:[%s16 + $0x8] sm:$0xff]
      %v1718 = vld [vmem:[%s16 + $0x10] sm:$0xff]
      %v1719 = vld [vmem:[%s16 + $0x18] sm:$0xff]
      %v1720 = vld [vmem:[%s16 + $0x20] sm:$0xff]
      %v1721 = vld [vmem:[%s16 + $0x28] sm:$0xff]
      %v1722 = vld [vmem:[%s16 + $0x30] sm:$0xff]
      %v1723 = vld [vmem:[%s16 + $0x38] sm:$0xff]
      %v1724 = vld [vmem:[%s16 + $0x40] sm:$0xff]
      %v1725 = vld [vmem:[%s16 + $0x48] sm:$0xff]
      %v1726 = vld [vmem:[%s16 + $0x50] sm:$0xff]
      %v1727 = vld [vmem:[%s16 + $0x58] sm:$0xff]
      %v1728 = vld [vmem:[%s16 + $0x60] sm:$0xff]
      %v1729 = vld [vmem:[%s16 + $0x68] sm:$0xff]
      %v1730 = vld [vmem:[%s16 + $0x70] sm:$0xff]
      %v1731 = vld [vmem:[%s16 + $0x78] sm:$0xff]
      %v1732 = vpack.c.bf16 %v1715, %v1715
      %v1733 = vpack.c.bf16 %v1718, %v1716
      %v1734 = vpack.c.bf16 %v1719, %v1717
      %v1735 = vpack.c.bf16 %v1722, %v1720
      %v1736 = vpack.c.bf16 %v1723, %v1721
      %v1737 = vpack.c.bf16 %v1726, %v1724
      %v1738 = vpack.c.bf16 %v1727, %v1725
      %v1739 = vpack.c.bf16 %v1730, %v1728
      %v1740 = vpack.c.bf16 %v1731, %v1729
      %v1742 = vsel %vm597, %v1732, 0
      %1744 = vmatpush.bf16.msra.mxu0 0
      %1745 = vmatpush.bf16.msra.mxu0 0
      %1746 = vmatpush.bf16.msra.mxu0 0
      %1747 = vmatpush.bf16.msra.mxu0 0
      %1748 = vmatpush.bf16.msra.mxu0 %v1739
      %1749 = vmatpush.bf16.msra.mxu0 %v1737
      %1750 = vmatpush.bf16.msra.mxu0 %v1735
      %1751 = vmatpush.bf16.msra.mxu0 %v1733
      %1752 = vmatmul.bf16.gmra.mxu0 %v1742
      %v1753 = vpop.f32.mrf.mxu0
      %v1754 = vadd.f32 0.0, %v1753
      %v1755 = vpop.f32.mrf.mxu0
      %1756 = vdwg.mxu0
      %1757 = vmatpush.bf16.msra.mxu0 0
      %1758 = vmatpush.bf16.msra.mxu0 0
      %1759 = vmatpush.bf16.msra.mxu0 0
      %1760 = vmatpush.bf16.msra.mxu0 0
      %1761 = vmatpush.bf16.msra.mxu0 %v1740
      %1762 = vmatpush.bf16.msra.mxu0 %v1738
      %1763 = vmatpush.bf16.msra.mxu0 %v1736
      %1764 = vmatpush.bf16.msra.mxu0 %v1734
      %1765 = vmatmul.bf16.gmra.mxu0 %v1742
      %v1766 = vpop.f32.mrf.mxu0
      %v1767 = vadd.f32 0.0, %v1766
      %v1768 = vpop.f32.mrf.mxu0
      %1769 = vdwg.mxu0
      %v1770 = vmul.f32 %v1754, 0.5
      %v1771 = vmul.f32 %v1767, 0.5
      %v1772 = vmul.f32 %v1754, 0.70710677
      %v1773 = vmul.f32 %v1767, 0.70710677
      %v1774 = vand.u32 2147483647, %v1772
      %v1775 = vand.u32 2147483647, %v1773
      %v1776 = vmul.f32 %v1774, 0.3275911
      %v1777 = vmul.f32 %v1775, 0.3275911
      %v1778 = vadd.f32 %v1776, 1.0
      %v1779 = vadd.f32 %v1777, 1.0
      %v1780 = vrcp.pop %v1778
      %v1781 = vmul.f32 %v1778, %v1780
      %v1782 = vsub.f32 1.0, %v1781
      %v1783 = vmul.f32 %v1780, %v1782
      %v1784 = vadd.f32 %v1780, %v1783
      %vm1785 = vweird.f32 %v1778
      %vm1786 = vweird.f32 %v1780
      %vm1787 = vmor %vm1785, %vm1786
      %v1788 = vsel %vm1787, %v1780, %v1784
      %v1789 = vand.u32 2147483647, %v1778
      %vm1790 = vcmp.eq.f32.partialorder %v1789, 8.507059e+37
      %v1791 = vand.u32 %v1778, 2147483648
      %v1792 = vor.u32 1.1754944e-38, %v1791
      %v1793 = vsel %vm1790, %v1792, %v1788
      %v1794 = vmul.f32 1.0, %v1793
      %v1795 = vrcp.pop %v1779
      %v1796 = vmul.f32 %v1779, %v1795
      %v1797 = vsub.f32 1.0, %v1796
      %v1798 = vmul.f32 %v1795, %v1797
      %v1799 = vadd.f32 %v1795, %v1798
      %vm1800 = vweird.f32 %v1779
      %vm1801 = vweird.f32 %v1795
      %vm1802 = vmor %vm1800, %vm1801
      %v1803 = vsel %vm1802, %v1795, %v1799
      %v1804 = vand.u32 2147483647, %v1779
      %vm1805 = vcmp.eq.f32.partialorder %v1804, 8.507059e+37
      %v1806 = vand.u32 %v1779, 2147483648
      %v1807 = vor.u32 1.1754944e-38, %v1806
      %v1808 = vsel %vm1805, %v1807, %v1803
      %v1809 = vmul.f32 1.0, %v1808
      %v1810 = vmul.f32 %v1794, 1.0614054
      %v1811 = vmul.f32 %v1809, 1.0614054
      %v1812 = vadd.f32 %v1810, -1.4531521
      %v1813 = vadd.f32 %v1811, -1.4531521
      %v1814 = vmul.f32 %v1812, %v1794
      %v1815 = vmul.f32 %v1813, %v1809
      %v1816 = vadd.f32 %v1814, 1.4214138
      %v1817 = vadd.f32 %v1815, 1.4214138
      %v1818 = vmul.f32 %v1816, %v1794
      %v1819 = vmul.f32 %v1817, %v1809
      %v1820 = vadd.f32 %v1818, -0.28449672
      %v1821 = vadd.f32 %v1819, -0.28449672
      %v1822 = vmul.f32 %v1820, %v1794
      %v1823 = vmul.f32 %v1821, %v1809
      %v1824 = vadd.f32 %v1822, 0.2548296
      %v1825 = vadd.f32 %v1823, 0.2548296
      %v1826 = vmul.f32 %v1824, %v1794
      %v1827 = vmul.f32 %v1825, %v1809
      %v1828 = vsub.f32 0.0, %v1774
      %v1829 = vsub.f32 0.0, %v1775
      %v1830 = vmul.f32 %v1828, %v1774
      %v1831 = vmul.f32 %v1829, %v1775
      %v1832 = vmul.f32 %v1830, 1.442695
      %v1833 = vpow.pop %v1832
      %v1834 = vmul.f32 %v1831, 1.442695
      %v1835 = vpow.pop %v1834
      %v1836 = vmul.f32 %v1826, %v1833
      %v1837 = vmul.f32 %v1827, %v1835
      %v1838 = vsub.f32 1.0, %v1836
      %v1839 = vsub.f32 1.0, %v1837
      %vm1840 = vcmp.ge.f32.partialorder %v1772, 0.0
      %vm1841 = vcmp.ge.f32.partialorder %v1773, 0.0
      %v1842 = vsub.f32 0.0, %v1838
      %v1843 = vsub.f32 0.0, %v1839
      %v1844 = vsel %vm1840, %v1838, %v1842
      %v1845 = vsel %vm1841, %v1839, %v1843
      %v1846 = vadd.f32 %v1844, 1.0
      %v1847 = vadd.f32 %v1845, 1.0
      %v1848 = vmul.f32 %v1770, %v1846
      %v1849 = vmul.f32 %v1771, %v1847
      %v1850 = vld [vmem:[%s17] sm:$0xff]
      %v1851 = vld [vmem:[%s17 + $0x8] sm:$0xff]
      %v1852 = vld [vmem:[%s17 + $0x10] sm:$0xff]
      %v1853 = vld [vmem:[%s17 + $0x18] sm:$0xff]
      %v1854 = vld [vmem:[%s17 + $0x20] sm:$0xff]
      %v1855 = vld [vmem:[%s17 + $0x28] sm:$0xff]
      %v1856 = vld [vmem:[%s17 + $0x30] sm:$0xff]
      %v1857 = vld [vmem:[%s17 + $0x38] sm:$0xff]
      %v1858 = vld [vmem:[%s17 + $0x40] sm:$0xff]
      %v1859 = vld [vmem:[%s17 + $0x48] sm:$0xff]
      %v1860 = vld [vmem:[%s17 + $0x50] sm:$0xff]
      %v1861 = vld [vmem:[%s17 + $0x58] sm:$0xff]
      %v1862 = vld [vmem:[%s17 + $0x60] sm:$0xff]
      %v1863 = vld [vmem:[%s17 + $0x68] sm:$0xff]
      %v1864 = vld [vmem:[%s17 + $0x70] sm:$0xff]
      %v1865 = vld [vmem:[%s17 + $0x78] sm:$0xff]
      %v1866 = vld [vmem:[%s17 + $0x80] sm:$0xff]
      %v1867 = vld [vmem:[%s17 + $0x88] sm:$0xff]
      %v1868 = vld [vmem:[%s17 + $0x90] sm:$0xff]
      %v1869 = vld [vmem:[%s17 + $0x98] sm:$0xff]
      %v1870 = vld [vmem:[%s17 + $0xa0] sm:$0xff]
      %v1871 = vld [vmem:[%s17 + $0xa8] sm:$0xff]
      %v1872 = vld [vmem:[%s17 + $0xb0] sm:$0xff]
      %v1873 = vld [vmem:[%s17 + $0xb8] sm:$0xff]
      %v1874 = vld [vmem:[%s17 + $0xc0] sm:$0xff]
      %v1875 = vld [vmem:[%s17 + $0xc8] sm:$0xff]
      %v1876 = vld [vmem:[%s17 + $0xd0] sm:$0xff]
      %v1877 = vld [vmem:[%s17 + $0xd8] sm:$0xff]
      %v1878 = vld [vmem:[%s17 + $0xe0] sm:$0xff]
      %v1879 = vld [vmem:[%s17 + $0xe8] sm:$0xff]
      %v1880 = vld [vmem:[%s17 + $0xf0] sm:$0xff]
      %v1881 = vld [vmem:[%s17 + $0xf8] sm:$0xff]
      %v1882 = vpack.c.bf16 %v1848, %v1848
      %v1883 = vpack.c.bf16 %v1849, %v1849
      %v1884 = vpack.c.bf16 %v1851, %v1850
      %v1885 = vpack.c.bf16 %v1853, %v1852
      %v1886 = vpack.c.bf16 %v1855, %v1854
      %v1887 = vpack.c.bf16 %v1857, %v1856
      %v1888 = vpack.c.bf16 %v1859, %v1858
      %v1889 = vpack.c.bf16 %v1861, %v1860
      %v1890 = vpack.c.bf16 %v1863, %v1862
      %v1891 = vpack.c.bf16 %v1865, %v1864
      %v1892 = vpack.c.bf16 %v1867, %v1866
      %v1893 = vpack.c.bf16 %v1869, %v1868
      %v1894 = vpack.c.bf16 %v1871, %v1870
      %v1895 = vpack.c.bf16 %v1873, %v1872
      %v1896 = vpack.c.bf16 %v1875, %v1874
      %v1897 = vpack.c.bf16 %v1877, %v1876
      %v1898 = vpack.c.bf16 %v1879, %v1878
      %v1899 = vpack.c.bf16 %v1881, %v1880
      %1900 = vmatpush.bf16.msra.mxu0 %v1891
      %1901 = vmatpush.bf16.msra.mxu0 %v1890
      %1902 = vmatpush.bf16.msra.mxu0 %v1889
      %1903 = vmatpush.bf16.msra.mxu0 %v1888
      %1904 = vmatpush.bf16.msra.mxu0 %v1887
      %1905 = vmatpush.bf16.msra.mxu0 %v1886
      %1906 = vmatpush.bf16.msra.mxu0 %v1885
      %1907 = vmatpush.bf16.msra.mxu0 %v1884
      %1908 = vmatmul.bf16.gmra.mxu0 %v1882
      %v1909 = vpop.f32.mrf.mxu0
      %v1910 = vadd.f32 %v1683, %v1909
      %v1911 = vpop.f32.mrf.mxu0
      %1912 = vdwg.mxu0
      %1913 = vmatpush.bf16.msra.mxu0 %v1899
      %1914 = vmatpush.bf16.msra.mxu0 %v1898
      %1915 = vmatpush.bf16.msra.mxu0 %v1897
      %1916 = vmatpush.bf16.msra.mxu0 %v1896
      %1917 = vmatpush.bf16.msra.mxu0 %v1895
      %1918 = vmatpush.bf16.msra.mxu0 %v1894
      %1919 = vmatpush.bf16.msra.mxu0 %v1893
      %1920 = vmatpush.bf16.msra.mxu0 %v1892
      %1921 = vmatmul.bf16.gmra.mxu0 %v1883
      %v1922 = vpop.f32.mrf.mxu0
      %v1923 = vadd.f32 %v1910, %v1922
      %v1924 = vpop.f32.mrf.mxu0
      %1925 = vdwg.mxu0
      %1926 = vst.msk [vmem:[%s590] sm:$0xff] %vm597, %v1923
      %p1927 = scmp.lt.s32.totalorder %s29, 1
      %s1928 = scalar_select %p1927, %s29, 1
      %s1929 = smul.addr %s1928, 8
      %s1930 = scalar_lea.vmem %s18, %s1929
      // Predicated region
      $region93: #{resampler_plus_qk_forward.6} parent=91 // pred_check
        %p1931 = pneg %p435
      $region94: #{resampler_plus_qk_forward.6} parent=91 // pred_check_branch
        %1933 = sbr.rel (%p1931) target = $region96
      $region95: #{resampler_plus_qk_forward.6} parent=91 // pred_region
        _
      $region96: #{resampler_plus_qk_forward.6} parent=91 // pred_fallthru
        _
    $region92: #{resampler_plus_qk_forward.6} parent=5 // pred_fallthru
      _
    %p1934 = scmp.le.s32.totalorder 2, %s24
    // Predicated region
    $region97: #{resampler_plus_qk_forward.6} parent=5 // pred_check
      %p1935 = pneg %p1934
    $region98: #{resampler_plus_qk_forward.6} parent=5 // pred_check_branch
      %1937 = sbr.rel (%p1935) target = $region100
    $region99: #{resampler_plus_qk_forward.6} parent=5 // pred_region
      %s1938 = ssub.s32 %s24, 2
      // Predicated region
      $region101: #{resampler_plus_qk_forward.6} parent=99 // pred_check
        %p1939 = pneg %p441
      $region102: #{resampler_plus_qk_forward.6} parent=99 // pred_check_branch
        %1941 = sbr.rel (%p1939) target = $region104
      $region103: #{resampler_plus_qk_forward.6} parent=99 // pred_region
        %p1942 = scmp.lt.s32.totalorder %s30, 1
        %s1943 = scalar_select %p1942, %s30, 1
        %s1944 = smul.addr %s1943, 8
        %s1945 = scalar_lea.vmem %s18, %s1944
      $region104: #{resampler_plus_qk_forward.6} parent=99 // pred_fallthru
        _
    $region100: #{resampler_plus_qk_forward.6} parent=5 // pred_fallthru
      _
  $region6: #{resampler_plus_qk_forward.6} parent=0 // loop_footer
    %s28 = sadd.s32 1, %s24
  $region7: #{resampler_plus_qk_forward.6} parent=0 // loop_footer_branch
    %23 = sbr.rel target = $region3
  $region8: #{resampler_plus_qk_forward.6} parent=0 // loop_exit
    _

// kernel: resampler_plus_qk_forward.9
$region0: #{resampler_plus_qk_forward.9}
  #allocation0 [shape = 'u32[]', space=smem, size = 0x4, offset = 0x4, fixed_abs, tag = 'smem constant byte address 0x4 - core index']
  #allocation1 [shape = 'u32[72,128]{1,0:T(1,128)}', space=vmem, size = 0x9000, scoped, tag = 'internal scratch']
  %s0 = inlined_call_operand.vmem [shape: f32[2,8,64], index: 0, kind: input, shape index: {}, may-alias: {0,1}]
  %s1 = inlined_call_operand.vmem [shape: f32[2,8,64], index: 1, kind: input, shape index: {}, may-alias: {0,1}]
  %s2 = inlined_call_operand.vmem [shape: f32[1,64], index: 2, kind: input, shape index: {}]
  %s3 = inlined_call_operand.vmem [shape: f32[1,64], index: 3, kind: input, shape index: {}]
  %s4 = inlined_call_operand.vmem [shape: f32[1,64], index: 4, kind: input, shape index: {}]
  %s5 = inlined_call_operand.vmem [shape: f32[1,64], index: 5, kind: input, shape index: {}]
  %s6 = inlined_call_operand.vmem [shape: f32[64,64], index: 6, kind: input, shape index: {}]
  %s7 = inlined_call_operand.vmem [shape: f32[64,64], index: 7, kind: input, shape index: {}]
  %s8 = inlined_call_operand.vmem [shape: f32[64,64], index: 8, kind: input, shape index: {}]
  %s9 = inlined_call_operand.vmem [shape: f32[4,16,64], index: 9, kind: input, shape index: {}]
  %s10 = inlined_call_operand.vmem [shape: f32[1,16], index: 10, kind: input, shape index: {}]
  %s11 = inlined_call_operand.vmem [shape: f32[1,16], index: 11, kind: input, shape index: {}]
  %s12 = inlined_call_operand.vmem [shape: f32[1,16], index: 12, kind: input, shape index: {}]
  %s13 = inlined_call_operand.vmem [shape: f32[1,16], index: 13, kind: input, shape index: {}]
  %s14 = inlined_call_operand.vmem [shape: f32[1,64], index: 14, kind: input, shape index: {}]
  %s15 = inlined_call_operand.vmem [shape: f32[1,64], index: 15, kind: input, shape index: {}]
  %s16 = inlined_call_operand.vmem [shape: f32[64,256], index: 16, kind: input, shape index: {}]
  %s17 = inlined_call_operand.vmem [shape: f32[256,64], index: 17, kind: input, shape index: {}]
  %s18 = inlined_call_operand.vmem [shape: f32[1,64], index: 18, kind: input, shape index: {}]
  %s19 = inlined_call_operand.vmem [shape: f32[1,64], index: 19, kind: input, shape index: {}]
  %s20 = inlined_call_operand.hbm [shape: f32[2,8,64], index: 20, kind: output, shape index: {}]
  %s21 = sld [smem:[#allocation0]]
  $region113: #{resampler_plus_qk_forward.9} parent=0
    _
  %s23 = ssub.s32 1, %s21
  %s24 = scalar_select 0, %s23, %s21
  $region1: #{resampler_plus_qk_forward.9} parent=0
    #allocation2 [shape = 'u8[8192]{0}', space=vmem, size = 0x2000, scoped, tag = 'output window, operand 0']
    #allocation3 [shape = 's32[2]{0}', space=sflag, size = 0x8, scoped, tag = 'scoped memory for resampler_plus_qk_forward.9']
    %25 = vsyncpa [#allocation3], 0
    %s26 = scalar_lea.sflag [#allocation3], 1
    %27 = vsyncpa %s26, 0
    loop: start=0, step=1, limit=4
    $region2: #{resampler_plus_qk_forward.9} parent=1 // loop_pre_header
      _
    $region3: #{resampler_plus_qk_forward.9} parent=1 // loop_header
      %s29 = sphi 0, %s33
      %p30 = scmp.ge.s32.totalorder %s29, 4
      %s39 = sphi 0, %s41
      %s42 = sphi 0, %s39
      %s43 = sphi 0, %s42
      %s59 = sphi 0, %s43
      %s65 = sphi 0, %s67
      %s68 = sphi 0, %s65
      %s69 = sphi 0, %s68
      %s85 = sphi 0, %s69
      %s89 = sphi 0, %s89
      %s91 = sphi 0, %s89
      %s92 = sphi 0, %s91
      %s106 = sphi 0, %s92
      %s110 = sphi 0, %s110
      %s112 = sphi 0, %s110
      %s113 = sphi 0, %s112
      %s127 = sphi 0, %s113
      %s131 = sphi 0, %s131
      %s133 = sphi 0, %s131
      %s134 = sphi 0, %s133
      %s148 = sphi 0, %s134
      %s152 = sphi 0, %s152
      %s154 = sphi 0, %s152
      %s155 = sphi 0, %s154
      %s169 = sphi 0, %s155
      %s173 = sphi 0, %s173
      %s175 = sphi 0, %s173
      %s176 = sphi 0, %s175
      %s190 = sphi 0, %s176
      %s194 = sphi 0, %s194
      %s196 = sphi 0, %s194
      %s197 = sphi 0, %s196
      %s211 = sphi 0, %s197
      %s215 = sphi 0, %s215
      %s217 = sphi 0, %s215
      %s218 = sphi 0, %s217
      %s232 = sphi 0, %s218
      %s236 = sphi 0, %s236
      %s238 = sphi 0, %s236
      %s239 = sphi 0, %s238
      %s253 = sphi 0, %s239
      %s257 = sphi 0, %s257
      %s259 = sphi 0, %s257
      %s260 = sphi 0, %s259
      %s274 = sphi 0, %s260
      %s278 = sphi 0, %s278
      %s280 = sphi 0, %s278
      %s281 = sphi 0, %s280
      %s295 = sphi 0, %s281
      %s299 = sphi 0, %s299
      %s301 = sphi 0, %s299
      %s302 = sphi 0, %s301
      %s316 = sphi 0, %s302
      %s320 = sphi 0, %s320
      %s322 = sphi 0, %s320
      %s323 = sphi 0, %s322
      %s337 = sphi 0, %s323
      %s341 = sphi 0, %s341
      %s343 = sphi 0, %s341
      %s344 = sphi 0, %s343
      %s358 = sphi 0, %s344
      %s362 = sphi 0, %s362
      %s364 = sphi 0, %s362
      %s365 = sphi 0, %s364
      %s379 = sphi 0, %s365
      %s383 = sphi 0, %s383
      %s385 = sphi 0, %s383
      %s386 = sphi 0, %s385
      %s400 = sphi 0, %s386
      %s404 = sphi 0, %s404
      %s406 = sphi 0, %s404
      %s407 = sphi 0, %s406
      %s421 = sphi 0, %s407
      %s425 = sphi 0, %s425
      %s427 = sphi 0, %s425
      %s428 = sphi 0, %s427
      %s442 = sphi 0, %s428
      %s446 = sphi 0, %s446
      %s448 = sphi 0, %s446
      %s449 = sphi 0, %s448
      %s463 = sphi 0, %s449
      %s469 = sphi 0, %s471
      %s472 = sphi 0, %s469
      %s473 = sphi 0, %s472
      %s489 = sphi 0, %s473
    $region4: #{resampler_plus_qk_forward.9} parent=1 // loop_header_branch
      %32 = sbr.rel (%p30) target = $region8
    $region5: #{resampler_plus_qk_forward.9} parent=1 // loop_body
      %s34 = ssub.s32 %s29, 1
      %s35 = ssub.s32 %s29, 2
      %s36 = sadd.s32 %s29, 1
      %s37 = ssub.s32 %s29, %s36
      %p38 = scmp.eq.s32.totalorder %s37, 0
      %s40 = sadd.s32 %s39, 1
      %s41 = scalar_select %p38, %s39, %s40
      %p44 = pneg %p38
      %p45 = scmp.eq.s32.totalorder %s29, 1
      %p46 = por %p44, %p45
      %p47 = scmp.ne.s32.totalorder %s39, %s42
      %p48 = scmp.eq.s32.totalorder %s29, 0
      %p49 = por %p47, %p48
      %p50 = scmp.ne.s32.totalorder %s39, %s42
      %p51 = scmp.eq.s32.totalorder %s34, 1
      %p52 = por %p50, %p51
      %p53 = scmp.ne.s32.totalorder %s42, %s43
      %p54 = scmp.eq.s32.totalorder %s34, 0
      %p55 = por %p53, %p54
      %p56 = scmp.ne.s32.totalorder %s42, %s43
      %p57 = scmp.eq.s32.totalorder %s35, 1
      %p58 = por %p56, %p57
      %p60 = scmp.ne.s32.totalorder %s43, %s59
      %p61 = scmp.eq.s32.totalorder %s35, 0
      %p62 = por %p60, %p61
      %s63 = ssub.s32 %s29, %s36
      %p64 = scmp.eq.s32.totalorder %s63, 0
      %s66 = sadd.s32 %s65, 1
      %s67 = scalar_select %p64, %s65, %s66
      %p70 = pneg %p64
      %p71 = scmp.eq.s32.totalorder %s29, 1
      %p72 = por %p70, %p71
      %p73 = scmp.ne.s32.totalorder %s65, %s68
      %p74 = scmp.eq.s32.totalorder %s29, 0
      %p75 = por %p73, %p74
      %p76 = scmp.ne.s32.totalorder %s65, %s68
      %p77 = scmp.eq.s32.totalorder %s34, 1
      %p78 = por %p76, %p77
      %p79 = scmp.ne.s32.totalorder %s68, %s69
      %p80 = scmp.eq.s32.totalorder %s34, 0
      %p81 = por %p79, %p80
      %p82 = scmp.ne.s32.totalorder %s68, %s69
      %p83 = scmp.eq.s32.totalorder %s35, 1
      %p84 = por %p82, %p83
      %p86 = scmp.ne.s32.totalorder %s69, %s85
      %p87 = scmp.eq.s32.totalorder %s35, 0
      %p88 = por %p86, %p87
      %s90 = sadd.s32 %s89, 1
      %p93 = scmp.eq.s32.totalorder %s29, 1
      %p94 = scmp.ne.s32.totalorder %s89, %s91
      %p95 = scmp.eq.s32.totalorder %s29, 0
      %p96 = por %p94, %p95
      %p97 = scmp.ne.s32.totalorder %s89, %s91
      %p98 = scmp.eq.s32.totalorder %s34, 1
      %p99 = por %p97, %p98
      %p100 = scmp.ne.s32.totalorder %s91, %s92
      %p101 = scmp.eq.s32.totalorder %s34, 0
      %p102 = por %p100, %p101
      %p103 = scmp.ne.s32.totalorder %s91, %s92
      %p104 = scmp.eq.s32.totalorder %s35, 1
      %p105 = por %p103, %p104
      %p107 = scmp.ne.s32.totalorder %s92, %s106
      %p108 = scmp.eq.s32.totalorder %s35, 0
      %p109 = por %p107, %p108
      %s111 = sadd.s32 %s110, 1
      %p114 = scmp.eq.s32.totalorder %s29, 1
      %p115 = scmp.ne.s32.totalorder %s110, %s112
      %p116 = scmp.eq.s32.totalorder %s29, 0
      %p117 = por %p115, %p116
      %p118 = scmp.ne.s32.totalorder %s110, %s112
      %p119 = scmp.eq.s32.totalorder %s34, 1
      %p120 = por %p118, %p119
      %p121 = scmp.ne.s32.totalorder %s112, %s113
      %p122 = scmp.eq.s32.totalorder %s34, 0
      %p123 = por %p121, %p122
      %p124 = scmp.ne.s32.totalorder %s112, %s113
      %p125 = scmp.eq.s32.totalorder %s35, 1
      %p126 = por %p124, %p125
      %p128 = scmp.ne.s32.totalorder %s113, %s127
      %p129 = scmp.eq.s32.totalorder %s35, 0
      %p130 = por %p128, %p129
      %s132 = sadd.s32 %s131, 1
      %p135 = scmp.eq.s32.totalorder %s29, 1
      %p136 = scmp.ne.s32.totalorder %s131, %s133
      %p137 = scmp.eq.s32.totalorder %s29, 0
      %p138 = por %p136, %p137
      %p139 = scmp.ne.s32.totalorder %s131, %s133
      %p140 = scmp.eq.s32.totalorder %s34, 1
      %p141 = por %p139, %p140
      %p142 = scmp.ne.s32.totalorder %s133, %s134
      %p143 = scmp.eq.s32.totalorder %s34, 0
      %p144 = por %p142, %p143
      %p145 = scmp.ne.s32.totalorder %s133, %s134
      %p146 = scmp.eq.s32.totalorder %s35, 1
      %p147 = por %p145, %p146
      %p149 = scmp.ne.s32.totalorder %s134, %s148
      %p150 = scmp.eq.s32.totalorder %s35, 0
      %p151 = por %p149, %p150
      %s153 = sadd.s32 %s152, 1
      %p156 = scmp.eq.s32.totalorder %s29, 1
      %p157 = scmp.ne.s32.totalorder %s152, %s154
      %p158 = scmp.eq.s32.totalorder %s29, 0
      %p159 = por %p157, %p158
      %p160 = scmp.ne.s32.totalorder %s152, %s154
      %p161 = scmp.eq.s32.totalorder %s34, 1
      %p162 = por %p160, %p161
      %p163 = scmp.ne.s32.totalorder %s154, %s155
      %p164 = scmp.eq.s32.totalorder %s34, 0
      %p165 = por %p163, %p164
      %p166 = scmp.ne.s32.totalorder %s154, %s155
      %p167 = scmp.eq.s32.totalorder %s35, 1
      %p168 = por %p166, %p167
      %p170 = scmp.ne.s32.totalorder %s155, %s169
      %p171 = scmp.eq.s32.totalorder %s35, 0
      %p172 = por %p170, %p171
      %s174 = sadd.s32 %s173, 1
      %p177 = scmp.eq.s32.totalorder %s29, 1
      %p178 = scmp.ne.s32.totalorder %s173, %s175
      %p179 = scmp.eq.s32.totalorder %s29, 0
      %p180 = por %p178, %p179
      %p181 = scmp.ne.s32.totalorder %s173, %s175
      %p182 = scmp.eq.s32.totalorder %s34, 1
      %p183 = por %p181, %p182
      %p184 = scmp.ne.s32.totalorder %s175, %s176
      %p185 = scmp.eq.s32.totalorder %s34, 0
      %p186 = por %p184, %p185
      %p187 = scmp.ne.s32.totalorder %s175, %s176
      %p188 = scmp.eq.s32.totalorder %s35, 1
      %p189 = por %p187, %p188
      %p191 = scmp.ne.s32.totalorder %s176, %s190
      %p192 = scmp.eq.s32.totalorder %s35, 0
      %p193 = por %p191, %p192
      %s195 = sadd.s32 %s194, 1
      %p198 = scmp.eq.s32.totalorder %s29, 1
      %p199 = scmp.ne.s32.totalorder %s194, %s196
      %p200 = scmp.eq.s32.totalorder %s29, 0
      %p201 = por %p199, %p200
      %p202 = scmp.ne.s32.totalorder %s194, %s196
      %p203 = scmp.eq.s32.totalorder %s34, 1
      %p204 = por %p202, %p203
      %p205 = scmp.ne.s32.totalorder %s196, %s197
      %p206 = scmp.eq.s32.totalorder %s34, 0
      %p207 = por %p205, %p206
      %p208 = scmp.ne.s32.totalorder %s196, %s197
      %p209 = scmp.eq.s32.totalorder %s35, 1
      %p210 = por %p208, %p209
      %p212 = scmp.ne.s32.totalorder %s197, %s211
      %p213 = scmp.eq.s32.totalorder %s35, 0
      %p214 = por %p212, %p213
      %s216 = sadd.s32 %s215, 1
      %p219 = scmp.eq.s32.totalorder %s29, 1
      %p220 = scmp.ne.s32.totalorder %s215, %s217
      %p221 = scmp.eq.s32.totalorder %s29, 0
      %p222 = por %p220, %p221
      %p223 = scmp.ne.s32.totalorder %s215, %s217
      %p224 = scmp.eq.s32.totalorder %s34, 1
      %p225 = por %p223, %p224
      %p226 = scmp.ne.s32.totalorder %s217, %s218
      %p227 = scmp.eq.s32.totalorder %s34, 0
      %p228 = por %p226, %p227
      %p229 = scmp.ne.s32.totalorder %s217, %s218
      %p230 = scmp.eq.s32.totalorder %s35, 1
      %p231 = por %p229, %p230
      %p233 = scmp.ne.s32.totalorder %s218, %s232
      %p234 = scmp.eq.s32.totalorder %s35, 0
      %p235 = por %p233, %p234
      %s237 = sadd.s32 %s236, 1
      %p240 = scmp.eq.s32.totalorder %s29, 1
      %p241 = scmp.ne.s32.totalorder %s236, %s238
      %p242 = scmp.eq.s32.totalorder %s29, 0
      %p243 = por %p241, %p242
      %p244 = scmp.ne.s32.totalorder %s236, %s238
      %p245 = scmp.eq.s32.totalorder %s34, 1
      %p246 = por %p244, %p245
      %p247 = scmp.ne.s32.totalorder %s238, %s239
      %p248 = scmp.eq.s32.totalorder %s34, 0
      %p249 = por %p247, %p248
      %p250 = scmp.ne.s32.totalorder %s238, %s239
      %p251 = scmp.eq.s32.totalorder %s35, 1
      %p252 = por %p250, %p251
      %p254 = scmp.ne.s32.totalorder %s239, %s253
      %p255 = scmp.eq.s32.totalorder %s35, 0
      %p256 = por %p254, %p255
      %s258 = sadd.s32 %s257, 1
      %p261 = scmp.eq.s32.totalorder %s29, 1
      %p262 = scmp.ne.s32.totalorder %s257, %s259
      %p263 = scmp.eq.s32.totalorder %s29, 0
      %p264 = por %p262, %p263
      %p265 = scmp.ne.s32.totalorder %s257, %s259
      %p266 = scmp.eq.s32.totalorder %s34, 1
      %p267 = por %p265, %p266
      %p268 = scmp.ne.s32.totalorder %s259, %s260
      %p269 = scmp.eq.s32.totalorder %s34, 0
      %p270 = por %p268, %p269
      %p271 = scmp.ne.s32.totalorder %s259, %s260
      %p272 = scmp.eq.s32.totalorder %s35, 1
      %p273 = por %p271, %p272
      %p275 = scmp.ne.s32.totalorder %s260, %s274
      %p276 = scmp.eq.s32.totalorder %s35, 0
      %p277 = por %p275, %p276
      %s279 = sadd.s32 %s278, 1
      %p282 = scmp.eq.s32.totalorder %s29, 1
      %p283 = scmp.ne.s32.totalorder %s278, %s280
      %p284 = scmp.eq.s32.totalorder %s29, 0
      %p285 = por %p283, %p284
      %p286 = scmp.ne.s32.totalorder %s278, %s280
      %p287 = scmp.eq.s32.totalorder %s34, 1
      %p288 = por %p286, %p287
      %p289 = scmp.ne.s32.totalorder %s280, %s281
      %p290 = scmp.eq.s32.totalorder %s34, 0
      %p291 = por %p289, %p290
      %p292 = scmp.ne.s32.totalorder %s280, %s281
      %p293 = scmp.eq.s32.totalorder %s35, 1
      %p294 = por %p292, %p293
      %p296 = scmp.ne.s32.totalorder %s281, %s295
      %p297 = scmp.eq.s32.totalorder %s35, 0
      %p298 = por %p296, %p297
      %s300 = sadd.s32 %s299, 1
      %p303 = scmp.eq.s32.totalorder %s29, 1
      %p304 = scmp.ne.s32.totalorder %s299, %s301
      %p305 = scmp.eq.s32.totalorder %s29, 0
      %p306 = por %p304, %p305
      %p307 = scmp.ne.s32.totalorder %s299, %s301
      %p308 = scmp.eq.s32.totalorder %s34, 1
      %p309 = por %p307, %p308
      %p310 = scmp.ne.s32.totalorder %s301, %s302
      %p311 = scmp.eq.s32.totalorder %s34, 0
      %p312 = por %p310, %p311
      %p313 = scmp.ne.s32.totalorder %s301, %s302
      %p314 = scmp.eq.s32.totalorder %s35, 1
      %p315 = por %p313, %p314
      %p317 = scmp.ne.s32.totalorder %s302, %s316
      %p318 = scmp.eq.s32.totalorder %s35, 0
      %p319 = por %p317, %p318
      %s321 = sadd.s32 %s320, 1
      %p324 = scmp.eq.s32.totalorder %s29, 1
      %p325 = scmp.ne.s32.totalorder %s320, %s322
      %p326 = scmp.eq.s32.totalorder %s29, 0
      %p327 = por %p325, %p326
      %p328 = scmp.ne.s32.totalorder %s320, %s322
      %p329 = scmp.eq.s32.totalorder %s34, 1
      %p330 = por %p328, %p329
      %p331 = scmp.ne.s32.totalorder %s322, %s323
      %p332 = scmp.eq.s32.totalorder %s34, 0
      %p333 = por %p331, %p332
      %p334 = scmp.ne.s32.totalorder %s322, %s323
      %p335 = scmp.eq.s32.totalorder %s35, 1
      %p336 = por %p334, %p335
      %p338 = scmp.ne.s32.totalorder %s323, %s337
      %p339 = scmp.eq.s32.totalorder %s35, 0
      %p340 = por %p338, %p339
      %s342 = sadd.s32 %s341, 1
      %p345 = scmp.eq.s32.totalorder %s29, 1
      %p346 = scmp.ne.s32.totalorder %s341, %s343
      %p347 = scmp.eq.s32.totalorder %s29, 0
      %p348 = por %p346, %p347
      %p349 = scmp.ne.s32.totalorder %s341, %s343
      %p350 = scmp.eq.s32.totalorder %s34, 1
      %p351 = por %p349, %p350
      %p352 = scmp.ne.s32.totalorder %s343, %s344
      %p353 = scmp.eq.s32.totalorder %s34, 0
      %p354 = por %p352, %p353
      %p355 = scmp.ne.s32.totalorder %s343, %s344
      %p356 = scmp.eq.s32.totalorder %s35, 1
      %p357 = por %p355, %p356
      %p359 = scmp.ne.s32.totalorder %s344, %s358
      %p360 = scmp.eq.s32.totalorder %s35, 0
      %p361 = por %p359, %p360
      %s363 = sadd.s32 %s362, 1
      %p366 = scmp.eq.s32.totalorder %s29, 1
      %p367 = scmp.ne.s32.totalorder %s362, %s364
      %p368 = scmp.eq.s32.totalorder %s29, 0
      %p369 = por %p367, %p368
      %p370 = scmp.ne.s32.totalorder %s362, %s364
      %p371 = scmp.eq.s32.totalorder %s34, 1
      %p372 = por %p370, %p371
      %p373 = scmp.ne.s32.totalorder %s364, %s365
      %p374 = scmp.eq.s32.totalorder %s34, 0
      %p375 = por %p373, %p374
      %p376 = scmp.ne.s32.totalorder %s364, %s365
      %p377 = scmp.eq.s32.totalorder %s35, 1
      %p378 = por %p376, %p377
      %p380 = scmp.ne.s32.totalorder %s365, %s379
      %p381 = scmp.eq.s32.totalorder %s35, 0
      %p382 = por %p380, %p381
      %s384 = sadd.s32 %s383, 1
      %p387 = scmp.eq.s32.totalorder %s29, 1
      %p388 = scmp.ne.s32.totalorder %s383, %s385
      %p389 = scmp.eq.s32.totalorder %s29, 0
      %p390 = por %p388, %p389
      %p391 = scmp.ne.s32.totalorder %s383, %s385
      %p392 = scmp.eq.s32.totalorder %s34, 1
      %p393 = por %p391, %p392
      %p394 = scmp.ne.s32.totalorder %s385, %s386
      %p395 = scmp.eq.s32.totalorder %s34, 0
      %p396 = por %p394, %p395
      %p397 = scmp.ne.s32.totalorder %s385, %s386
      %p398 = scmp.eq.s32.totalorder %s35, 1
      %p399 = por %p397, %p398
      %p401 = scmp.ne.s32.totalorder %s386, %s400
      %p402 = scmp.eq.s32.totalorder %s35, 0
      %p403 = por %p401, %p402
      %s405 = sadd.s32 %s404, 1
      %p408 = scmp.eq.s32.totalorder %s29, 1
      %p409 = scmp.ne.s32.totalorder %s404, %s406
      %p410 = scmp.eq.s32.totalorder %s29, 0
      %p411 = por %p409, %p410
      %p412 = scmp.ne.s32.totalorder %s404, %s406
      %p413 = scmp.eq.s32.totalorder %s34, 1
      %p414 = por %p412, %p413
      %p415 = scmp.ne.s32.totalorder %s406, %s407
      %p416 = scmp.eq.s32.totalorder %s34, 0
      %p417 = por %p415, %p416
      %p418 = scmp.ne.s32.totalorder %s406, %s407
      %p419 = scmp.eq.s32.totalorder %s35, 1
      %p420 = por %p418, %p419
      %p422 = scmp.ne.s32.totalorder %s407, %s421
      %p423 = scmp.eq.s32.totalorder %s35, 0
      %p424 = por %p422, %p423
      %s426 = sadd.s32 %s425, 1
      %p429 = scmp.eq.s32.totalorder %s29, 1
      %p430 = scmp.ne.s32.totalorder %s425, %s427
      %p431 = scmp.eq.s32.totalorder %s29, 0
      %p432 = por %p430, %p431
      %p433 = scmp.ne.s32.totalorder %s425, %s427
      %p434 = scmp.eq.s32.totalorder %s34, 1
      %p435 = por %p433, %p434
      %p436 = scmp.ne.s32.totalorder %s427, %s428
      %p437 = scmp.eq.s32.totalorder %s34, 0
      %p438 = por %p436, %p437
      %p439 = scmp.ne.s32.totalorder %s427, %s428
      %p440 = scmp.eq.s32.totalorder %s35, 1
      %p441 = por %p439, %p440
      %p443 = scmp.ne.s32.totalorder %s428, %s442
      %p444 = scmp.eq.s32.totalorder %s35, 0
      %p445 = por %p443, %p444
      %s447 = sadd.s32 %s446, 1
      %p450 = scmp.eq.s32.totalorder %s29, 1
      %p451 = scmp.ne.s32.totalorder %s446, %s448
      %p452 = scmp.eq.s32.totalorder %s29, 0
      %p453 = por %p451, %p452
      %p454 = scmp.ne.s32.totalorder %s446, %s448
      %p455 = scmp.eq.s32.totalorder %s34, 1
      %p456 = por %p454, %p455
      %p457 = scmp.ne.s32.totalorder %s448, %s449
      %p458 = scmp.eq.s32.totalorder %s34, 0
      %p459 = por %p457, %p458
      %p460 = scmp.ne.s32.totalorder %s448, %s449
      %p461 = scmp.eq.s32.totalorder %s35, 1
      %p462 = por %p460, %p461
      %p464 = scmp.ne.s32.totalorder %s449, %s463
      %p465 = scmp.eq.s32.totalorder %s35, 0
      %p466 = por %p464, %p465
      %s467 = ssub.s32 %s29, %s36
      %p468 = scmp.eq.s32.totalorder %s467, 0
      %s470 = sadd.s32 %s469, 1
      %s471 = scalar_select %p468, %s469, %s470
      %p474 = pneg %p468
      %p475 = scmp.eq.s32.totalorder %s29, 1
      %p476 = por %p474, %p475
      %p477 = scmp.ne.s32.totalorder %s469, %s472
      %p478 = scmp.eq.s32.totalorder %s29, 0
      %p479 = por %p477, %p478
      %p480 = scmp.ne.s32.totalorder %s469, %s472
      %p481 = scmp.eq.s32.totalorder %s34, 1
      %p482 = por %p480, %p481
      %p483 = scmp.ne.s32.totalorder %s472, %s473
      %p484 = scmp.eq.s32.totalorder %s34, 0
      %p485 = por %p483, %p484
      %p486 = scmp.ne.s32.totalorder %s472, %s473
      %p487 = scmp.eq.s32.totalorder %s35, 1
      %p488 = por %p486, %p487
      %p490 = scmp.ne.s32.totalorder %s473, %s489
      %p491 = scmp.eq.s32.totalorder %s35, 0
      %p492 = por %p490, %p491
      %p493 = scmp.le.s32.totalorder 1, %s29
      %p494 = scmp.lt.s32.totalorder %s29, 3
      %p495 = pnand %p493, %p494
      %p496 = pneg %p495
      // Predicated region
      $region9: #{resampler_plus_qk_forward.9} parent=5 // pred_check
        _
      $region10: #{resampler_plus_qk_forward.9} parent=5 // pred_check_branch
        %498 = sbr.rel (%p495) target = $region12
      $region11: #{resampler_plus_qk_forward.9} parent=5 // pred_region
        %s499 = ssub.s32 %s29, 1
        // Predicated region
        $region13: #{resampler_plus_qk_forward.9} parent=11 // pred_check
          %p500 = pneg %p102
        $region14: #{resampler_plus_qk_forward.9} parent=11 // pred_check_branch
          %502 = sbr.rel (%p500) target = $region16
        $region15: #{resampler_plus_qk_forward.9} parent=11 // pred_region
          _
        $region16: #{resampler_plus_qk_forward.9} parent=11 // pred_fallthru
          _
        // Predicated region
        $region17: #{resampler_plus_qk_forward.9} parent=11 // pred_check
          %p503 = pneg %p123
        $region18: #{resampler_plus_qk_forward.9} parent=11 // pred_check_branch
          %505 = sbr.rel (%p503) target = $region20
        $region19: #{resampler_plus_qk_forward.9} parent=11 // pred_region
          _
        $region20: #{resampler_plus_qk_forward.9} parent=11 // pred_fallthru
          _
        // Predicated region
        $region21: #{resampler_plus_qk_forward.9} parent=11 // pred_check
          %p506 = pneg %p144
        $region22: #{resampler_plus_qk_forward.9} parent=11 // pred_check_branch
          %508 = sbr.rel (%p506) target = $region24
        $region23: #{resampler_plus_qk_forward.9} parent=11 // pred_region
          _
        $region24: #{resampler_plus_qk_forward.9} parent=11 // pred_fallthru
          _
        // Predicated region
        $region25: #{resampler_plus_qk_forward.9} parent=11 // pred_check
          %p509 = pneg %p165
        $region26: #{resampler_plus_qk_forward.9} parent=11 // pred_check_branch
          %511 = sbr.rel (%p509) target = $region28
        $region27: #{resampler_plus_qk_forward.9} parent=11 // pred_region
          _
        $region28: #{resampler_plus_qk_forward.9} parent=11 // pred_fallthru
          _
        // Predicated region
        $region29: #{resampler_plus_qk_forward.9} parent=11 // pred_check
          %p512 = pneg %p186
        $region30: #{resampler_plus_qk_forward.9} parent=11 // pred_check_branch
          %514 = sbr.rel (%p512) target = $region32
        $region31: #{resampler_plus_qk_forward.9} parent=11 // pred_region
          _
        $region32: #{resampler_plus_qk_forward.9} parent=11 // pred_fallthru
          _
        // Predicated region
        $region33: #{resampler_plus_qk_forward.9} parent=11 // pred_check
          %p515 = pneg %p207
        $region34: #{resampler_plus_qk_forward.9} parent=11 // pred_check_branch
          %517 = sbr.rel (%p515) target = $region36
        $region35: #{resampler_plus_qk_forward.9} parent=11 // pred_region
          _
        $region36: #{resampler_plus_qk_forward.9} parent=11 // pred_fallthru
          _
        // Predicated region
        $region37: #{resampler_plus_qk_forward.9} parent=11 // pred_check
          %p518 = pneg %p228
        $region38: #{resampler_plus_qk_forward.9} parent=11 // pred_check_branch
          %520 = sbr.rel (%p518) target = $region40
        $region39: #{resampler_plus_qk_forward.9} parent=11 // pred_region
          _
        $region40: #{resampler_plus_qk_forward.9} parent=11 // pred_fallthru
          _
        // Predicated region
        $region41: #{resampler_plus_qk_forward.9} parent=11 // pred_check
          %p521 = pneg %p249
        $region42: #{resampler_plus_qk_forward.9} parent=11 // pred_check_branch
          %523 = sbr.rel (%p521) target = $region44
        $region43: #{resampler_plus_qk_forward.9} parent=11 // pred_region
          _
        $region44: #{resampler_plus_qk_forward.9} parent=11 // pred_fallthru
          _
        // Predicated region
        $region45: #{resampler_plus_qk_forward.9} parent=11 // pred_check
          %p524 = pneg %p270
        $region46: #{resampler_plus_qk_forward.9} parent=11 // pred_check_branch
          %526 = sbr.rel (%p524) target = $region48
        $region47: #{resampler_plus_qk_forward.9} parent=11 // pred_region
          _
        $region48: #{resampler_plus_qk_forward.9} parent=11 // pred_fallthru
          _
        // Predicated region
        $region49: #{resampler_plus_qk_forward.9} parent=11 // pred_check
          %p527 = pneg %p291
        $region50: #{resampler_plus_qk_forward.9} parent=11 // pred_check_branch
          %529 = sbr.rel (%p527) target = $region52
        $region51: #{resampler_plus_qk_forward.9} parent=11 // pred_region
          _
        $region52: #{resampler_plus_qk_forward.9} parent=11 // pred_fallthru
          _
        // Predicated region
        $region53: #{resampler_plus_qk_forward.9} parent=11 // pred_check
          %p530 = pneg %p312
        $region54: #{resampler_plus_qk_forward.9} parent=11 // pred_check_branch
          %532 = sbr.rel (%p530) target = $region56
        $region55: #{resampler_plus_qk_forward.9} parent=11 // pred_region
          _
        $region56: #{resampler_plus_qk_forward.9} parent=11 // pred_fallthru
          _
        // Predicated region
        $region57: #{resampler_plus_qk_forward.9} parent=11 // pred_check
          %p533 = pneg %p333
        $region58: #{resampler_plus_qk_forward.9} parent=11 // pred_check_branch
          %535 = sbr.rel (%p533) target = $region60
        $region59: #{resampler_plus_qk_forward.9} parent=11 // pred_region
          _
        $region60: #{resampler_plus_qk_forward.9} parent=11 // pred_fallthru
          _
        // Predicated region
        $region61: #{resampler_plus_qk_forward.9} parent=11 // pred_check
          %p536 = pneg %p354
        $region62: #{resampler_plus_qk_forward.9} parent=11 // pred_check_branch
          %538 = sbr.rel (%p536) target = $region64
        $region63: #{resampler_plus_qk_forward.9} parent=11 // pred_region
          _
        $region64: #{resampler_plus_qk_forward.9} parent=11 // pred_fallthru
          _
        // Predicated region
        $region65: #{resampler_plus_qk_forward.9} parent=11 // pred_check
          %p539 = pneg %p375
        $region66: #{resampler_plus_qk_forward.9} parent=11 // pred_check_branch
          %541 = sbr.rel (%p539) target = $region68
        $region67: #{resampler_plus_qk_forward.9} parent=11 // pred_region
          _
        $region68: #{resampler_plus_qk_forward.9} parent=11 // pred_fallthru
          _
        // Predicated region
        $region69: #{resampler_plus_qk_forward.9} parent=11 // pred_check
          %p542 = pneg %p396
        $region70: #{resampler_plus_qk_forward.9} parent=11 // pred_check_branch
          %544 = sbr.rel (%p542) target = $region72
        $region71: #{resampler_plus_qk_forward.9} parent=11 // pred_region
          _
        $region72: #{resampler_plus_qk_forward.9} parent=11 // pred_fallthru
          _
        // Predicated region
        $region73: #{resampler_plus_qk_forward.9} parent=11 // pred_check
          %p545 = pneg %p417
        $region74: #{resampler_plus_qk_forward.9} parent=11 // pred_check_branch
          %547 = sbr.rel (%p545) target = $region76
        $region75: #{resampler_plus_qk_forward.9} parent=11 // pred_region
          _
        $region76: #{resampler_plus_qk_forward.9} parent=11 // pred_fallthru
          _
        // Predicated region
        $region77: #{resampler_plus_qk_forward.9} parent=11 // pred_check
          %p548 = pneg %p438
        $region78: #{resampler_plus_qk_forward.9} parent=11 // pred_check_branch
          %550 = sbr.rel (%p548) target = $region80
        $region79: #{resampler_plus_qk_forward.9} parent=11 // pred_region
          _
        $region80: #{resampler_plus_qk_forward.9} parent=11 // pred_fallthru
          _
        // Predicated region
        $region81: #{resampler_plus_qk_forward.9} parent=11 // pred_check
          %p551 = pneg %p459
        $region82: #{resampler_plus_qk_forward.9} parent=11 // pred_check_branch
          %553 = sbr.rel (%p551) target = $region84
        $region83: #{resampler_plus_qk_forward.9} parent=11 // pred_region
          _
        $region84: #{resampler_plus_qk_forward.9} parent=11 // pred_fallthru
          _
      $region12: #{resampler_plus_qk_forward.9} parent=5 // pred_fallthru
        _
      %p554 = scmp.lt.s32.totalorder %s29, 2
      // Predicated region
      $region85: #{resampler_plus_qk_forward.9} parent=5 // pred_check
        %p555 = pneg %p554
      $region86: #{resampler_plus_qk_forward.9} parent=5 // pred_check_branch
        %557 = sbr.rel (%p555) target = $region88
      $region87: #{resampler_plus_qk_forward.9} parent=5 // pred_region
        // Predicated region
        $region89: #{resampler_plus_qk_forward.9} parent=87 // pred_check
          %p558 = pneg %p49
        $region90: #{resampler_plus_qk_forward.9} parent=87 // pred_check_branch
          %560 = sbr.rel (%p558) target = $region92
        $region91: #{resampler_plus_qk_forward.9} parent=87 // pred_region
          %p561 = scmp.lt.s32.totalorder %s29, 1
          %s562 = scalar_select %p561, %s29, 1
          %s563 = smul.addr %s562, 8
          %s564 = scalar_lea.vmem %s0, %s563
        $region92: #{resampler_plus_qk_forward.9} parent=87 // pred_fallthru
          _
        // Predicated region
        $region93: #{resampler_plus_qk_forward.9} parent=87 // pred_check
          %p565 = pneg %p75
        $region94: #{resampler_plus_qk_forward.9} parent=87 // pred_check_branch
          %567 = sbr.rel (%p565) target = $region96
        $region95: #{resampler_plus_qk_forward.9} parent=87 // pred_region
          %p568 = scmp.lt.s32.totalorder %s29, 1
          %s569 = scalar_select %p568, %s29, 1
          %s570 = smul.addr %s569, 8
          %s571 = scalar_lea.vmem %s1, %s570
        $region96: #{resampler_plus_qk_forward.9} parent=87 // pred_fallthru
          _
      $region88: #{resampler_plus_qk_forward.9} parent=5 // pred_fallthru
        _
      %p572 = scmp.le.s32.totalorder 1, %s29
      %p573 = scmp.lt.s32.totalorder %s29, 3
      %p574 = pnand %p572, %p573
      %p575 = pneg %p574
      // Predicated region
      $region97: #{resampler_plus_qk_forward.9} parent=5 // pred_check
        _
      $region98: #{resampler_plus_qk_forward.9} parent=5 // pred_check_branch
        %577 = sbr.rel (%p574) target = $region100
      $region99: #{resampler_plus_qk_forward.9} parent=5 // pred_region
        %s578 = ssub.s32 %s29, 1
        %p579 = scmp.lt.s32.totalorder %s34, 1
        %s580 = scalar_select %p579, %s34, 1
        %s581 = smul.addr %s580, 8
        %s582 = scalar_lea.vmem %s0, %s581
        %p583 = pneg %p55
        %p584 = pneg %p52
        %p585 = scmp.lt.s32.totalorder %s34, 1
        %s586 = scalar_select %p585, %s34, 1
        %s587 = smul.addr %s586, 8
        %s588 = scalar_lea.vmem %s1, %s587
        %p589 = pneg %p81
        %p590 = pneg %p78
        %p591 = pneg %p102
        %p592 = pneg %p99
        %p593 = pneg %p123
        %p594 = pneg %p120
        %p595 = pneg %p144
        %p596 = pneg %p141
        %p597 = pneg %p165
        %p598 = pneg %p162
        %p599 = pneg %p186
        %p600 = pneg %p183
        %p601 = pneg %p207
        %p602 = pneg %p204
        %p603 = pneg %p228
        %p604 = pneg %p225
        %p605 = pneg %p249
        %p606 = pneg %p246
        %p607 = pneg %p270
        %p608 = pneg %p267
        %p609 = pneg %p291
        %p610 = pneg %p288
        %p611 = pneg %p312
        %p612 = pneg %p309
        %p613 = pneg %p333
        %p614 = pneg %p330
        %p615 = pneg %p354
        %p616 = pneg %p351
        %p617 = pneg %p375
        %p618 = pneg %p372
        %p619 = pneg %p396
        %p620 = pneg %p393
        %p621 = pneg %p417
        %p622 = pneg %p414
        %p623 = pneg %p438
        %p624 = pneg %p435
        %p625 = pneg %p459
        %p626 = pneg %p456
        %p627 = pneg %p485
        %p628 = pneg %p482
        %s629 = sand.u32 %s472, 1
        %s630 = scalar_lea.sflag [#allocation3], %s629
        %s631 = sand.u32 %s472, 1
        %s632 = smul.addr %s631, 8
        %s633 = scalar_lea.vmem [#allocation2], %s632
        %p634 = scmp.lt.s32.totalorder %s34, 1
        %s635 = scalar_select %p634, %s34, 1
        %s636 = smul.addr %s635, 8
        %s637 = scalar_lea.vmem %s0, %s636
        %p638 = scmp.lt.s32.totalorder %s34, 1
        %s639 = scalar_select %p638, %s34, 1
        %s640 = smul.addr %s639, 8
        %s641 = scalar_lea.vmem %s1, %s640
        %v643 = vld [vmem:[%s637] sm:$0xff]
        %v644 = vld [vmem:[%s641] sm:$0xff]
        %v645 = vld [vmem:[%s2] sm:$0x1]
        %v646 = vld [vmem:[%s3] sm:$0x1]
        %vm647 = vcmask 523264
        %v648 = vsel %vm647, %v643, 0.0
        %649 = vadd.xlane.f32.xlu0 %v648
        %v650 = vpop.xlane.xlu0 %649
        %v651 = vrcp.pop 64.0
        %v652 = vmul.f32 64.0, %v651
        %v653 = vsub.f32 1.0, %v652
        %v654 = vmul.f32 %v651, %v653
        %v655 = vadd.f32 %v651, %v654
        %vm656 = vweird.f32 %v651
        %v657 = vsel %vm656, %v651, %v655
        %v658 = vmul.f32 %v650, %v657
        %v659 = vsub.f32 %v643, %v658
        %v660 = vmul.f32 %v659, %v659
        %v661 = vsel %vm647, %v660, 0.0
        %662 = vadd.xlane.f32.xlu0 %v661
        %v663 = vpop.xlane.xlu0 %662
        %v664 = vmul.f32 %v663, %v657
        %v665 = vadd.f32 %v664, 1e-05
        %v666 = vrsqrt.pop %v665
        %v667 = vmul.f32 %v666, %v665
        %v668 = vmul.f32 %v667, %v666
        %v669 = vmul.f32 0.5, %v668
        %v670 = vsub.f32 1.5, %v669
        %v671 = vmul.f32 %v666, %v670
        %vm672 = vweird.f32 %v665
        %vm673 = vweird.f32 %v666
        %vm674 = vmor %vm672, %vm673
        %v675 = vsel %vm674, %v666, %v671
        %v676 = vmul.f32 %v659, %v675
        %v678 = vperm.slane %v645, 0
        %v680 = vmul.f32 %v676, %v678
        %v682 = vperm.slane %v646, 0
        %v684 = vadd.f32 %v680, %v682
        %v685 = vld [vmem:[%s4] sm:$0x1]
        %v686 = vld [vmem:[%s5] sm:$0x1]
        %v687 = vsel %vm647, %v644, 0.0
        %688 = vadd.xlane.f32.xlu0 %v687
        %v689 = vpop.xlane.xlu0 %688
        %v690 = vmul.f32 %v689, %v657
        %v691 = vsub.f32 %v644, %v690
        %v692 = vmul.f32 %v691, %v691
        %v693 = vsel %vm647, %v692, 0.0
        %694 = vadd.xlane.f32.xlu0 %v693
        %v695 = vpop.xlane.xlu0 %694
        %v696 = vmul.f32 %v695, %v657
        %v697 = vadd.f32 %v696, 1e-05
        %v698 = vrsqrt.pop %v697
        %v699 = vmul.f32 %v698, %v697
        %v700 = vmul.f32 %v699, %v698
        %v701 = vmul.f32 0.5, %v700
        %v702 = vsub.f32 1.5, %v701
        %v703 = vmul.f32 %v698, %v702
        %vm704 = vweird.f32 %v697
        %vm705 = vweird.f32 %v698
        %vm706 = vmor %vm704, %vm705
        %v707 = vsel %vm706, %v698, %v703
        %v708 = vmul.f32 %v691, %v707
        %v710 = vperm.slane %v685, 0
        %v712 = vmul.f32 %v708, %v710
        %v714 = vperm.slane %v686, 0
        %v716 = vadd.f32 %v712, %v714
        %v717 = vld [vmem:[%s6] sm:$0xff]
        %v718 = vld [vmem:[%s6 + $0x8] sm:$0xff]
        %v719 = vld [vmem:[%s6 + $0x10] sm:$0xff]
        %v720 = vld [vmem:[%s6 + $0x18] sm:$0xff]
        %v721 = vld [vmem:[%s6 + $0x20] sm:$0xff]
        %v722 = vld [vmem:[%s6 + $0x28] sm:$0xff]
        %v723 = vld [vmem:[%s6 + $0x30] sm:$0xff]
        %v724 = vld [vmem:[%s6 + $0x38] sm:$0xff]
        %v725 = vpack.c.bf16 %v716, %v716
        %v726 = vpack.c.bf16 %v718, %v717
        %v727 = vpack.c.bf16 %v720, %v719
        %v728 = vpack.c.bf16 %v722, %v721
        %v729 = vpack.c.bf16 %v724, %v723
        %v731 = vsel %vm647, %v725, 0
        %733 = vmatpush.bf16.msra.mxu0 0
        %734 = vmatpush.bf16.msra.mxu0 0
        %735 = vmatpush.bf16.msra.mxu0 0
        %736 = vmatpush.bf16.msra.mxu0 0
        %737 = vmatpush.bf16.msra.mxu0 %v729
        %738 = vmatpush.bf16.msra.mxu0 %v728
        %739 = vmatpush.bf16.msra.mxu0 %v727
        %740 = vmatpush.bf16.msra.mxu0 %v726
        %741 = vmatmul.bf16.gmra.mxu0 %v731
        %v742 = vpop.f32.mrf.mxu0
        %v743 = vadd.f32 0.0, %v742
        %v744 = vpop.f32.mrf.mxu0
        %745 = vdwg.mxu0
        %v746 = vld [vmem:[%s7] sm:$0xff]
        %v747 = vld [vmem:[%s7 + $0x8] sm:$0xff]
        %v748 = vld [vmem:[%s7 + $0x10] sm:$0xff]
        %v749 = vld [vmem:[%s7 + $0x18] sm:$0xff]
        %v750 = vld [vmem:[%s7 + $0x20] sm:$0xff]
        %v751 = vld [vmem:[%s7 + $0x28] sm:$0xff]
        %v752 = vld [vmem:[%s7 + $0x30] sm:$0xff]
        %v753 = vld [vmem:[%s7 + $0x38] sm:$0xff]
        %v754 = vpack.c.bf16 %v716, %v684
        %v755 = vpack.c.bf16 %v747, %v746
        %v756 = vpack.c.bf16 %v749, %v748
        %v757 = vpack.c.bf16 %v751, %v750
        %v758 = vpack.c.bf16 %v753, %v752
        %v760 = vsel %vm647, %v754, 0
        %762 = vmatpush.bf16.msra.mxu0 0
        %763 = vmatpush.bf16.msra.mxu0 0
        %764 = vmatpush.bf16.msra.mxu0 0
        %765 = vmatpush.bf16.msra.mxu0 0
        %766 = vmatpush.bf16.msra.mxu0 %v758
        %767 = vmatpush.bf16.msra.mxu0 %v757
        %768 = vmatpush.bf16.msra.mxu0 %v756
        %769 = vmatpush.bf16.msra.mxu0 %v755
        %770 = vmatmul.bf16.gmra.mxu0 %v760
        %v771 = vpop.f32.mrf.mxu0
        %v772 = vadd.f32 0.0, %v771
        %v773 = vpop.f32.mrf.mxu0
        %v774 = vadd.f32 0.0, %v773
        %775 = vdwg.mxu0
        %v776 = vld [vmem:[%s8] sm:$0xff]
        %v777 = vld [vmem:[%s8 + $0x8] sm:$0xff]
        %v778 = vld [vmem:[%s8 + $0x10] sm:$0xff]
        %v779 = vld [vmem:[%s8 + $0x18] sm:$0xff]
        %v780 = vld [vmem:[%s8 + $0x20] sm:$0xff]
        %v781 = vld [vmem:[%s8 + $0x28] sm:$0xff]
        %v782 = vld [vmem:[%s8 + $0x30] sm:$0xff]
        %v783 = vld [vmem:[%s8 + $0x38] sm:$0xff]
        %v784 = vpack.c.bf16 %v777, %v776
        %v785 = vpack.c.bf16 %v779, %v778
        %v786 = vpack.c.bf16 %v781, %v780
        %v787 = vpack.c.bf16 %v783, %v782
        %788 = vmatpush.bf16.msra.mxu0 0
        %789 = vmatpush.bf16.msra.mxu0 0
        %790 = vmatpush.bf16.msra.mxu0 0
        %791 = vmatpush.bf16.msra.mxu0 0
        %792 = vmatpush.bf16.msra.mxu0 %v787
        %793 = vmatpush.bf16.msra.mxu0 %v786
        %794 = vmatpush.bf16.msra.mxu0 %v785
        %795 = vmatpush.bf16.msra.mxu0 %v784
        %796 = vmatmul.bf16.gmra.mxu0 %v760
        %v797 = vpop.f32.mrf.mxu0
        %v798 = vadd.f32 0.0, %v797
        %v799 = vpop.f32.mrf.mxu0
        %v800 = vadd.f32 0.0, %v799
        %801 = vdwg.mxu0
        %803 = vrot.lane.b32.xlu0 %v743, 112
        %v804 = vpop.permute.xlu0 %803
        %806 = vrot.lane.b32.xlu0 %v743, 96
        %v807 = vpop.permute.xlu0 %806
        %809 = vrot.lane.b32.xlu0 %v743, 80
        %v810 = vpop.permute.xlu0 %809
        %814 = vrot.lane.b32.xlu0 %v772, 112
        %v815 = vpop.permute.xlu0 %814
        %816 = vrot.lane.b32.xlu0 %v774, 112
        %v817 = vpop.permute.xlu0 %816
        %820 = vrot.lane.b32.xlu0 %v772, 96
        %v821 = vpop.permute.xlu0 %820
        %822 = vrot.lane.b32.xlu0 %v774, 96
        %v823 = vpop.permute.xlu0 %822
        %826 = vrot.lane.b32.xlu0 %v772, 80
        %v827 = vpop.permute.xlu0 %826
        %828 = vrot.lane.b32.xlu0 %v774, 80
        %v829 = vpop.permute.xlu0 %828
        %834 = vrot.lane.b32.xlu0 %v798, 112
        %v835 = vpop.permute.xlu0 %834
        %836 = vrot.lane.b32.xlu0 %v800, 112
        %v837 = vpop.permute.xlu0 %836
        %840 = vrot.lane.b32.xlu0 %v798, 96
        %v841 = vpop.permute.xlu0 %840
        %842 = vrot.lane.b32.xlu0 %v800, 96
        %v843 = vpop.permute.xlu0 %842
        %846 = vrot.lane.b32.xlu0 %v798, 80
        %v847 = vpop.permute.xlu0 %846
        %848 = vrot.lane.b32.xlu0 %v800, 80
        %v849 = vpop.permute.xlu0 %848
        %v852 = vld [vmem:[%s10] sm:$0x1]
        %v853 = vld [vmem:[%s11] sm:$0x1]
        %vm854 = vcmask 130048
        %v855 = vsel %vm854, %v743, 0.0
        %856 = vadd.xlane.f32.xlu0 %v855
        %v857 = vpop.xlane.xlu0 %856
        %v858 = vsel %vm854, %v804, 0.0
        %859 = vadd.xlane.f32.xlu0 %v858
        %v860 = vpop.xlane.xlu0 %859
        %v861 = vsel %vm854, %v807, 0.0
        %862 = vadd.xlane.f32.xlu0 %v861
        %v863 = vpop.xlane.xlu0 %862
        %v864 = vsel %vm854, %v810, 0.0
        %865 = vadd.xlane.f32.xlu0 %v864
        %v866 = vpop.xlane.xlu0 %865
        %v867 = vrcp.pop 16.0
        %v868 = vmul.f32 16.0, %v867
        %v869 = vsub.f32 1.0, %v868
        %v870 = vmul.f32 %v867, %v869
        %v871 = vadd.f32 %v867, %v870
        %vm872 = vweird.f32 %v867
        %v873 = vsel %vm872, %v867, %v871
        %v874 = vmul.f32 %v857, %v873
        %v875 = vmul.f32 %v860, %v873
        %v876 = vmul.f32 %v863, %v873
        %v877 = vmul.f32 %v866, %v873
        %v878 = vsub.f32 %v743, %v874
        %v879 = vsub.f32 %v804, %v875
        %v880 = vsub.f32 %v807, %v876
        %v881 = vsub.f32 %v810, %v877
        %v882 = vmul.f32 %v878, %v878
        %v883 = vmul.f32 %v879, %v879
        %v884 = vmul.f32 %v880, %v880
        %v885 = vmul.f32 %v881, %v881
        %v886 = vsel %vm854, %v882, 0.0
        %887 = vadd.xlane.f32.xlu0 %v886
        %v888 = vpop.xlane.xlu0 %887
        %v889 = vsel %vm854, %v883, 0.0
        %890 = vadd.xlane.f32.xlu0 %v889
        %v891 = vpop.xlane.xlu0 %890
        %v892 = vsel %vm854, %v884, 0.0
        %893 = vadd.xlane.f32.xlu0 %v892
        %v894 = vpop.xlane.xlu0 %893
        %v895 = vsel %vm854, %v885, 0.0
        %896 = vadd.xlane.f32.xlu0 %v895
        %v897 = vpop.xlane.xlu0 %896
        %v898 = vmul.f32 %v888, %v873
        %v899 = vmul.f32 %v891, %v873
        %v900 = vmul.f32 %v894, %v873
        %v901 = vmul.f32 %v897, %v873
        %v902 = vadd.f32 %v898, 1e-05
        %v903 = vadd.f32 %v899, 1e-05
        %v904 = vadd.f32 %v900, 1e-05
        %v905 = vadd.f32 %v901, 1e-05
        %v906 = vrsqrt.pop %v902
        %v907 = vmul.f32 %v906, %v902
        %v908 = vmul.f32 %v907, %v906
        %v909 = vmul.f32 0.5, %v908
        %v910 = vsub.f32 1.5, %v909
        %v911 = vmul.f32 %v906, %v910
        %vm912 = vweird.f32 %v902
        %vm913 = vweird.f32 %v906
        %vm914 = vmor %vm912, %vm913
        %v915 = vsel %vm914, %v906, %v911
        %v916 = vrsqrt.pop %v903
        %v917 = vmul.f32 %v916, %v903
        %v918 = vmul.f32 %v917, %v916
        %v919 = vmul.f32 0.5, %v918
        %v920 = vsub.f32 1.5, %v919
        %v921 = vmul.f32 %v916, %v920
        %vm922 = vweird.f32 %v903
        %vm923 = vweird.f32 %v916
        %vm924 = vmor %vm922, %vm923
        %v925 = vsel %vm924, %v916, %v921
        %v926 = vrsqrt.pop %v904
        %v927 = vmul.f32 %v926, %v904
        %v928 = vmul.f32 %v927, %v926
        %v929 = vmul.f32 0.5, %v928
        %v930 = vsub.f32 1.5, %v929
        %v931 = vmul.f32 %v926, %v930
        %vm932 = vweird.f32 %v904
        %vm933 = vweird.f32 %v926
        %vm934 = vmor %vm932, %vm933
        %v935 = vsel %vm934, %v926, %v931
        %v936 = vrsqrt.pop %v905
        %v937 = vmul.f32 %v936, %v905
        %v938 = vmul.f32 %v937, %v936
        %v939 = vmul.f32 0.5, %v938
        %v940 = vsub.f32 1.5, %v939
        %v941 = vmul.f32 %v936, %v940
        %vm942 = vweird.f32 %v905
        %vm943 = vweird.f32 %v936
        %vm944 = vmor %vm942, %vm943
        %v945 = vsel %vm944, %v936, %v941
        %v946 = vmul.f32 %v878, %v915
        %v947 = vmul.f32 %v879, %v925
        %v948 = vmul.f32 %v880, %v935
        %v949 = vmul.f32 %v881, %v945
        %v951 = vperm.slane %v852, 0
        %v953 = vmul.f32 %v946, %v951
        %v954 = vmul.f32 %v947, %v951
        %v955 = vmul.f32 %v948, %v951
        %v956 = vmul.f32 %v949, %v951
        %v958 = vperm.slane %v853, 0
        %v960 = vadd.f32 %v953, %v958
        %v961 = vadd.f32 %v954, %v958
        %v962 = vadd.f32 %v955, %v958
        %v963 = vadd.f32 %v956, %v958
        %v964 = vld [vmem:[%s12] sm:$0x1]
        %v965 = vld [vmem:[%s13] sm:$0x1]
        %v966 = vsel %vm854, %v772, 0.0
        %967 = vadd.xlane.f32.xlu0 %v966
        %v968 = vpop.xlane.xlu0 %967
        %v969 = vsel %vm854, %v774, 0.0
        %970 = vadd.xlane.f32.xlu0 %v969
        %v971 = vpop.xlane.xlu0 %970
        %v972 = vsel %vm854, %v815, 0.0
        %973 = vadd.xlane.f32.xlu0 %v972
        %v974 = vpop.xlane.xlu0 %973
        %v975 = vsel %vm854, %v817, 0.0
        %976 = vadd.xlane.f32.xlu0 %v975
        %v977 = vpop.xlane.xlu0 %976
        %v978 = vsel %vm854, %v821, 0.0
        %979 = vadd.xlane.f32.xlu0 %v978
        %v980 = vpop.xlane.xlu0 %979
        %v981 = vsel %vm854, %v823, 0.0
        %982 = vadd.xlane.f32.xlu0 %v981
        %v983 = vpop.xlane.xlu0 %982
        %v984 = vsel %vm854, %v827, 0.0
        %985 = vadd.xlane.f32.xlu0 %v984
        %v986 = vpop.xlane.xlu0 %985
        %v987 = vsel %vm854, %v829, 0.0
        %988 = vadd.xlane.f32.xlu0 %v987
        %v989 = vpop.xlane.xlu0 %988
        %v990 = vmul.f32 %v968, %v873
        %v991 = vmul.f32 %v971, %v873
        %v992 = vmul.f32 %v974, %v873
        %v993 = vmul.f32 %v977, %v873
        %v994 = vmul.f32 %v980, %v873
        %v995 = vmul.f32 %v983, %v873
        %v996 = vmul.f32 %v986, %v873
        %v997 = vmul.f32 %v989, %v873
        %v998 = vsub.f32 %v772, %v990
        %v999 = vsub.f32 %v774, %v991
        %v1000 = vsub.f32 %v815, %v992
        %v1001 = vsub.f32 %v817, %v993
        %v1002 = vsub.f32 %v821, %v994
        %v1003 = vsub.f32 %v823, %v995
        %v1004 = vsub.f32 %v827, %v996
        %v1005 = vsub.f32 %v829, %v997
        %v1006 = vmul.f32 %v998, %v998
        %v1007 = vmul.f32 %v999, %v999
        %v1008 = vmul.f32 %v1000, %v1000
        %v1009 = vmul.f32 %v1001, %v1001
        %v1010 = vmul.f32 %v1002, %v1002
        %v1011 = vmul.f32 %v1003, %v1003
        %v1012 = vmul.f32 %v1004, %v1004
        %v1013 = vmul.f32 %v1005, %v1005
        %v1014 = vsel %vm854, %v1006, 0.0
        %1015 = vadd.xlane.f32.xlu0 %v1014
        %v1016 = vpop.xlane.xlu0 %1015
        %v1017 = vsel %vm854, %v1007, 0.0
        %1018 = vadd.xlane.f32.xlu0 %v1017
        %v1019 = vpop.xlane.xlu0 %1018
        %v1020 = vsel %vm854, %v1008, 0.0
        %1021 = vadd.xlane.f32.xlu0 %v1020
        %v1022 = vpop.xlane.xlu0 %1021
        %v1023 = vsel %vm854, %v1009, 0.0
        %1024 = vadd.xlane.f32.xlu0 %v1023
        %v1025 = vpop.xlane.xlu0 %1024
        %v1026 = vsel %vm854, %v1010, 0.0
        %1027 = vadd.xlane.f32.xlu0 %v1026
        %v1028 = vpop.xlane.xlu0 %1027
        %v1029 = vsel %vm854, %v1011, 0.0
        %1030 = vadd.xlane.f32.xlu0 %v1029
        %v1031 = vpop.xlane.xlu0 %1030
        %v1032 = vsel %vm854, %v1012, 0.0
        %1033 = vadd.xlane.f32.xlu0 %v1032
        %v1034 = vpop.xlane.xlu0 %1033
        %v1035 = vsel %vm854, %v1013, 0.0
        %1036 = vadd.xlane.f32.xlu0 %v1035
        %v1037 = vpop.xlane.xlu0 %1036
        %v1038 = vmul.f32 %v1016, %v873
        %v1039 = vmul.f32 %v1019, %v873
        %v1040 = vmul.f32 %v1022, %v873
        %v1041 = vmul.f32 %v1025, %v873
        %v1042 = vmul.f32 %v1028, %v873
        %v1043 = vmul.f32 %v1031, %v873
        %v1044 = vmul.f32 %v1034, %v873
        %v1045 = vmul.f32 %v1037, %v873
        %v1046 = vadd.f32 %v1038, 1e-05
        %v1047 = vadd.f32 %v1039, 1e-05
        %v1048 = vadd.f32 %v1040, 1e-05
        %v1049 = vadd.f32 %v1041, 1e-05
        %v1050 = vadd.f32 %v1042, 1e-05
        %v1051 = vadd.f32 %v1043, 1e-05
        %v1052 = vadd.f32 %v1044, 1e-05
        %v1053 = vadd.f32 %v1045, 1e-05
        %v1054 = vrsqrt.pop %v1046
        %v1055 = vmul.f32 %v1054, %v1046
        %v1056 = vmul.f32 %v1055, %v1054
        %v1057 = vmul.f32 0.5, %v1056
        %v1058 = vsub.f32 1.5, %v1057
        %v1059 = vmul.f32 %v1054, %v1058
        %vm1060 = vweird.f32 %v1046
        %vm1061 = vweird.f32 %v1054
        %vm1062 = vmor %vm1060, %vm1061
        %v1063 = vsel %vm1062, %v1054, %v1059
        %v1064 = vrsqrt.pop %v1047
        %v1065 = vmul.f32 %v1064, %v1047
        %v1066 = vmul.f32 %v1065, %v1064
        %v1067 = vmul.f32 0.5, %v1066
        %v1068 = vsub.f32 1.5, %v1067
        %v1069 = vmul.f32 %v1064, %v1068
        %vm1070 = vweird.f32 %v1047
        %vm1071 = vweird.f32 %v1064
        %vm1072 = vmor %vm1070, %vm1071
        %v1073 = vsel %vm1072, %v1064, %v1069
        %v1074 = vrsqrt.pop %v1048
        %v1075 = vmul.f32 %v1074, %v1048
        %v1076 = vmul.f32 %v1075, %v1074
        %v1077 = vmul.f32 0.5, %v1076
        %v1078 = vsub.f32 1.5, %v1077
        %v1079 = vmul.f32 %v1074, %v1078
        %vm1080 = vweird.f32 %v1048
        %vm1081 = vweird.f32 %v1074
        %vm1082 = vmor %vm1080, %vm1081
        %v1083 = vsel %vm1082, %v1074, %v1079
        %v1084 = vrsqrt.pop %v1049
        %v1085 = vmul.f32 %v1084, %v1049
        %v1086 = vmul.f32 %v1085, %v1084
        %v1087 = vmul.f32 0.5, %v1086
        %v1088 = vsub.f32 1.5, %v1087
        %v1089 = vmul.f32 %v1084, %v1088
        %vm1090 = vweird.f32 %v1049
        %vm1091 = vweird.f32 %v1084
        %vm1092 = vmor %vm1090, %vm1091
        %v1093 = vsel %vm1092, %v1084, %v1089
        %v1094 = vrsqrt.pop %v1050
        %v1095 = vmul.f32 %v1094, %v1050
        %v1096 = vmul.f32 %v1095, %v1094
        %v1097 = vmul.f32 0.5, %v1096
        %v1098 = vsub.f32 1.5, %v1097
        %v1099 = vmul.f32 %v1094, %v1098
        %vm1100 = vweird.f32 %v1050
        %vm1101 = vweird.f32 %v1094
        %vm1102 = vmor %vm1100, %vm1101
        %v1103 = vsel %vm1102, %v1094, %v1099
        %v1104 = vrsqrt.pop %v1051
        %v1105 = vmul.f32 %v1104, %v1051
        %v1106 = vmul.f32 %v1105, %v1104
        %v1107 = vmul.f32 0.5, %v1106
        %v1108 = vsub.f32 1.5, %v1107
        %v1109 = vmul.f32 %v1104, %v1108
        %vm1110 = vweird.f32 %v1051
        %vm1111 = vweird.f32 %v1104
        %vm1112 = vmor %vm1110, %vm1111
        %v1113 = vsel %vm1112, %v1104, %v1109
        %v1114 = vrsqrt.pop %v1052
        %v1115 = vmul.f32 %v1114, %v1052
        %v1116 = vmul.f32 %v1115, %v1114
        %v1117 = vmul.f32 0.5, %v1116
        %v1118 = vsub.f32 1.5, %v1117
        %v1119 = vmul.f32 %v1114, %v1118
        %vm1120 = vweird.f32 %v1052
        %vm1121 = vweird.f32 %v1114
        %vm1122 = vmor %vm1120, %vm1121
        %v1123 = vsel %vm1122, %v1114, %v1119
        %v1124 = vrsqrt.pop %v1053
        %v1125 = vmul.f32 %v1124, %v1053
        %v1126 = vmul.f32 %v1125, %v1124
        %v1127 = vmul.f32 0.5, %v1126
        %v1128 = vsub.f32 1.5, %v1127
        %v1129 = vmul.f32 %v1124, %v1128
        %vm1130 = vweird.f32 %v1053
        %vm1131 = vweird.f32 %v1124
        %vm1132 = vmor %vm1130, %vm1131
        %v1133 = vsel %vm1132, %v1124, %v1129
        %v1134 = vmul.f32 %v998, %v1063
        %v1135 = vmul.f32 %v999, %v1073
        %v1136 = vmul.f32 %v1000, %v1083
        %v1137 = vmul.f32 %v1001, %v1093
        %v1138 = vmul.f32 %v1002, %v1103
        %v1139 = vmul.f32 %v1003, %v1113
        %v1140 = vmul.f32 %v1004, %v1123
        %v1141 = vmul.f32 %v1005, %v1133
        %v1143 = vperm.slane %v964, 0
        %v1145 = vmul.f32 %v1134, %v1143
        %v1146 = vmul.f32 %v1135, %v1143
        %v1147 = vmul.f32 %v1136, %v1143
        %v1148 = vmul.f32 %v1137, %v1143
        %v1149 = vmul.f32 %v1138, %v1143
        %v1150 = vmul.f32 %v1139, %v1143
        %v1151 = vmul.f32 %v1140, %v1143
        %v1152 = vmul.f32 %v1141, %v1143
        %v1154 = vperm.slane %v965, 0
        %v1156 = vadd.f32 %v1145, %v1154
        %v1157 = vadd.f32 %v1146, %v1154
        %v1158 = vadd.f32 %v1147, %v1154
        %v1159 = vadd.f32 %v1148, %v1154
        %v1160 = vadd.f32 %v1149, %v1154
        %v1161 = vadd.f32 %v1150, %v1154
        %v1162 = vadd.f32 %v1151, %v1154
        %v1163 = vadd.f32 %v1152, %v1154
        %v1164 = vpack.c.bf16 %v960, %v960
        %v1165 = vpack.c.bf16 %v961, %v961
        %v1166 = vpack.c.bf16 %v962, %v962
        %v1167 = vpack.c.bf16 %v963, %v963
        %v1168 = vpack.c.bf16 %v1156, %v1156
        %v1169 = vpack.c.bf16 %v1157, %v1157
        %v1170 = vpack.c.bf16 %v1158, %v1158
        %v1171 = vpack.c.bf16 %v1159, %v1159
        %v1172 = vpack.c.bf16 %v1160, %v1160
        %v1173 = vpack.c.bf16 %v1161, %v1161
        %v1174 = vpack.c.bf16 %v1162, %v1162
        %v1175 = vpack.c.bf16 %v1163, %v1163
        %v1178 = vunpack.c.l.b16 %v1168
        %v1179 = vunpack.c.l.b16 %v1169
        %v1180 = vpack.c.b16 %v1179, %v1178
        %v1182 = vsel %vm854, %v1164, 0
        %v1185 = vsel %vm854, %v1180, 0
        %1187 = vmatpush.bf16.xpose.msra.mxu0 0
        %1188 = vmatpush.bf16.xpose.msra.mxu0 0
        %1189 = vmatpush.bf16.xpose.msra.mxu0 0
        %1190 = vmatpush.bf16.xpose.msra.mxu0 0
        %1191 = vmatpush.bf16.xpose.msra.mxu0 0
        %1192 = vmatpush.bf16.xpose.msra.mxu0 0
        %1193 = vmatpush.bf16.xpose.msra.mxu0 0
        %1194 = vmatpush.bf16.xpose.msra.mxu0 %v1185
        %1195 = vmatmul.bf16.gmra.mxu0 %v1182
        %v1196 = vpop.f32.mrf.mxu0
        %v1197 = vadd.f32 0.0, %v1196
        %v1198 = vpop.f32.mrf.mxu0
        %1199 = vdwg.mxu0
        %v1202 = vunpack.c.l.b16 %v1170
        %v1203 = vunpack.c.l.b16 %v1171
        %v1204 = vpack.c.b16 %v1203, %v1202
        %v1206 = vsel %vm854, %v1165, 0
        %v1209 = vsel %vm854, %v1204, 0
        %1211 = vmatpush.bf16.xpose.msra.mxu0 0
        %1212 = vmatpush.bf16.xpose.msra.mxu0 0
        %1213 = vmatpush.bf16.xpose.msra.mxu0 0
        %1214 = vmatpush.bf16.xpose.msra.mxu0 0
        %1215 = vmatpush.bf16.xpose.msra.mxu0 0
        %1216 = vmatpush.bf16.xpose.msra.mxu0 0
        %1217 = vmatpush.bf16.xpose.msra.mxu0 0
        %1218 = vmatpush.bf16.xpose.msra.mxu0 %v1209
        %1219 = vmatmul.bf16.gmra.mxu0 %v1206
        %v1220 = vpop.f32.mrf.mxu0
        %v1221 = vadd.f32 0.0, %v1220
        %v1222 = vpop.f32.mrf.mxu0
        %1223 = vdwg.mxu0
        %v1226 = vunpack.c.l.b16 %v1172
        %v1227 = vunpack.c.l.b16 %v1173
        %v1228 = vpack.c.b16 %v1227, %v1226
        %v1230 = vsel %vm854, %v1166, 0
        %v1233 = vsel %vm854, %v1228, 0
        %1235 = vmatpush.bf16.xpose.msra.mxu0 0
        %1236 = vmatpush.bf16.xpose.msra.mxu0 0
        %1237 = vmatpush.bf16.xpose.msra.mxu0 0
        %1238 = vmatpush.bf16.xpose.msra.mxu0 0
        %1239 = vmatpush.bf16.xpose.msra.mxu0 0
        %1240 = vmatpush.bf16.xpose.msra.mxu0 0
        %1241 = vmatpush.bf16.xpose.msra.mxu0 0
        %1242 = vmatpush.bf16.xpose.msra.mxu0 %v1233
        %1243 = vmatmul.bf16.gmra.mxu0 %v1230
        %v1244 = vpop.f32.mrf.mxu0
        %v1245 = vadd.f32 0.0, %v1244
        %v1246 = vpop.f32.mrf.mxu0
        %1247 = vdwg.mxu0
        %v1250 = vunpack.c.l.b16 %v1174
        %v1251 = vunpack.c.l.b16 %v1175
        %v1252 = vpack.c.b16 %v1251, %v1250
        %v1254 = vsel %vm854, %v1167, 0
        %v1257 = vsel %vm854, %v1252, 0
        %1259 = vmatpush.bf16.xpose.msra.mxu0 0
        %1260 = vmatpush.bf16.xpose.msra.mxu0 0
        %1261 = vmatpush.bf16.xpose.msra.mxu0 0
        %1262 = vmatpush.bf16.xpose.msra.mxu0 0
        %1263 = vmatpush.bf16.xpose.msra.mxu0 0
        %1264 = vmatpush.bf16.xpose.msra.mxu0 0
        %1265 = vmatpush.bf16.xpose.msra.mxu0 0
        %1266 = vmatpush.bf16.xpose.msra.mxu0 %v1257
        %1267 = vmatmul.bf16.gmra.mxu0 %v1254
        %v1268 = vpop.f32.mrf.mxu0
        %v1269 = vadd.f32 0.0, %v1268
        %v1270 = vpop.f32.mrf.mxu0
        %1271 = vdwg.mxu0
        %v1272 = vsel %vm854, %v1197, -inf
        %1273 = vmax.xlane.f32.xlu0 %v1272
        %v1274 = vpop.xlane.xlu0 %1273
        %v1275 = vsel %vm854, %v1221, -inf
        %1276 = vmax.xlane.f32.xlu0 %v1275
        %v1277 = vpop.xlane.xlu0 %1276
        %v1278 = vsel %vm854, %v1245, -inf
        %1279 = vmax.xlane.f32.xlu0 %v1278
        %v1280 = vpop.xlane.xlu0 %1279
        %v1281 = vsel %vm854, %v1269, -inf
        %1282 = vmax.xlane.f32.xlu0 %v1281
        %v1283 = vpop.xlane.xlu0 %1282
        %v1284 = vsub.f32 %v1197, %v1274
        %v1285 = vsub.f32 %v1221, %v1277
        %v1286 = vsub.f32 %v1245, %v1280
        %v1287 = vsub.f32 %v1269, %v1283
        %v1288 = vmul.f32 %v1284, 1.442695
        %v1289 = vpow.pop %v1288
        %v1290 = vmul.f32 %v1285, 1.442695
        %v1291 = vpow.pop %v1290
        %v1292 = vmul.f32 %v1286, 1.442695
        %v1293 = vpow.pop %v1292
        %v1294 = vmul.f32 %v1287, 1.442695
        %v1295 = vpow.pop %v1294
        %v1296 = vsel %vm854, %v1289, 0.0
        %1297 = vadd.xlane.f32.xlu0 %v1296
        %v1298 = vpop.xlane.xlu0 %1297
        %v1299 = vsel %vm854, %v1291, 0.0
        %1300 = vadd.xlane.f32.xlu0 %v1299
        %v1301 = vpop.xlane.xlu0 %1300
        %v1302 = vsel %vm854, %v1293, 0.0
        %1303 = vadd.xlane.f32.xlu0 %v1302
        %v1304 = vpop.xlane.xlu0 %1303
        %v1305 = vsel %vm854, %v1295, 0.0
        %1306 = vadd.xlane.f32.xlu0 %v1305
        %v1307 = vpop.xlane.xlu0 %1306
        %v1308 = vrcp.pop %v1298
        %v1309 = vrcp.pop %v1301
        %v1310 = vrcp.pop %v1304
        %v1311 = vrcp.pop %v1307
        %v1312 = vmul.f32 %v1289, %v1308
        %v1313 = vmul.f32 %v1291, %v1309
        %v1314 = vmul.f32 %v1293, %v1310
        %v1315 = vmul.f32 %v1295, %v1311
        %v1316 = vpack.c.bf16 %v1312, %v1312
        %v1317 = vpack.c.bf16 %v1313, %v1313
        %v1318 = vpack.c.bf16 %v1314, %v1314
        %v1319 = vpack.c.bf16 %v1315, %v1315
        %v1320 = vpack.c.bf16 %v798, %v798
        %v1321 = vpack.c.bf16 %v800, %v800
        %v1322 = vpack.c.bf16 %v835, %v835
        %v1323 = vpack.c.bf16 %v837, %v837
        %v1324 = vpack.c.bf16 %v841, %v841
        %v1325 = vpack.c.bf16 %v843, %v843
        %v1326 = vpack.c.bf16 %v847, %v847
        %v1327 = vpack.c.bf16 %v849, %v849
        %v1330 = vunpack.c.l.b16 %v1320
        %v1331 = vunpack.c.l.b16 %v1321
        %v1332 = vpack.c.b16 %v1331, %v1330
        %v1335 = vsel %vm854, %v1316, 0
        %1337 = vmatpush.bf16.msra.mxu0 0
        %1338 = vmatpush.bf16.msra.mxu0 0
        %1339 = vmatpush.bf16.msra.mxu0 0
        %1340 = vmatpush.bf16.msra.mxu0 0
        %1341 = vmatpush.bf16.msra.mxu0 0
        %1342 = vmatpush.bf16.msra.mxu0 0
        %1343 = vmatpush.bf16.msra.mxu0 0
        %1344 = vmatpush.bf16.msra.mxu0 %v1332
        %1345 = vmatmul.bf16.gmra.mxu0 %v1335
        %v1346 = vpop.f32.mrf.mxu0
        %v1347 = vadd.f32 0.0, %v1346
        %v1348 = vpop.f32.mrf.mxu0
        %1349 = vdwg.mxu0
        %v1352 = vunpack.c.l.b16 %v1322
        %v1353 = vunpack.c.l.b16 %v1323
        %v1354 = vpack.c.b16 %v1353, %v1352
        %v1357 = vsel %vm854, %v1317, 0
        %1359 = vmatpush.bf16.msra.mxu0 0
        %1360 = vmatpush.bf16.msra.mxu0 0
        %1361 = vmatpush.bf16.msra.mxu0 0
        %1362 = vmatpush.bf16.msra.mxu0 0
        %1363 = vmatpush.bf16.msra.mxu0 0
        %1364 = vmatpush.bf16.msra.mxu0 0
        %1365 = vmatpush.bf16.msra.mxu0 0
        %1366 = vmatpush.bf16.msra.mxu0 %v1354
        %1367 = vmatmul.bf16.gmra.mxu0 %v1357
        %v1368 = vpop.f32.mrf.mxu0
        %v1369 = vadd.f32 0.0, %v1368
        %v1370 = vpop.f32.mrf.mxu0
        %1371 = vdwg.mxu0
        %v1374 = vunpack.c.l.b16 %v1324
        %v1375 = vunpack.c.l.b16 %v1325
        %v1376 = vpack.c.b16 %v1375, %v1374
        %v1379 = vsel %vm854, %v1318, 0
        %1381 = vmatpush.bf16.msra.mxu0 0
        %1382 = vmatpush.bf16.msra.mxu0 0
        %1383 = vmatpush.bf16.msra.mxu0 0
        %1384 = vmatpush.bf16.msra.mxu0 0
        %1385 = vmatpush.bf16.msra.mxu0 0
        %1386 = vmatpush.bf16.msra.mxu0 0
        %1387 = vmatpush.bf16.msra.mxu0 0
        %1388 = vmatpush.bf16.msra.mxu0 %v1376
        %1389 = vmatmul.bf16.gmra.mxu0 %v1379
        %v1390 = vpop.f32.mrf.mxu0
        %v1391 = vadd.f32 0.0, %v1390
        %v1392 = vpop.f32.mrf.mxu0
        %1393 = vdwg.mxu0
        %v1396 = vunpack.c.l.b16 %v1326
        %v1397 = vunpack.c.l.b16 %v1327
        %v1398 = vpack.c.b16 %v1397, %v1396
        %v1401 = vsel %vm854, %v1319, 0
        %1403 = vmatpush.bf16.msra.mxu0 0
        %1404 = vmatpush.bf16.msra.mxu0 0
        %1405 = vmatpush.bf16.msra.mxu0 0
        %1406 = vmatpush.bf16.msra.mxu0 0
        %1407 = vmatpush.bf16.msra.mxu0 0
        %1408 = vmatpush.bf16.msra.mxu0 0
        %1409 = vmatpush.bf16.msra.mxu0 0
        %1410 = vmatpush.bf16.msra.mxu0 %v1398
        %1411 = vmatmul.bf16.gmra.mxu0 %v1401
        %v1412 = vpop.f32.mrf.mxu0
        %v1413 = vadd.f32 0.0, %v1412
        %v1414 = vpop.f32.mrf.mxu0
        %1415 = vdwg.mxu0
        %v1416 = vld [vmem:[%s9] sm:$0xff]
        %v1417 = vld [vmem:[%s9 + $0x8] sm:$0xff]
        %v1418 = vld [vmem:[%s9 + $0x10] sm:$0xff]
        %v1419 = vld [vmem:[%s9 + $0x18] sm:$0xff]
        %v1420 = vld [vmem:[%s9 + $0x20] sm:$0xff]
        %v1421 = vld [vmem:[%s9 + $0x28] sm:$0xff]
        %v1422 = vld [vmem:[%s9 + $0x30] sm:$0xff]
        %v1423 = vld [vmem:[%s9 + $0x38] sm:$0xff]
        %v1424 = vpack.c.bf16 %v1347, %v1347
        %v1425 = vpack.c.bf16 %v1369, %v1369
        %v1426 = vpack.c.bf16 %v1391, %v1391
        %v1427 = vpack.c.bf16 %v1413, %v1413
        %v1428 = vpack.c.bf16 %v1416, %v1416
        %v1429 = vpack.c.bf16 %v1417, %v1417
        %v1430 = vpack.c.bf16 %v1418, %v1418
        %v1431 = vpack.c.bf16 %v1419, %v1419
        %v1432 = vpack.c.bf16 %v1420, %v1420
        %v1433 = vpack.c.bf16 %v1421, %v1421
        %v1434 = vpack.c.bf16 %v1422, %v1422
        %v1435 = vpack.c.bf16 %v1423, %v1423
        %v1438 = vunpack.c.l.b16 %v1428
        %v1439 = vunpack.c.l.b16 %v1429
        %v1440 = vpack.c.b16 %v1439, %v1438
        %v1443 = vsel %vm854, %v1424, 0
        %1445 = vmatpush.bf16.msra.mxu0 0
        %1446 = vmatpush.bf16.msra.mxu0 0
        %1447 = vmatpush.bf16.msra.mxu0 0
        %1448 = vmatpush.bf16.msra.mxu0 0
        %1449 = vmatpush.bf16.msra.mxu0 0
        %1450 = vmatpush.bf16.msra.mxu0 0
        %1451 = vmatpush.bf16.msra.mxu0 0
        %1452 = vmatpush.bf16.msra.mxu0 %v1440
        %1453 = vmatmul.bf16.gmra.mxu0 %v1443
        %v1454 = vpop.f32.mrf.mxu0
        %v1455 = vadd.f32 0.0, %v1454
        %v1456 = vpop.f32.mrf.mxu0
        %1457 = vdwg.mxu0
        %v1460 = vunpack.c.l.b16 %v1430
        %v1461 = vunpack.c.l.b16 %v1431
        %v1462 = vpack.c.b16 %v1461, %v1460
        %v1465 = vsel %vm854, %v1425, 0
        %1467 = vmatpush.bf16.msra.mxu0 0
        %1468 = vmatpush.bf16.msra.mxu0 0
        %1469 = vmatpush.bf16.msra.mxu0 0
        %1470 = vmatpush.bf16.msra.mxu0 0
        %1471 = vmatpush.bf16.msra.mxu0 0
        %1472 = vmatpush.bf16.msra.mxu0 0
        %1473 = vmatpush.bf16.msra.mxu0 0
        %1474 = vmatpush.bf16.msra.mxu0 %v1462
        %1475 = vmatmul.bf16.gmra.mxu0 %v1465
        %v1476 = vpop.f32.mrf.mxu0
        %v1477 = vadd.f32 0.0, %v1476
        %v1478 = vpop.f32.mrf.mxu0
        %1479 = vdwg.mxu0
        %v1482 = vunpack.c.l.b16 %v1432
        %v1483 = vunpack.c.l.b16 %v1433
        %v1484 = vpack.c.b16 %v1483, %v1482
        %v1487 = vsel %vm854, %v1426, 0
        %1489 = vmatpush.bf16.msra.mxu0 0
        %1490 = vmatpush.bf16.msra.mxu0 0
        %1491 = vmatpush.bf16.msra.mxu0 0
        %1492 = vmatpush.bf16.msra.mxu0 0
        %1493 = vmatpush.bf16.msra.mxu0 0
        %1494 = vmatpush.bf16.msra.mxu0 0
        %1495 = vmatpush.bf16.msra.mxu0 0
        %1496 = vmatpush.bf16.msra.mxu0 %v1484
        %1497 = vmatmul.bf16.gmra.mxu0 %v1487
        %v1498 = vpop.f32.mrf.mxu0
        %v1499 = vadd.f32 0.0, %v1498
        %v1500 = vpop.f32.mrf.mxu0
        %1501 = vdwg.mxu0
        %v1504 = vunpack.c.l.b16 %v1434
        %v1505 = vunpack.c.l.b16 %v1435
        %v1506 = vpack.c.b16 %v1505, %v1504
        %v1509 = vsel %vm854, %v1427, 0
        %1511 = vmatpush.bf16.msra.mxu0 0
        %1512 = vmatpush.bf16.msra.mxu0 0
        %1513 = vmatpush.bf16.msra.mxu0 0
        %1514 = vmatpush.bf16.msra.mxu0 0
        %1515 = vmatpush.bf16.msra.mxu0 0
        %1516 = vmatpush.bf16.msra.mxu0 0
        %1517 = vmatpush.bf16.msra.mxu0 0
        %1518 = vmatpush.bf16.msra.mxu0 %v1506
        %1519 = vmatmul.bf16.gmra.mxu0 %v1509
        %v1520 = vpop.f32.mrf.mxu0
        %v1521 = vadd.f32 0.0, %v1520
        %v1522 = vpop.f32.mrf.mxu0
        %1523 = vdwg.mxu0
        %v1524 = vadd.f32 %v1455, %v1477
        %v1525 = vadd.f32 %v1524, %v1499
        %v1526 = vadd.f32 %v1525, %v1521
        %v1527 = vadd.f32 %v1526, %v644
        %v1528 = vld [vmem:[%s14] sm:$0x1]
        %v1529 = vld [vmem:[%s15] sm:$0x1]
        %v1530 = vsel %vm647, %v1527, 0.0
        %1531 = vadd.xlane.f32.xlu0 %v1530
        %v1532 = vpop.xlane.xlu0 %1531
        %v1533 = vmul.f32 %v1532, %v657
        %v1534 = vsub.f32 %v1527, %v1533
        %v1535 = vmul.f32 %v1534, %v1534
        %v1536 = vsel %vm647, %v1535, 0.0
        %1537 = vadd.xlane.f32.xlu0 %v1536
        %v1538 = vpop.xlane.xlu0 %1537
        %v1539 = vmul.f32 %v1538, %v657
        %v1540 = vadd.f32 %v1539, 1e-05
        %v1541 = vrsqrt.pop %v1540
        %v1542 = vmul.f32 %v1541, %v1540
        %v1543 = vmul.f32 %v1542, %v1541
        %v1544 = vmul.f32 0.5, %v1543
        %v1545 = vsub.f32 1.5, %v1544
        %v1546 = vmul.f32 %v1541, %v1545
        %vm1547 = vweird.f32 %v1540
        %vm1548 = vweird.f32 %v1541
        %vm1549 = vmor %vm1547, %vm1548
        %v1550 = vsel %vm1549, %v1541, %v1546
        %v1551 = vmul.f32 %v1534, %v1550
        %v1553 = vperm.slane %v1528, 0
        %v1555 = vmul.f32 %v1551, %v1553
        %v1557 = vperm.slane %v1529, 0
        %v1559 = vadd.f32 %v1555, %v1557
        %v1560 = vld [vmem:[%s16] sm:$0xff]
        %v1561 = vld [vmem:[%s16 + $0x8] sm:$0xff]
        %v1562 = vld [vmem:[%s16 + $0x10] sm:$0xff]
        %v1563 = vld [vmem:[%s16 + $0x18] sm:$0xff]
        %v1564 = vld [vmem:[%s16 + $0x20] sm:$0xff]
        %v1565 = vld [vmem:[%s16 + $0x28] sm:$0xff]
        %v1566 = vld [vmem:[%s16 + $0x30] sm:$0xff]
        %v1567 = vld [vmem:[%s16 + $0x38] sm:$0xff]
        %v1568 = vld [vmem:[%s16 + $0x40] sm:$0xff]
        %v1569 = vld [vmem:[%s16 + $0x48] sm:$0xff]
        %v1570 = vld [vmem:[%s16 + $0x50] sm:$0xff]
        %v1571 = vld [vmem:[%s16 + $0x58] sm:$0xff]
        %v1572 = vld [vmem:[%s16 + $0x60] sm:$0xff]
        %v1573 = vld [vmem:[%s16 + $0x68] sm:$0xff]
        %v1574 = vld [vmem:[%s16 + $0x70] sm:$0xff]
        %v1575 = vld [vmem:[%s16 + $0x78] sm:$0xff]
        %v1576 = vpack.c.bf16 %v1559, %v1559
        %v1577 = vpack.c.bf16 %v1562, %v1560
        %v1578 = vpack.c.bf16 %v1563, %v1561
        %v1579 = vpack.c.bf16 %v1566, %v1564
        %v1580 = vpack.c.bf16 %v1567, %v1565
        %v1581 = vpack.c.bf16 %v1570, %v1568
        %v1582 = vpack.c.bf16 %v1571, %v1569
        %v1583 = vpack.c.bf16 %v1574, %v1572
        %v1584 = vpack.c.bf16 %v1575, %v1573
        %v1586 = vsel %vm647, %v1576, 0
        %1588 = vmatpush.bf16.msra.mxu0 0
        %1589 = vmatpush.bf16.msra.mxu0 0
        %1590 = vmatpush.bf16.msra.mxu0 0
        %1591 = vmatpush.bf16.msra.mxu0 0
        %1592 = vmatpush.bf16.msra.mxu0 %v1583
        %1593 = vmatpush.bf16.msra.mxu0 %v1581
        %1594 = vmatpush.bf16.msra.mxu0 %v1579
        %1595 = vmatpush.bf16.msra.mxu0 %v1577
        %1596 = vmatmul.bf16.gmra.mxu0 %v1586
        %v1597 = vpop.f32.mrf.mxu0
        %v1598 = vadd.f32 0.0, %v1597
        %v1599 = vpop.f32.mrf.mxu0
        %1600 = vdwg.mxu0
        %1601 = vmatpush.bf16.msra.mxu0 0
        %1602 = vmatpush.bf16.msra.mxu0 0
        %1603 = vmatpush.bf16.msra.mxu0 0
        %1604 = vmatpush.bf16.msra.mxu0 0
        %1605 = vmatpush.bf16.msra.mxu0 %v1584
        %1606 = vmatpush.bf16.msra.mxu0 %v1582
        %1607 = vmatpush.bf16.msra.mxu0 %v1580
        %1608 = vmatpush.bf16.msra.mxu0 %v1578
        %1609 = vmatmul.bf16.gmra.mxu0 %v1586
        %v1610 = vpop.f32.mrf.mxu0
        %v1611 = vadd.f32 0.0, %v1610
        %v1612 = vpop.f32.mrf.mxu0
        %1613 = vdwg.mxu0
        %v1614 = vmul.f32 %v1598, 0.5
        %v1615 = vmul.f32 %v1611, 0.5
        %v1616 = vmul.f32 %v1598, 0.70710677
        %v1617 = vmul.f32 %v1611, 0.70710677
        %v1618 = vand.u32 2147483647, %v1616
        %v1619 = vand.u32 2147483647, %v1617
        %v1620 = vmul.f32 %v1618, 0.3275911
        %v1621 = vmul.f32 %v1619, 0.3275911
        %v1622 = vadd.f32 %v1620, 1.0
        %v1623 = vadd.f32 %v1621, 1.0
        %v1624 = vrcp.pop %v1622
        %v1625 = vmul.f32 %v1622, %v1624
        %v1626 = vsub.f32 1.0, %v1625
        %v1627 = vmul.f32 %v1624, %v1626
        %v1628 = vadd.f32 %v1624, %v1627
        %vm1629 = vweird.f32 %v1622
        %vm1630 = vweird.f32 %v1624
        %vm1631 = vmor %vm1629, %vm1630
        %v1632 = vsel %vm1631, %v1624, %v1628
        %v1633 = vand.u32 2147483647, %v1622
        %vm1634 = vcmp.eq.f32.partialorder %v1633, 8.507059e+37
        %v1635 = vand.u32 %v1622, 2147483648
        %v1636 = vor.u32 1.1754944e-38, %v1635
        %v1637 = vsel %vm1634, %v1636, %v1632
        %v1638 = vmul.f32 1.0, %v1637
        %v1639 = vrcp.pop %v1623
        %v1640 = vmul.f32 %v1623, %v1639
        %v1641 = vsub.f32 1.0, %v1640
        %v1642 = vmul.f32 %v1639, %v1641
        %v1643 = vadd.f32 %v1639, %v1642
        %vm1644 = vweird.f32 %v1623
        %vm1645 = vweird.f32 %v1639
        %vm1646 = vmor %vm1644, %vm1645
        %v1647 = vsel %vm1646, %v1639, %v1643
        %v1648 = vand.u32 2147483647, %v1623
        %vm1649 = vcmp.eq.f32.partialorder %v1648, 8.507059e+37
        %v1650 = vand.u32 %v1623, 2147483648
        %v1651 = vor.u32 1.1754944e-38, %v1650
        %v1652 = vsel %vm1649, %v1651, %v1647
        %v1653 = vmul.f32 1.0, %v1652
        %v1654 = vmul.f32 %v1638, 1.0614054
        %v1655 = vmul.f32 %v1653, 1.0614054
        %v1656 = vadd.f32 %v1654, -1.4531521
        %v1657 = vadd.f32 %v1655, -1.4531521
        %v1658 = vmul.f32 %v1656, %v1638
        %v1659 = vmul.f32 %v1657, %v1653
        %v1660 = vadd.f32 %v1658, 1.4214138
        %v1661 = vadd.f32 %v1659, 1.4214138
        %v1662 = vmul.f32 %v1660, %v1638
        %v1663 = vmul.f32 %v1661, %v1653
        %v1664 = vadd.f32 %v1662, -0.28449672
        %v1665 = vadd.f32 %v1663, -0.28449672
        %v1666 = vmul.f32 %v1664, %v1638
        %v1667 = vmul.f32 %v1665, %v1653
        %v1668 = vadd.f32 %v1666, 0.2548296
        %v1669 = vadd.f32 %v1667, 0.2548296
        %v1670 = vmul.f32 %v1668, %v1638
        %v1671 = vmul.f32 %v1669, %v1653
        %v1672 = vsub.f32 0.0, %v1618
        %v1673 = vsub.f32 0.0, %v1619
        %v1674 = vmul.f32 %v1672, %v1618
        %v1675 = vmul.f32 %v1673, %v1619
        %v1676 = vmul.f32 %v1674, 1.442695
        %v1677 = vpow.pop %v1676
        %v1678 = vmul.f32 %v1675, 1.442695
        %v1679 = vpow.pop %v1678
        %v1680 = vmul.f32 %v1670, %v1677
        %v1681 = vmul.f32 %v1671, %v1679
        %v1682 = vsub.f32 1.0, %v1680
        %v1683 = vsub.f32 1.0, %v1681
        %vm1684 = vcmp.ge.f32.partialorder %v1616, 0.0
        %vm1685 = vcmp.ge.f32.partialorder %v1617, 0.0
        %v1686 = vsub.f32 0.0, %v1682
        %v1687 = vsub.f32 0.0, %v1683
        %v1688 = vsel %vm1684, %v1682, %v1686
        %v1689 = vsel %vm1685, %v1683, %v1687
        %v1690 = vadd.f32 %v1688, 1.0
        %v1691 = vadd.f32 %v1689, 1.0
        %v1692 = vmul.f32 %v1614, %v1690
        %v1693 = vmul.f32 %v1615, %v1691
        %v1694 = vld [vmem:[%s17] sm:$0xff]
        %v1695 = vld [vmem:[%s17 + $0x8] sm:$0xff]
        %v1696 = vld [vmem:[%s17 + $0x10] sm:$0xff]
        %v1697 = vld [vmem:[%s17 + $0x18] sm:$0xff]
        %v1698 = vld [vmem:[%s17 + $0x20] sm:$0xff]
        %v1699 = vld [vmem:[%s17 + $0x28] sm:$0xff]
        %v1700 = vld [vmem:[%s17 + $0x30] sm:$0xff]
        %v1701 = vld [vmem:[%s17 + $0x38] sm:$0xff]
        %v1702 = vld [vmem:[%s17 + $0x40] sm:$0xff]
        %v1703 = vld [vmem:[%s17 + $0x48] sm:$0xff]
        %v1704 = vld [vmem:[%s17 + $0x50] sm:$0xff]
        %v1705 = vld [vmem:[%s17 + $0x58] sm:$0xff]
        %v1706 = vld [vmem:[%s17 + $0x60] sm:$0xff]
        %v1707 = vld [vmem:[%s17 + $0x68] sm:$0xff]
        %v1708 = vld [vmem:[%s17 + $0x70] sm:$0xff]
        %v1709 = vld [vmem:[%s17 + $0x78] sm:$0xff]
        %v1710 = vld [vmem:[%s17 + $0x80] sm:$0xff]
        %v1711 = vld [vmem:[%s17 + $0x88] sm:$0xff]
        %v1712 = vld [vmem:[%s17 + $0x90] sm:$0xff]
        %v1713 = vld [vmem:[%s17 + $0x98] sm:$0xff]
        %v1714 = vld [vmem:[%s17 + $0xa0] sm:$0xff]
        %v1715 = vld [vmem:[%s17 + $0xa8] sm:$0xff]
        %v1716 = vld [vmem:[%s17 + $0xb0] sm:$0xff]
        %v1717 = vld [vmem:[%s17 + $0xb8] sm:$0xff]
        %v1718 = vld [vmem:[%s17 + $0xc0] sm:$0xff]
        %v1719 = vld [vmem:[%s17 + $0xc8] sm:$0xff]
        %v1720 = vld [vmem:[%s17 + $0xd0] sm:$0xff]
        %v1721 = vld [vmem:[%s17 + $0xd8] sm:$0xff]
        %v1722 = vld [vmem:[%s17 + $0xe0] sm:$0xff]
        %v1723 = vld [vmem:[%s17 + $0xe8] sm:$0xff]
        %v1724 = vld [vmem:[%s17 + $0xf0] sm:$0xff]
        %v1725 = vld [vmem:[%s17 + $0xf8] sm:$0xff]
        %v1726 = vpack.c.bf16 %v1692, %v1692
        %v1727 = vpack.c.bf16 %v1693, %v1693
        %v1728 = vpack.c.bf16 %v1695, %v1694
        %v1729 = vpack.c.bf16 %v1697, %v1696
        %v1730 = vpack.c.bf16 %v1699, %v1698
        %v1731 = vpack.c.bf16 %v1701, %v1700
        %v1732 = vpack.c.bf16 %v1703, %v1702
        %v1733 = vpack.c.bf16 %v1705, %v1704
        %v1734 = vpack.c.bf16 %v1707, %v1706
        %v1735 = vpack.c.bf16 %v1709, %v1708
        %v1736 = vpack.c.bf16 %v1711, %v1710
        %v1737 = vpack.c.bf16 %v1713, %v1712
        %v1738 = vpack.c.bf16 %v1715, %v1714
        %v1739 = vpack.c.bf16 %v1717, %v1716
        %v1740 = vpack.c.bf16 %v1719, %v1718
        %v1741 = vpack.c.bf16 %v1721, %v1720
        %v1742 = vpack.c.bf16 %v1723, %v1722
        %v1743 = vpack.c.bf16 %v1725, %v1724
        %1744 = vmatpush.bf16.msra.mxu0 %v1735
        %1745 = vmatpush.bf16.msra.mxu0 %v1734
        %1746 = vmatpush.bf16.msra.mxu0 %v1733
        %1747 = vmatpush.bf16.msra.mxu0 %v1732
        %1748 = vmatpush.bf16.msra.mxu0 %v1731
        %1749 = vmatpush.bf16.msra.mxu0 %v1730
        %1750 = vmatpush.bf16.msra.mxu0 %v1729
        %1751 = vmatpush.bf16.msra.mxu0 %v1728
        %1752 = vmatmul.bf16.gmra.mxu0 %v1726
        %v1753 = vpop.f32.mrf.mxu0
        %v1754 = vadd.f32 %v1527, %v1753
        %v1755 = vpop.f32.mrf.mxu0
        %1756 = vdwg.mxu0
        %1757 = vmatpush.bf16.msra.mxu0 %v1743
        %1758 = vmatpush.bf16.msra.mxu0 %v1742
        %1759 = vmatpush.bf16.msra.mxu0 %v1741
        %1760 = vmatpush.bf16.msra.mxu0 %v1740
        %1761 = vmatpush.bf16.msra.mxu0 %v1739
        %1762 = vmatpush.bf16.msra.mxu0 %v1738
        %1763 = vmatpush.bf16.msra.mxu0 %v1737
        %1764 = vmatpush.bf16.msra.mxu0 %v1736
        %1765 = vmatmul.bf16.gmra.mxu0 %v1727
        %v1766 = vpop.f32.mrf.mxu0
        %v1767 = vadd.f32 %v1754, %v1766
        %v1768 = vpop.f32.mrf.mxu0
        %1769 = vdwg.mxu0
        %v1770 = vld [vmem:[%s18] sm:$0x1]
        %v1771 = vld [vmem:[%s19] sm:$0x1]
        %v1772 = vsel %vm647, %v1767, 0.0
        %1773 = vadd.xlane.f32.xlu0 %v1772
        %v1774 = vpop.xlane.xlu0 %1773
        %v1775 = vmul.f32 %v1774, %v657
        %v1776 = vsub.f32 %v1767, %v1775
        %v1777 = vmul.f32 %v1776, %v1776
        %v1778 = vsel %vm647, %v1777, 0.0
        %1779 = vadd.xlane.f32.xlu0 %v1778
        %v1780 = vpop.xlane.xlu0 %1779
        %v1781 = vmul.f32 %v1780, %v657
        %v1782 = vadd.f32 %v1781, 1e-05
        %v1783 = vrsqrt.pop %v1782
        %v1784 = vmul.f32 %v1783, %v1782
        %v1785 = vmul.f32 %v1784, %v1783
        %v1786 = vmul.f32 0.5, %v1785
        %v1787 = vsub.f32 1.5, %v1786
        %v1788 = vmul.f32 %v1783, %v1787
        %vm1789 = vweird.f32 %v1782
        %vm1790 = vweird.f32 %v1783
        %vm1791 = vmor %vm1789, %vm1790
        %v1792 = vsel %vm1791, %v1783, %v1788
        %v1793 = vmul.f32 %v1776, %v1792
        %v1795 = vperm.slane %v1770, 0
        %v1797 = vmul.f32 %v1793, %v1795
        %v1799 = vperm.slane %v1771, 0
        %v1801 = vadd.f32 %v1797, %v1799
        %1802 = vst.msk [vmem:[%s633] sm:$0xff] %vm647, %v1801
        %s1803 = sand.u32 %s472, 1
        %s1804 = scalar_lea.sflag [#allocation3], %s1803
        %s1805 = sand.u32 %s472, 1
        %s1806 = smul.addr %s1805, 8
        %s1807 = scalar_lea.vmem [#allocation2], %s1806
        // Predicated region
        $region101: #{resampler_plus_qk_forward.9} parent=99 // pred_check
          %p1808 = pneg %p482
        $region102: #{resampler_plus_qk_forward.9} parent=99 // pred_check_branch
          %1810 = sbr.rel (%p1808) target = $region104
        $region103: #{resampler_plus_qk_forward.9} parent=99 // pred_region
          %1812 = vsyncadd %s1804, 0
          %s1813 = smul.addr %s34, 8
          %s1814 = scalar_lea.hbm %s20, %s1813
          %s1816 = sshll.u32 %s1807, 4
          %s1817 = int_to_ptr.vmem [resolvable:$true] %s1816
          %s1818 = sshll.u32 %s1814, 4
          %s1819 = int_to_ptr.hbm [resolvable:$true] %s1818
          %1821 = dma.vmem_to_hbm [thread:$0]  %s1817, 128, %s1819, %s1804
        $region104: #{resampler_plus_qk_forward.9} parent=99 // pred_fallthru
          _
      $region100: #{resampler_plus_qk_forward.9} parent=5 // pred_fallthru
        _
      %p1822 = scmp.le.s32.totalorder 2, %s29
      // Predicated region
      $region105: #{resampler_plus_qk_forward.9} parent=5 // pred_check
        %p1823 = pneg %p1822
      $region106: #{resampler_plus_qk_forward.9} parent=5 // pred_check_branch
        %1825 = sbr.rel (%p1823) target = $region108
      $region107: #{resampler_plus_qk_forward.9} parent=5 // pred_region
        %s1826 = ssub.s32 %s29, 2
        // Predicated region
        $region109: #{resampler_plus_qk_forward.9} parent=107 // pred_check
          %p1827 = pneg %p488
        $region110: #{resampler_plus_qk_forward.9} parent=107 // pred_check_branch
          %1829 = sbr.rel (%p1827) target = $region112
        $region111: #{resampler_plus_qk_forward.9} parent=107 // pred_region
          %s1830 = sand.u32 %s473, 1
          %s1831 = scalar_lea.sflag [#allocation3], %s1830
          %s1832 = sand.u32 %s473, 1
          %s1833 = smul.addr %s1832, 8
          %s1834 = scalar_lea.vmem [#allocation2], %s1833
          %1836 = dma.done %s1831, 128
        $region112: #{resampler_plus_qk_forward.9} parent=107 // pred_fallthru
          _
      $region108: #{resampler_plus_qk_forward.9} parent=5 // pred_fallthru
        _
    $region6: #{resampler_plus_qk_forward.9} parent=1 // loop_footer
      %s33 = sadd.s32 1, %s29
    $region7: #{resampler_plus_qk_forward.9} parent=1 // loop_footer_branch
      %28 = sbr.rel target = $region3
    $region8: #{resampler_plus_qk_forward.9} parent=1 // loop_exit
      _
    %1837 = vsyncpa [#allocation3], 1
    %s1838 = scalar_lea.sflag [#allocation3], 1
    %1839 = vsyncpa %s1838, 1

</llo_original>
